<compile_context>
chip_gen: v7x
topology: tpu7x:2x2x1
jax: 0.10.0
libtpu: 0.0.40
codegen_flags: <defaults>
</compile_context>

<pallas_src>
import math
import functools

import jax
import jax.numpy as jnp
from jax import lax
from jax.experimental import pallas as pl
from jax.experimental.pallas import tpu as pltpu


def _mha_kernel(x_ref, c_ref,
                wq_ref, bq_ref, wkv_ref, bkv_ref, wo_ref, bo_ref,
                o_ref,
                kv_scratch, a_scratch,
                *, n_heads, head_channels):
    """One grid step == one (batch, query-tile): projections + attention + out proj."""
    d = head_channels
    inner = n_heads * d

    # --- Fused K|V projection: compute once per batch element, cache in VMEM.
    # (The c block index is constant across query tiles, so Pallas does not
    #  re-DMA it either; this just removes the redundant projection matmul.)
    @pl.when(pl.program_id(1) == 0)
    def _():
        cb = c_ref[0].astype(jnp.bfloat16)                                   # (Ckv, Lc)
        kv = jnp.dot(wkv_ref[...], cb,
                     preferred_element_type=jnp.float32) + bkv_ref[...]      # (2*inner, Lc)
        kv_scratch[...] = kv.astype(jnp.bfloat16)

    # --- Q projection for this query tile (qk scale folded into wq/bq).
    xb = x_ref[0].astype(jnp.bfloat16)                                       # (Cin, TQ)
    q = jnp.dot(wq_ref[...], xb,
                preferred_element_type=jnp.float32) + bq_ref[...]            # (inner, TQ)

    # --- Static head loop. Head slices are sublane slices (d rows, tile-aligned).
    for h in range(n_heads):
        lo, hi = h * d, (h + 1) * d
        qh_t = q[lo:hi, :].T.astype(jnp.bfloat16)        # (TQ, d)  small XLU transpose
        kh = kv_scratch[lo:hi, :]                        # (d, Lc)  bf16
        vh = kv_scratch[inner + lo:inner + hi, :]        # (d, Lc)  bf16

        # scores (TQ, Lc) in f32
        s = jnp.dot(qh_t, kh, preferred_element_type=jnp.float32)
        # softmax over the source axis, f32, EUP approx reciprocal instead of divide
        s = s - jnp.max(s, axis=-1, keepdims=True)
        p = jnp.exp(s)
        p = p * pl.reciprocal(jnp.sum(p, axis=-1, keepdims=True), approx=True)
        p = p.astype(jnp.bfloat16)

        # a_h[d, t] = sum_s vh[d, s] * p[t, s]  -- rhs-transposed, MXU-native (no .T)
        a_h = lax.dot_general(vh, p, (((1,), (1,)), ((), ())),
                              preferred_element_type=jnp.float32)            # (d, TQ)
        a_scratch[lo:hi, :] = a_h.astype(jnp.bfloat16)

    # --- Output projection (single wide K=inner matmul)
    out = jnp.dot(wo_ref[...], a_scratch[...],
                  preferred_element_type=jnp.float32) + bo_ref[...]          # (Cin, TQ)
    o_ref[0] = out.astype(o_ref.dtype)


def _pick_q_tile(L):
    """Lane-dense query tiles (multiple of 128) when L allows, else whole L."""
    for t in (512, 256, 128):
        if L >= t and L % t == 0:
            return t
    return L


def prepare_params(params, *, n_heads, head_channels, compute_dtype=jnp.bfloat16):
    """One-time parameter prep (torch Conv1d layout -> kernel layout).

    params: (wq, bq, wk, bk, wv, bv, wo, bo) with conv weights shaped (out, in)
    (i.e. Conv1d weight[:, :, 0]) and biases shaped (out,).

    Returns (wq', bq', wkv', bkv', wo', bo') with:
      * the net qk scale 1/sqrt(head_channels) folded into wq'/bq'
      * K|V weights/biases concatenated into a single fused projection
      * weights cast to bf16 for the MXU, biases kept f32 (added post-matmul).
    """
    wq, bq, wk, bk, wv, bv, wo, bo = params
    qk_scale = 1.0 / math.sqrt(head_channels)   # == (1/sqrt(sqrt(d)))**2 applied to q and k
    wq_p = (wq * qk_scale).astype(compute_dtype)
    bq_p = (bq * qk_scale).astype(jnp.float32).reshape(-1, 1)
    wkv_p = jnp.concatenate([wk, wv], axis=0).astype(compute_dtype)
    bkv_p = jnp.concatenate([bk, bv], axis=0).astype(jnp.float32).reshape(-1, 1)
    wo_p = wo.astype(compute_dtype)
    bo_p = bo.astype(jnp.float32).reshape(-1, 1)
    return (wq_p, bq_p, wkv_p, bkv_p, wo_p, bo_p)


def multi_head_attention(x_ncl, prepped_params, *, n_heads, head_channels, c_ncl=None):
    """x_ncl: (B, C_in, L) exactly like the torch module; returns (B, C_in, L)."""
    if c_ncl is None:
        c_ncl = x_ncl
    wq, bq, wkv, bkv, wo, bo = prepped_params

    B, Cin, L = x_ncl.shape
    _, Ckv, Lc = c_ncl.shape
    inner = n_heads * head_channels

    tq = _pick_q_tile(L)
    nq = L // tq

    # TODO(synk): for very long Lc add a KV grid axis with online softmax
    # (flash-style) instead of loading the full (Ckv, Lc) source block per batch.
    kernel = functools.partial(_mha_kernel,
                               n_heads=n_heads, head_channels=head_channels)

    return pl.pallas_call(
        kernel,
        out_shape=jax.ShapeDtypeStruct((B, Cin, L), x_ncl.dtype),
        grid_spec=pltpu.PrefetchScalarGridSpec(
            num_scalar_prefetch=0,
            grid=(B, nq),
            in_specs=[
                pl.BlockSpec((1, Cin, tq), lambda b, qi: (b, 0, qi)),    # x query tile
                pl.BlockSpec((1, Ckv, Lc), lambda b, qi: (b, 0, 0)),     # full K/V source
                pl.BlockSpec((inner, Cin), lambda b, qi: (0, 0)),        # Wq (scale folded, bf16)
                pl.BlockSpec((inner, 1), lambda b, qi: (0, 0)),          # bq (f32)
                pl.BlockSpec((2 * inner, Ckv), lambda b, qi: (0, 0)),    # Wk|Wv fused (bf16)
                pl.BlockSpec((2 * inner, 1), lambda b, qi: (0, 0)),      # bk|bv fused (f32)
                pl.BlockSpec((Cin, inner), lambda b, qi: (0, 0)),        # Wo (bf16)
                pl.BlockSpec((Cin, 1), lambda b, qi: (0, 0)),            # bo (f32)
            ],
            out_specs=pl.BlockSpec((1, Cin, tq), lambda b, qi: (b, 0, qi)),
            scratch_shapes=[
                pltpu.VMEM((2 * inner, Lc), jnp.bfloat16),   # cached K|V projection
                pltpu.VMEM((inner, tq), jnp.bfloat16),       # per-tile attention result
            ],
        ),
        compiler_params=pltpu.CompilerParams(
            # batch is independent (megacore-shardable); the query-tile axis
            # reuses the cached K/V scratch, so it must stay "arbitrary".
            dimension_semantics=("parallel", "arbitrary"),
        ),
    )(x_ncl, c_ncl, wq, bq, wkv, bkv, wo, bo)


def _reference(x_ncl, params, n_heads, head_channels, c_ncl=None):
    """Pure-JAX f32 re-statement of the torch forward pass (torch-layout params)."""
    if c_ncl is None:
        c_ncl = x_ncl
    wq, bq, wk, bk, wv, bv, wo, bo = params
    B = x_ncl.shape[0]
    d = head_channels

    def conv1x1(inp_ncl, w_oi, b_o):          # w_oi: (C_out, C_in), b_o: (C_out,)
        return jnp.einsum('oi,bil->bol', w_oi, inp_ncl) + b_o[None, :, None]

    q = conv1x1(x_ncl, wq, bq)
    k = conv1x1(c_ncl, wk, bk)
    v = conv1x1(c_ncl, wv, bv)
    q = q.reshape(B * n_heads, d, -1)
    k = k.reshape(B * n_heads, d, -1)
    v = v.reshape(B * n_heads, d, -1)
    scale = 1.0 / math.sqrt(math.sqrt(d))
    w = jnp.einsum('bct,bcs->bts', q * scale, k * scale)
    w = jax.nn.softmax(w.astype(jnp.float32), axis=-1)
    a = jnp.einsum('bts,bcs->bct', w, v)
    a = a.reshape(B, n_heads * d, -1)
    return conv1x1(a, wo, bo)


# TODO(synk): use_checkpoint (torch activation checkpointing) is a training-time
# recompute strategy with no forward-pass Pallas equivalent; omitted.

if __name__ == "__main__":
    # Small but non-trivial: L=256 with tq=128 exercises the multi-query-tile
    # path (cached K/V scratch reused across query tiles).
    B, Cin, L = 2, 64, 256
    n_heads, head_channels = 4, 32
    inner = n_heads * head_channels

    key = jax.random.PRNGKey(0)
    ks = jax.random.split(key, 9)

    def init(k, shape, fan_in):
        bound = 1.0 / math.sqrt(fan_in)
        return jax.random.uniform(k, shape, jnp.float32, -bound, bound)

    # torch Conv1d layout: weight (out_channels, in_channels), bias (out_channels,)
    wq = init(ks[0], (inner, Cin), Cin)
    bq = init(ks[1], (inner,), Cin)
    wk = init(ks[2], (inner, Cin), Cin)
    bk = init(ks[3], (inner,), Cin)
    wv = init(ks[4], (inner, Cin), Cin)
    bv = init(ks[5], (inner,), Cin)
    wo = init(ks[6], (Cin, inner), inner)
    bo = init(ks[7], (Cin,), inner)
    params = (wq, bq, wk, bk, wv, bv, wo, bo)

    x = jax.random.normal(ks[8], (B, Cin, L), jnp.float32)     # (B, C, L) like torch

    prepped = prepare_params(params, n_heads=n_heads, head_channels=head_channels)
    out = multi_head_attention(x, prepped, n_heads=n_heads,
                               head_channels=head_channels)
    out = jax.block_until_ready(out)

    ref = _reference(x, params, n_heads, head_channels)
    assert out.shape == (B, Cin, L)
    # bf16 MXU operands -> slightly looser tolerance than pure-f32
    assert jnp.allclose(out, ref, atol=5e-2, rtol=5e-2), "mismatch vs reference"

    print("KERNEL_OK")
</pallas_src>

<mosaic_0001>
module attributes {stable_mosaic.version = 11 : i64} {
  func.func @_mha_kernel(%arg0: i32, %arg1: i32, %arg2: memref<1x64x256xf32, #tpu.memory_space<vmem>>, %arg3: memref<1x64x256xf32, #tpu.memory_space<vmem>>, %arg4: memref<128x64xbf16, #tpu.memory_space<vmem>>, %arg5: memref<128x1xf32, #tpu.memory_space<vmem>>, %arg6: memref<256x64xbf16, #tpu.memory_space<vmem>>, %arg7: memref<256x1xf32, #tpu.memory_space<vmem>>, %arg8: memref<64x128xbf16, #tpu.memory_space<vmem>>, %arg9: memref<64x1xf32, #tpu.memory_space<vmem>>, %arg10: memref<1x64x256xf32, #tpu.memory_space<vmem>>, %arg11: memref<256x256xbf16, #tpu.memory_space<vmem>>, %arg12: memref<128x256xbf16, #tpu.memory_space<vmem>>) attributes {dimension_semantics = [#tpu.dimension_semantics<parallel>, #tpu.dimension_semantics<arbitrary>], iteration_bounds = array<i64: 2, 1>, scalar_prefetch = 0 : i64, scratch_operands = 2 : i64, tpu.core_type = #tpu.core_type<tc>, window_params = [{transform_indices = @transform_0, window_bounds = array<i64: 1, 64, 256>}, {transform_indices = @transform_1, window_bounds = array<i64: 1, 64, 256>}, {pipeline_mode = #tpu.pipeline_mode<synchronous>, transform_indices = @transform_2, window_bounds = array<i64: 128, 64>}, {pipeline_mode = #tpu.pipeline_mode<synchronous>, transform_indices = @transform_3, window_bounds = array<i64: 128, 1>}, {pipeline_mode = #tpu.pipeline_mode<synchronous>, transform_indices = @transform_4, window_bounds = array<i64: 256, 64>}, {pipeline_mode = #tpu.pipeline_mode<synchronous>, transform_indices = @transform_5, window_bounds = array<i64: 256, 1>}, {pipeline_mode = #tpu.pipeline_mode<synchronous>, transform_indices = @transform_6, window_bounds = array<i64: 64, 128>}, {pipeline_mode = #tpu.pipeline_mode<synchronous>, transform_indices = @transform_7, window_bounds = array<i64: 64, 1>}, {transform_indices = @transform_8, window_bounds = array<i64: 1, 64, 256>}]} {
    %c0_i32 = arith.constant 0 : i32
    %0 = arith.cmpi eq, %arg1, %c0_i32 : i32
    %1 = arith.extui %0 : i1 to i32
    %c0_i32_0 = arith.constant 0 : i32
    %2 = arith.cmpi ne, %1, %c0_i32_0 : i32
    scf.if %2 {
      %c0_50 = arith.constant 0 : index
      %c0_51 = arith.constant 0 : index
      %c0_52 = arith.constant 0 : index
      %100 = vector.load %arg3[%c0_50, %c0_51, %c0_52] : memref<1x64x256xf32, #tpu.memory_space<vmem>>, vector<1x64x256xf32>
      %101 = vector.shape_cast %100 : vector<1x64x256xf32> to vector<64x256xf32>
      %102 = arith.truncf %101 : vector<64x256xf32> to vector<64x256xbf16>
      %c0_53 = arith.constant 0 : index
      %c0_54 = arith.constant 0 : index
      %103 = vector.load %arg6[%c0_53, %c0_54] : memref<256x64xbf16, #tpu.memory_space<vmem>>, vector<256x64xbf16>
      %cst_55 = arith.constant dense<0.000000e+00> : vector<256x256xf32>
      %104 = tpu.matmul %103, %102, %cst_55 {dimension_numbers = #tpu.dot_dimension_numbers<[1], [0], [0], [1], [0, 0, 1, 1], [], []>} : vector<256x64xbf16>, vector<64x256xbf16>, vector<256x256xf32> -> vector<256x256xf32>
      %c0_56 = arith.constant 0 : index
      %c0_57 = arith.constant 0 : index
      %105 = vector.load %arg7[%c0_56, %c0_57] : memref<256x1xf32, #tpu.memory_space<vmem>>, vector<256x1xf32>
      %106 = vector.broadcast %105 : vector<256x1xf32> to vector<256x256xf32>
      %107 = arith.addf %104, %106 : vector<256x256xf32>
      %108 = arith.truncf %107 : vector<256x256xf32> to vector<256x256xbf16>
      %c0_58 = arith.constant 0 : index
      %c0_59 = arith.constant 0 : index
      %109 = vector.load %arg11[%c0_58, %c0_59] : memref<256x256xbf16, #tpu.memory_space<vmem>>, vector<256x256xbf16>
      tpu.vector_store %arg11[%c0_58, %c0_59], %108 {strides = array<i32>} : memref<256x256xbf16, #tpu.memory_space<vmem>>, vector<256x256xbf16>,
    } else {
    }
    %c0 = arith.constant 0 : index
    %c0_1 = arith.constant 0 : index
    %c0_2 = arith.constant 0 : index
    %3 = vector.load %arg2[%c0, %c0_1, %c0_2] : memref<1x64x256xf32, #tpu.memory_space<vmem>>, vector<1x64x256xf32>
    %4 = vector.shape_cast %3 : vector<1x64x256xf32> to vector<64x256xf32>
    %5 = arith.truncf %4 : vector<64x256xf32> to vector<64x256xbf16>
    %c0_3 = arith.constant 0 : index
    %c0_4 = arith.constant 0 : index
    %6 = vector.load %arg4[%c0_3, %c0_4] : memref<128x64xbf16, #tpu.memory_space<vmem>>, vector<128x64xbf16>
    %cst = arith.constant dense<0.000000e+00> : vector<128x256xf32>
    %7 = tpu.matmul %6, %5, %cst {dimension_numbers = #tpu.dot_dimension_numbers<[1], [0], [0], [1], [0, 0, 1, 1], [], []>} : vector<128x64xbf16>, vector<64x256xbf16>, vector<128x256xf32> -> vector<128x256xf32>
    %c0_5 = arith.constant 0 : index
    %c0_6 = arith.constant 0 : index
    %8 = vector.load %arg5[%c0_5, %c0_6] : memref<128x1xf32, #tpu.memory_space<vmem>>, vector<128x1xf32>
    %9 = vector.broadcast %8 : vector<128x1xf32> to vector<128x256xf32>
    %10 = arith.addf %7, %9 : vector<128x256xf32>
    %11 = vector.extract_strided_slice %10 {offsets = [0, 0], sizes = [32, 256], strides = [1, 1]} : vector<128x256xf32> to vector<32x256xf32>
    %12 = tpu.transpose %11, [1, 0] : vector<32x256xf32> -> vector<256x32xf32>
    %13 = arith.truncf %12 : vector<256x32xf32> to vector<256x32xbf16>
    %c0_7 = arith.constant 0 : index
    %c0_8 = arith.constant 0 : index
    %14 = vector.load %arg11[%c0_7, %c0_8] : memref<256x256xbf16, #tpu.memory_space<vmem>>, vector<32x256xbf16>
    %c128 = arith.constant 128 : index
    %c0_9 = arith.constant 0 : index
    %15 = vector.load %arg11[%c128, %c0_9] : memref<256x256xbf16, #tpu.memory_space<vmem>>, vector<32x256xbf16>
    %cst_10 = arith.constant dense<0.000000e+00> : vector<256x256xf32>
    %16 = tpu.matmul %13, %14, %cst_10 {dimension_numbers = #tpu.dot_dimension_numbers<[1], [0], [0], [1], [0, 0, 1, 1], [], []>} : vector<256x32xbf16>, vector<32x256xbf16>, vector<256x256xf32> -> vector<256x256xf32>
    %cst_11 = arith.constant dense<0xFF800000> : vector<256xf32>
    %17 = vector.multi_reduction <maximumf>, %16, %cst_11 [1] : vector<256x256xf32> to vector<256xf32>
    %18 = vector.shape_cast %17 : vector<256xf32> to vector<256x1xf32>
    %19 = vector.broadcast %18 : vector<256x1xf32> to vector<256x256xf32>
    %20 = arith.subf %16, %19 : vector<256x256xf32>
    %21 = math.exp %20 : vector<256x256xf32>
    %cst_12 = arith.constant dense<0.000000e+00> : vector<256xf32>
    %22 = vector.multi_reduction <add>, %21, %cst_12 [1] : vector<256x256xf32> to vector<256xf32>
    %23 = vector.shape_cast %22 : vector<256xf32> to vector<256x1xf32>
    %24 = tpu.reciprocal %23 {approx = true} : vector<256x1xf32> -> vector<256x1xf32>
    %25 = vector.broadcast %24 : vector<256x1xf32> to vector<256x256xf32>
    %26 = arith.mulf %21, %25 : vector<256x256xf32>
    %27 = arith.truncf %26 : vector<256x256xf32> to vector<256x256xbf16>
    %cst_13 = arith.constant dense<0.000000e+00> : vector<32x256xf32>
    %28 = tpu.matmul %15, %27, %cst_13 {dimension_numbers = #tpu.dot_dimension_numbers<[1], [1], [0], [0], [0, 0, 1, 0], [], []>} : vector<32x256xbf16>, vector<256x256xbf16>, vector<32x256xf32> -> vector<32x256xf32>
    %29 = arith.truncf %28 : vector<32x256xf32> to vector<32x256xbf16>
    %c0_14 = arith.constant 0 : index
    %c0_15 = arith.constant 0 : index
    %30 = vector.load %arg12[%c0_14, %c0_15] : memref<128x256xbf16, #tpu.memory_space<vmem>>, vector<32x256xbf16>
    tpu.vector_store %arg12[%c0_14, %c0_15], %29 {strides = array<i32>} : memref<128x256xbf16, #tpu.memory_space<vmem>>, vector<32x256xbf16>,
    %31 = vector.extract_strided_slice %10 {offsets = [32, 0], sizes = [32, 256], strides = [1, 1]} : vector<128x256xf32> to vector<32x256xf32>
    %32 = tpu.transpose %31, [1, 0] : vector<32x256xf32> -> vector<256x32xf32>
    %33 = arith.truncf %32 : vector<256x32xf32> to vector<256x32xbf16>
    %c32 = arith.constant 32 : index
    %c0_16 = arith.constant 0 : index
    %34 = vector.load %arg11[%c32, %c0_16] : memref<256x256xbf16, #tpu.memory_space<vmem>>, vector<32x256xbf16>
    %c160 = arith.constant 160 : index
    %c0_17 = arith.constant 0 : index
    %35 = vector.load %arg11[%c160, %c0_17] : memref<256x256xbf16, #tpu.memory_space<vmem>>, vector<32x256xbf16>
    %cst_18 = arith.constant dense<0.000000e+00> : vector<256x256xf32>
    %36 = tpu.matmul %33, %34, %cst_18 {dimension_numbers = #tpu.dot_dimension_numbers<[1], [0], [0], [1], [0, 0, 1, 1], [], []>} : vector<256x32xbf16>, vector<32x256xbf16>, vector<256x256xf32> -> vector<256x256xf32>
    %cst_19 = arith.constant dense<0xFF800000> : vector<256xf32>
    %37 = vector.multi_reduction <maximumf>, %36, %cst_19 [1] : vector<256x256xf32> to vector<256xf32>
    %38 = vector.shape_cast %37 : vector<256xf32> to vector<256x1xf32>
    %39 = vector.broadcast %38 : vector<256x1xf32> to vector<256x256xf32>
    %40 = arith.subf %36, %39 : vector<256x256xf32>
    %41 = math.exp %40 : vector<256x256xf32>
    %cst_20 = arith.constant dense<0.000000e+00> : vector<256xf32>
    %42 = vector.multi_reduction <add>, %41, %cst_20 [1] : vector<256x256xf32> to vector<256xf32>
    %43 = vector.shape_cast %42 : vector<256xf32> to vector<256x1xf32>
    %44 = tpu.reciprocal %43 {approx = true} : vector<256x1xf32> -> vector<256x1xf32>
    %45 = vector.broadcast %44 : vector<256x1xf32> to vector<256x256xf32>
    %46 = arith.mulf %41, %45 : vector<256x256xf32>
    %47 = arith.truncf %46 : vector<256x256xf32> to vector<256x256xbf16>
    %cst_21 = arith.constant dense<0.000000e+00> : vector<32x256xf32>
    %48 = tpu.matmul %35, %47, %cst_21 {dimension_numbers = #tpu.dot_dimension_numbers<[1], [1], [0], [0], [0, 0, 1, 0], [], []>} : vector<32x256xbf16>, vector<256x256xbf16>, vector<32x256xf32> -> vector<32x256xf32>
    %49 = arith.truncf %48 : vector<32x256xf32> to vector<32x256xbf16>
    %c32_22 = arith.constant 32 : index
    %c0_23 = arith.constant 0 : index
    %50 = vector.load %arg12[%c32_22, %c0_23] : memref<128x256xbf16, #tpu.memory_space<vmem>>, vector<32x256xbf16>
    tpu.vector_store %arg12[%c32_22, %c0_23], %49 {strides = array<i32>} : memref<128x256xbf16, #tpu.memory_space<vmem>>, vector<32x256xbf16>,
    %51 = vector.extract_strided_slice %10 {offsets = [64, 0], sizes = [32, 256], strides = [1, 1]} : vector<128x256xf32> to vector<32x256xf32>
    %52 = tpu.transpose %51, [1, 0] : vector<32x256xf32> -> vector<256x32xf32>
    %53 = arith.truncf %52 : vector<256x32xf32> to vector<256x32xbf16>
    %c64 = arith.constant 64 : index
    %c0_24 = arith.constant 0 : index
    %54 = vector.load %arg11[%c64, %c0_24] : memref<256x256xbf16, #tpu.memory_space<vmem>>, vector<32x256xbf16>
    %c192 = arith.constant 192 : index
    %c0_25 = arith.constant 0 : index
    %55 = vector.load %arg11[%c192, %c0_25] : memref<256x256xbf16, #tpu.memory_space<vmem>>, vector<32x256xbf16>
    %cst_26 = arith.constant dense<0.000000e+00> : vector<256x256xf32>
    %56 = tpu.matmul %53, %54, %cst_26 {dimension_numbers = #tpu.dot_dimension_numbers<[1], [0], [0], [1], [0, 0, 1, 1], [], []>} : vector<256x32xbf16>, vector<32x256xbf16>, vector<256x256xf32> -> vector<256x256xf32>
    %cst_27 = arith.constant dense<0xFF800000> : vector<256xf32>
    %57 = vector.multi_reduction <maximumf>, %56, %cst_27 [1] : vector<256x256xf32> to vector<256xf32>
    %58 = vector.shape_cast %57 : vector<256xf32> to vector<256x1xf32>
    %59 = vector.broadcast %58 : vector<256x1xf32> to vector<256x256xf32>
    %60 = arith.subf %56, %59 : vector<256x256xf32>
    %61 = math.exp %60 : vector<256x256xf32>
    %cst_28 = arith.constant dense<0.000000e+00> : vector<256xf32>
    %62 = vector.multi_reduction <add>, %61, %cst_28 [1] : vector<256x256xf32> to vector<256xf32>
    %63 = vector.shape_cast %62 : vector<256xf32> to vector<256x1xf32>
    %64 = tpu.reciprocal %63 {approx = true} : vector<256x1xf32> -> vector<256x1xf32>
    %65 = vector.broadcast %64 : vector<256x1xf32> to vector<256x256xf32>
    %66 = arith.mulf %61, %65 : vector<256x256xf32>
    %67 = arith.truncf %66 : vector<256x256xf32> to vector<256x256xbf16>
    %cst_29 = arith.constant dense<0.000000e+00> : vector<32x256xf32>
    %68 = tpu.matmul %55, %67, %cst_29 {dimension_numbers = #tpu.dot_dimension_numbers<[1], [1], [0], [0], [0, 0, 1, 0], [], []>} : vector<32x256xbf16>, vector<256x256xbf16>, vector<32x256xf32> -> vector<32x256xf32>
    %69 = arith.truncf %68 : vector<32x256xf32> to vector<32x256xbf16>
    %c64_30 = arith.constant 64 : index
    %c0_31 = arith.constant 0 : index
    %70 = vector.load %arg12[%c64_30, %c0_31] : memref<128x256xbf16, #tpu.memory_space<vmem>>, vector<32x256xbf16>
    tpu.vector_store %arg12[%c64_30, %c0_31], %69 {strides = array<i32>} : memref<128x256xbf16, #tpu.memory_space<vmem>>, vector<32x256xbf16>,
    %71 = vector.extract_strided_slice %10 {offsets = [96, 0], sizes = [32, 256], strides = [1, 1]} : vector<128x256xf32> to vector<32x256xf32>
    %72 = tpu.transpose %71, [1, 0] : vector<32x256xf32> -> vector<256x32xf32>
    %73 = arith.truncf %72 : vector<256x32xf32> to vector<256x32xbf16>
    %c96 = arith.constant 96 : index
    %c0_32 = arith.constant 0 : index
    %74 = vector.load %arg11[%c96, %c0_32] : memref<256x256xbf16, #tpu.memory_space<vmem>>, vector<32x256xbf16>
    %c224 = arith.constant 224 : index
    %c0_33 = arith.constant 0 : index
    %75 = vector.load %arg11[%c224, %c0_33] : memref<256x256xbf16, #tpu.memory_space<vmem>>, vector<32x256xbf16>
    %cst_34 = arith.constant dense<0.000000e+00> : vector<256x256xf32>
    %76 = tpu.matmul %73, %74, %cst_34 {dimension_numbers = #tpu.dot_dimension_numbers<[1], [0], [0], [1], [0, 0, 1, 1], [], []>} : vector<256x32xbf16>, vector<32x256xbf16>, vector<256x256xf32> -> vector<256x256xf32>
    %cst_35 = arith.constant dense<0xFF800000> : vector<256xf32>
    %77 = vector.multi_reduction <maximumf>, %76, %cst_35 [1] : vector<256x256xf32> to vector<256xf32>
    %78 = vector.shape_cast %77 : vector<256xf32> to vector<256x1xf32>
    %79 = vector.broadcast %78 : vector<256x1xf32> to vector<256x256xf32>
    %80 = arith.subf %76, %79 : vector<256x256xf32>
    %81 = math.exp %80 : vector<256x256xf32>
    %cst_36 = arith.constant dense<0.000000e+00> : vector<256xf32>
    %82 = vector.multi_reduction <add>, %81, %cst_36 [1] : vector<256x256xf32> to vector<256xf32>
    %83 = vector.shape_cast %82 : vector<256xf32> to vector<256x1xf32>
    %84 = tpu.reciprocal %83 {approx = true} : vector<256x1xf32> -> vector<256x1xf32>
    %85 = vector.broadcast %84 : vector<256x1xf32> to vector<256x256xf32>
    %86 = arith.mulf %81, %85 : vector<256x256xf32>
    %87 = arith.truncf %86 : vector<256x256xf32> to vector<256x256xbf16>
    %cst_37 = arith.constant dense<0.000000e+00> : vector<32x256xf32>
    %88 = tpu.matmul %75, %87, %cst_37 {dimension_numbers = #tpu.dot_dimension_numbers<[1], [1], [0], [0], [0, 0, 1, 0], [], []>} : vector<32x256xbf16>, vector<256x256xbf16>, vector<32x256xf32> -> vector<32x256xf32>
    %89 = arith.truncf %88 : vector<32x256xf32> to vector<32x256xbf16>
    %c96_38 = arith.constant 96 : index
    %c0_39 = arith.constant 0 : index
    %90 = vector.load %arg12[%c96_38, %c0_39] : memref<128x256xbf16, #tpu.memory_space<vmem>>, vector<32x256xbf16>
    tpu.vector_store %arg12[%c96_38, %c0_39], %89 {strides = array<i32>} : memref<128x256xbf16, #tpu.memory_space<vmem>>, vector<32x256xbf16>,
    %c0_40 = arith.constant 0 : index
    %c0_41 = arith.constant 0 : index
    %91 = vector.load %arg8[%c0_40, %c0_41] : memref<64x128xbf16, #tpu.memory_space<vmem>>, vector<64x128xbf16>
    %c0_42 = arith.constant 0 : index
    %c0_43 = arith.constant 0 : index
    %92 = vector.load %arg12[%c0_42, %c0_43] : memref<128x256xbf16, #tpu.memory_space<vmem>>, vector<128x256xbf16>
    %cst_44 = arith.constant dense<0.000000e+00> : vector<64x256xf32>
    %93 = tpu.matmul %91, %92, %cst_44 {dimension_numbers = #tpu.dot_dimension_numbers<[1], [0], [0], [1], [0, 0, 1, 1], [], []>} : vector<64x128xbf16>, vector<128x256xbf16>, vector<64x256xf32> -> vector<64x256xf32>
    %c0_45 = arith.constant 0 : index
    %c0_46 = arith.constant 0 : index
    %94 = vector.load %arg9[%c0_45, %c0_46] : memref<64x1xf32, #tpu.memory_space<vmem>>, vector<64x1xf32>
    %95 = vector.broadcast %94 : vector<64x1xf32> to vector<64x256xf32>
    %96 = arith.addf %93, %95 : vector<64x256xf32>
    %c0_47 = arith.constant 0 : index
    %c0_48 = arith.constant 0 : index
    %c0_49 = arith.constant 0 : index
    %97 = vector.load %arg10[%c0_47, %c0_48, %c0_49] : memref<1x64x256xf32, #tpu.memory_space<vmem>>, vector<1x64x256xf32>
    %98 = vector.shape_cast %97 : vector<1x64x256xf32> to vector<64x256xf32>
    %99 = vector.shape_cast %96 : vector<64x256xf32> to vector<1x64x256xf32>
    tpu.vector_store %arg10[%c0_47, %c0_48, %c0_49], %99 {strides = array<i32>} : memref<1x64x256xf32, #tpu.memory_space<vmem>>, vector<1x64x256xf32>,
    return
  }
  func.func @transform_0(%arg0: i32, %arg1: i32) -> (i32, i32, i32) {
    %c0_i32 = arith.constant 0 : i32
    %c0_i32_0 = arith.constant 0 : i32
    return %arg0, %c0_i32, %arg1 : i32, i32, i32
  }
  func.func @transform_1(%arg0: i32, %arg1: i32) -> (i32, i32, i32) {
    %c0_i32 = arith.constant 0 : i32
    %c0_i32_0 = arith.constant 0 : i32
    %c0_i32_1 = arith.constant 0 : i32
    return %arg0, %c0_i32, %c0_i32_0 : i32, i32, i32
  }
  func.func @transform_2(%arg0: i32, %arg1: i32) -> (i32, i32) {
    %c0_i32 = arith.constant 0 : i32
    %c0_i32_0 = arith.constant 0 : i32
    %c0_i32_1 = arith.constant 0 : i32
    return %c0_i32, %c0_i32_0 : i32, i32
  }
  func.func @transform_3(%arg0: i32, %arg1: i32) -> (i32, i32) {
    %c0_i32 = arith.constant 0 : i32
    %c0_i32_0 = arith.constant 0 : i32
    %c0_i32_1 = arith.constant 0 : i32
    return %c0_i32, %c0_i32_0 : i32, i32
  }
  func.func @transform_4(%arg0: i32, %arg1: i32) -> (i32, i32) {
    %c0_i32 = arith.constant 0 : i32
    %c0_i32_0 = arith.constant 0 : i32
    %c0_i32_1 = arith.constant 0 : i32
    return %c0_i32, %c0_i32_0 : i32, i32
  }
  func.func @transform_5(%arg0: i32, %arg1: i32) -> (i32, i32) {
    %c0_i32 = arith.constant 0 : i32
    %c0_i32_0 = arith.constant 0 : i32
    %c0_i32_1 = arith.constant 0 : i32
    return %c0_i32, %c0_i32_0 : i32, i32
  }
  func.func @transform_6(%arg0: i32, %arg1: i32) -> (i32, i32) {
    %c0_i32 = arith.constant 0 : i32
    %c0_i32_0 = arith.constant 0 : i32
    %c0_i32_1 = arith.constant 0 : i32
    return %c0_i32, %c0_i32_0 : i32, i32
  }
  func.func @transform_7(%arg0: i32, %arg1: i32) -> (i32, i32) {
    %c0_i32 = arith.constant 0 : i32
    %c0_i32_0 = arith.constant 0 : i32
    %c0_i32_1 = arith.constant 0 : i32
    return %c0_i32, %c0_i32_0 : i32, i32
  }
  func.func @transform_8(%arg0: i32, %arg1: i32) -> (i32, i32, i32) {
    %c0_i32 = arith.constant 0 : i32
    %c0_i32_0 = arith.constant 0 : i32
    return %arg0, %c0_i32, %arg1 : i32, i32, i32
  }
}

</mosaic_0001>

<llo_original>
// kernel: tpu_custom_call.1
$region0: #{tpu_custom_call.1}
  #allocation0 [shape = 'u32[]', space=smem, size = 0x4, offset = 0x4, fixed_abs, tag = 'smem constant byte address 0x4 - core index']
  #allocation1 [shape = 'u32[144,128]{1,0:T(1,128)}', space=vmem, size = 0x12000, scoped, tag = 'internal scratch']
  #allocation2 [shape = 'bf16[256,256]{1,0:T(16,128)(2,1)}', space=vmem, size = 0x20000, scoped, tag = 'scratch operand']
  #allocation3 [shape = 'bf16[128,256]{1,0:T(16,128)(2,1)}', space=vmem, size = 0x10000, scoped, tag = 'scratch operand']
  %s0 = inlined_call_operand.vmem [shape: f32[2,64,256], index: 0, kind: input, shape index: {}]
  %s1 = inlined_call_operand.vmem [shape: f32[2,64,256], index: 1, kind: input, shape index: {}]
  %s2 = inlined_call_operand.vmem [shape: bf16[128,64], index: 2, kind: input, shape index: {}]
  %s3 = inlined_call_operand.vmem [shape: f32[128,1], index: 3, kind: input, shape index: {}]
  %s4 = inlined_call_operand.vmem [shape: bf16[256,64], index: 4, kind: input, shape index: {}]
  %s5 = inlined_call_operand.vmem [shape: f32[256,1], index: 5, kind: input, shape index: {}]
  %s6 = inlined_call_operand.vmem [shape: bf16[64,128], index: 6, kind: input, shape index: {}]
  %s7 = inlined_call_operand.vmem [shape: f32[64,1], index: 7, kind: input, shape index: {}]
  %s8 = inlined_call_operand.hbm [shape: f32[2,64,256], index: 8, kind: output, shape index: {}]
  %s9 = sld [smem:[#allocation0]]
  $region69: #{tpu_custom_call.1} parent=0
    _
  %s11 = ssub.s32 1, %s9
  %s12 = scalar_select 0, %s11, %s9
  $region1: #{tpu_custom_call.1} parent=0
    #allocation4 [shape = 'u8[131072]{0}', space=vmem, size = 0x20000, scoped, tag = 'output window, operand 0']
    #allocation5 [shape = 's32[2]{0}', space=sflag, size = 0x8, scoped, tag = 'scoped memory for tpu_custom_call.1']
    %13 = vsyncpa [#allocation5], 0
    %s14 = scalar_lea.sflag [#allocation5], 1
    %15 = vsyncpa %s14, 0
    loop: start=0, step=1, limit=4
    $region2: #{tpu_custom_call.1} parent=1 // loop_pre_header
      _
    $region3: #{tpu_custom_call.1} parent=1 // loop_header
      %s17 = sphi 0, %s21
      %p18 = scmp.ge.s32.totalorder %s17, 4
      %s24 = sphi 0, %s36
      %s25 = sphi 0, %s32
      %s26 = sphi 0, %s24
      %s27 = sphi 0, %s25
      %s28 = sphi 0, %s26
      %s29 = sphi 0, %s27
      %s41 = sphi 0, %s43
      %s44 = sphi 0, %s41
      %s45 = sphi 0, %s44
      %s61 = sphi 0, %s45
      %s67 = sphi 0, %s69
      %s70 = sphi 0, %s67
      %s71 = sphi 0, %s70
      %s87 = sphi 0, %s71
      %s91 = sphi 0, %s91
      %s93 = sphi 0, %s91
      %s94 = sphi 0, %s93
      %s108 = sphi 0, %s94
      %s112 = sphi 0, %s112
      %s114 = sphi 0, %s112
      %s115 = sphi 0, %s114
      %s129 = sphi 0, %s115
      %s133 = sphi 0, %s133
      %s135 = sphi 0, %s133
      %s136 = sphi 0, %s135
      %s150 = sphi 0, %s136
      %s154 = sphi 0, %s154
      %s156 = sphi 0, %s154
      %s157 = sphi 0, %s156
      %s171 = sphi 0, %s157
      %s175 = sphi 0, %s175
      %s177 = sphi 0, %s175
      %s178 = sphi 0, %s177
      %s192 = sphi 0, %s178
      %s196 = sphi 0, %s196
      %s198 = sphi 0, %s196
      %s199 = sphi 0, %s198
      %s213 = sphi 0, %s199
      %s221 = sphi 0, %s223
      %s224 = sphi 0, %s221
      %s225 = sphi 0, %s224
      %s241 = sphi 0, %s225
    $region4: #{tpu_custom_call.1} parent=1 // loop_header_branch
      %20 = sbr.rel (%p18) target = $region8
    $region5: #{tpu_custom_call.1} parent=1 // loop_body
      %s22 = ssub.s32 %s17, 1
      %s23 = ssub.s32 %s17, 2
      %s30 = sadd.s32 1, %s25
      %p31 = scmp.ge.s32.totalorder %s30, 1
      %s32 = scalar_select %p31, 0, %s30
      %s33 = sadd.s32 1, %s24
      %s34 = scalar_select %p31, %s33, %s24
      %p35 = scmp.ge.s32.totalorder %s34, 2
      %s36 = scalar_select %p35, 0, %s34
      %s37 = ssub.s32 %s24, %s36
      %s38 = ssub.s32 %s25, %s32
      %s39 = sor.u32 %s37, %s38
      %p40 = scmp.eq.s32.totalorder %s39, 0
      %s42 = sadd.s32 %s41, 1
      %s43 = scalar_select %p40, %s41, %s42
      %p46 = pneg %p40
      %p47 = scmp.eq.s32.totalorder %s17, 1
      %p48 = por %p46, %p47
      %p49 = scmp.ne.s32.totalorder %s41, %s44
      %p50 = scmp.eq.s32.totalorder %s17, 0
      %p51 = por %p49, %p50
      %p52 = scmp.ne.s32.totalorder %s41, %s44
      %p53 = scmp.eq.s32.totalorder %s22, 1
      %p54 = por %p52, %p53
      %p55 = scmp.ne.s32.totalorder %s44, %s45
      %p56 = scmp.eq.s32.totalorder %s22, 0
      %p57 = por %p55, %p56
      %p58 = scmp.ne.s32.totalorder %s44, %s45
      %p59 = scmp.eq.s32.totalorder %s23, 1
      %p60 = por %p58, %p59
      %p62 = scmp.ne.s32.totalorder %s45, %s61
      %p63 = scmp.eq.s32.totalorder %s23, 0
      %p64 = por %p62, %p63
      %s65 = ssub.s32 %s24, %s36
      %p66 = scmp.eq.s32.totalorder %s65, 0
      %s68 = sadd.s32 %s67, 1
      %s69 = scalar_select %p66, %s67, %s68
      %p72 = pneg %p66
      %p73 = scmp.eq.s32.totalorder %s17, 1
      %p74 = por %p72, %p73
      %p75 = scmp.ne.s32.totalorder %s67, %s70
      %p76 = scmp.eq.s32.totalorder %s17, 0
      %p77 = por %p75, %p76
      %p78 = scmp.ne.s32.totalorder %s67, %s70
      %p79 = scmp.eq.s32.totalorder %s22, 1
      %p80 = por %p78, %p79
      %p81 = scmp.ne.s32.totalorder %s70, %s71
      %p82 = scmp.eq.s32.totalorder %s22, 0
      %p83 = por %p81, %p82
      %p84 = scmp.ne.s32.totalorder %s70, %s71
      %p85 = scmp.eq.s32.totalorder %s23, 1
      %p86 = por %p84, %p85
      %p88 = scmp.ne.s32.totalorder %s71, %s87
      %p89 = scmp.eq.s32.totalorder %s23, 0
      %p90 = por %p88, %p89
      %s92 = sadd.s32 %s91, 1
      %p95 = scmp.eq.s32.totalorder %s17, 1
      %p96 = scmp.ne.s32.totalorder %s91, %s93
      %p97 = scmp.eq.s32.totalorder %s17, 0
      %p98 = por %p96, %p97
      %p99 = scmp.ne.s32.totalorder %s91, %s93
      %p100 = scmp.eq.s32.totalorder %s22, 1
      %p101 = por %p99, %p100
      %p102 = scmp.ne.s32.totalorder %s93, %s94
      %p103 = scmp.eq.s32.totalorder %s22, 0
      %p104 = por %p102, %p103
      %p105 = scmp.ne.s32.totalorder %s93, %s94
      %p106 = scmp.eq.s32.totalorder %s23, 1
      %p107 = por %p105, %p106
      %p109 = scmp.ne.s32.totalorder %s94, %s108
      %p110 = scmp.eq.s32.totalorder %s23, 0
      %p111 = por %p109, %p110
      %s113 = sadd.s32 %s112, 1
      %p116 = scmp.eq.s32.totalorder %s17, 1
      %p117 = scmp.ne.s32.totalorder %s112, %s114
      %p118 = scmp.eq.s32.totalorder %s17, 0
      %p119 = por %p117, %p118
      %p120 = scmp.ne.s32.totalorder %s112, %s114
      %p121 = scmp.eq.s32.totalorder %s22, 1
      %p122 = por %p120, %p121
      %p123 = scmp.ne.s32.totalorder %s114, %s115
      %p124 = scmp.eq.s32.totalorder %s22, 0
      %p125 = por %p123, %p124
      %p126 = scmp.ne.s32.totalorder %s114, %s115
      %p127 = scmp.eq.s32.totalorder %s23, 1
      %p128 = por %p126, %p127
      %p130 = scmp.ne.s32.totalorder %s115, %s129
      %p131 = scmp.eq.s32.totalorder %s23, 0
      %p132 = por %p130, %p131
      %s134 = sadd.s32 %s133, 1
      %p137 = scmp.eq.s32.totalorder %s17, 1
      %p138 = scmp.ne.s32.totalorder %s133, %s135
      %p139 = scmp.eq.s32.totalorder %s17, 0
      %p140 = por %p138, %p139
      %p141 = scmp.ne.s32.totalorder %s133, %s135
      %p142 = scmp.eq.s32.totalorder %s22, 1
      %p143 = por %p141, %p142
      %p144 = scmp.ne.s32.totalorder %s135, %s136
      %p145 = scmp.eq.s32.totalorder %s22, 0
      %p146 = por %p144, %p145
      %p147 = scmp.ne.s32.totalorder %s135, %s136
      %p148 = scmp.eq.s32.totalorder %s23, 1
      %p149 = por %p147, %p148
      %p151 = scmp.ne.s32.totalorder %s136, %s150
      %p152 = scmp.eq.s32.totalorder %s23, 0
      %p153 = por %p151, %p152
      %s155 = sadd.s32 %s154, 1
      %p158 = scmp.eq.s32.totalorder %s17, 1
      %p159 = scmp.ne.s32.totalorder %s154, %s156
      %p160 = scmp.eq.s32.totalorder %s17, 0
      %p161 = por %p159, %p160
      %p162 = scmp.ne.s32.totalorder %s154, %s156
      %p163 = scmp.eq.s32.totalorder %s22, 1
      %p164 = por %p162, %p163
      %p165 = scmp.ne.s32.totalorder %s156, %s157
      %p166 = scmp.eq.s32.totalorder %s22, 0
      %p167 = por %p165, %p166
      %p168 = scmp.ne.s32.totalorder %s156, %s157
      %p169 = scmp.eq.s32.totalorder %s23, 1
      %p170 = por %p168, %p169
      %p172 = scmp.ne.s32.totalorder %s157, %s171
      %p173 = scmp.eq.s32.totalorder %s23, 0
      %p174 = por %p172, %p173
      %s176 = sadd.s32 %s175, 1
      %p179 = scmp.eq.s32.totalorder %s17, 1
      %p180 = scmp.ne.s32.totalorder %s175, %s177
      %p181 = scmp.eq.s32.totalorder %s17, 0
      %p182 = por %p180, %p181
      %p183 = scmp.ne.s32.totalorder %s175, %s177
      %p184 = scmp.eq.s32.totalorder %s22, 1
      %p185 = por %p183, %p184
      %p186 = scmp.ne.s32.totalorder %s177, %s178
      %p187 = scmp.eq.s32.totalorder %s22, 0
      %p188 = por %p186, %p187
      %p189 = scmp.ne.s32.totalorder %s177, %s178
      %p190 = scmp.eq.s32.totalorder %s23, 1
      %p191 = por %p189, %p190
      %p193 = scmp.ne.s32.totalorder %s178, %s192
      %p194 = scmp.eq.s32.totalorder %s23, 0
      %p195 = por %p193, %p194
      %s197 = sadd.s32 %s196, 1
      %p200 = scmp.eq.s32.totalorder %s17, 1
      %p201 = scmp.ne.s32.totalorder %s196, %s198
      %p202 = scmp.eq.s32.totalorder %s17, 0
      %p203 = por %p201, %p202
      %p204 = scmp.ne.s32.totalorder %s196, %s198
      %p205 = scmp.eq.s32.totalorder %s22, 1
      %p206 = por %p204, %p205
      %p207 = scmp.ne.s32.totalorder %s198, %s199
      %p208 = scmp.eq.s32.totalorder %s22, 0
      %p209 = por %p207, %p208
      %p210 = scmp.ne.s32.totalorder %s198, %s199
      %p211 = scmp.eq.s32.totalorder %s23, 1
      %p212 = por %p210, %p211
      %p214 = scmp.ne.s32.totalorder %s199, %s213
      %p215 = scmp.eq.s32.totalorder %s23, 0
      %p216 = por %p214, %p215
      %s217 = ssub.s32 %s24, %s36
      %s218 = ssub.s32 %s25, %s32
      %s219 = sor.u32 %s217, %s218
      %p220 = scmp.eq.s32.totalorder %s219, 0
      %s222 = sadd.s32 %s221, 1
      %s223 = scalar_select %p220, %s221, %s222
      %p226 = pneg %p220
      %p227 = scmp.eq.s32.totalorder %s17, 1
      %p228 = por %p226, %p227
      %p229 = scmp.ne.s32.totalorder %s221, %s224
      %p230 = scmp.eq.s32.totalorder %s17, 0
      %p231 = por %p229, %p230
      %p232 = scmp.ne.s32.totalorder %s221, %s224
      %p233 = scmp.eq.s32.totalorder %s22, 1
      %p234 = por %p232, %p233
      %p235 = scmp.ne.s32.totalorder %s224, %s225
      %p236 = scmp.eq.s32.totalorder %s22, 0
      %p237 = por %p235, %p236
      %p238 = scmp.ne.s32.totalorder %s224, %s225
      %p239 = scmp.eq.s32.totalorder %s23, 1
      %p240 = por %p238, %p239
      %p242 = scmp.ne.s32.totalorder %s225, %s241
      %p243 = scmp.eq.s32.totalorder %s23, 0
      %p244 = por %p242, %p243
      %p245 = scmp.le.s32.totalorder 1, %s17
      %p246 = scmp.lt.s32.totalorder %s17, 3
      %p247 = pnand %p245, %p246
      %p248 = pneg %p247
      // Predicated region
      $region9: #{tpu_custom_call.1} parent=5 // pred_check
        _
      $region10: #{tpu_custom_call.1} parent=5 // pred_check_branch
        %250 = sbr.rel (%p247) target = $region12
      $region11: #{tpu_custom_call.1} parent=5 // pred_region
        %s251 = ssub.s32 %s17, 1
        // Predicated region
        $region13: #{tpu_custom_call.1} parent=11 // pred_check
          %p252 = pneg %p104
        $region14: #{tpu_custom_call.1} parent=11 // pred_check_branch
          %254 = sbr.rel (%p252) target = $region16
        $region15: #{tpu_custom_call.1} parent=11 // pred_region
          _
        $region16: #{tpu_custom_call.1} parent=11 // pred_fallthru
          _
        // Predicated region
        $region17: #{tpu_custom_call.1} parent=11 // pred_check
          %p255 = pneg %p125
        $region18: #{tpu_custom_call.1} parent=11 // pred_check_branch
          %257 = sbr.rel (%p255) target = $region20
        $region19: #{tpu_custom_call.1} parent=11 // pred_region
          _
        $region20: #{tpu_custom_call.1} parent=11 // pred_fallthru
          _
        // Predicated region
        $region21: #{tpu_custom_call.1} parent=11 // pred_check
          %p258 = pneg %p146
        $region22: #{tpu_custom_call.1} parent=11 // pred_check_branch
          %260 = sbr.rel (%p258) target = $region24
        $region23: #{tpu_custom_call.1} parent=11 // pred_region
          _
        $region24: #{tpu_custom_call.1} parent=11 // pred_fallthru
          _
        // Predicated region
        $region25: #{tpu_custom_call.1} parent=11 // pred_check
          %p261 = pneg %p167
        $region26: #{tpu_custom_call.1} parent=11 // pred_check_branch
          %263 = sbr.rel (%p261) target = $region28
        $region27: #{tpu_custom_call.1} parent=11 // pred_region
          _
        $region28: #{tpu_custom_call.1} parent=11 // pred_fallthru
          _
        // Predicated region
        $region29: #{tpu_custom_call.1} parent=11 // pred_check
          %p264 = pneg %p188
        $region30: #{tpu_custom_call.1} parent=11 // pred_check_branch
          %266 = sbr.rel (%p264) target = $region32
        $region31: #{tpu_custom_call.1} parent=11 // pred_region
          _
        $region32: #{tpu_custom_call.1} parent=11 // pred_fallthru
          _
        // Predicated region
        $region33: #{tpu_custom_call.1} parent=11 // pred_check
          %p267 = pneg %p209
        $region34: #{tpu_custom_call.1} parent=11 // pred_check_branch
          %269 = sbr.rel (%p267) target = $region36
        $region35: #{tpu_custom_call.1} parent=11 // pred_region
          _
        $region36: #{tpu_custom_call.1} parent=11 // pred_fallthru
          _
      $region12: #{tpu_custom_call.1} parent=5 // pred_fallthru
        _
      %p270 = scmp.lt.s32.totalorder %s17, 2
      // Predicated region
      $region37: #{tpu_custom_call.1} parent=5 // pred_check
        %p271 = pneg %p270
      $region38: #{tpu_custom_call.1} parent=5 // pred_check_branch
        %273 = sbr.rel (%p271) target = $region40
      $region39: #{tpu_custom_call.1} parent=5 // pred_region
        // Predicated region
        $region41: #{tpu_custom_call.1} parent=39 // pred_check
          %p274 = pneg %p51
        $region42: #{tpu_custom_call.1} parent=39 // pred_check_branch
          %276 = sbr.rel (%p274) target = $region44
        $region43: #{tpu_custom_call.1} parent=39 // pred_region
          %s277 = smul.u32 2, %s25
          %p278 = scmp.lt.s32.totalorder %s24, 1
          %s279 = scalar_select %p278, %s24, 1
          %p280 = scmp.lt.s32.totalorder %s277, 1
          %s281 = scalar_select %p280, %s277, 1
          %s282 = smul.addr %s279, 16
          %s283 = sadd.s32 %s281, %s282
          %s284 = smul.addr %s283, 8
          %s285 = scalar_lea.vmem %s0, %s284
          %s286 = smul.u32 2, %s25
        $region44: #{tpu_custom_call.1} parent=39 // pred_fallthru
          _
        // Predicated region
        $region45: #{tpu_custom_call.1} parent=39 // pred_check
          %p287 = pneg %p77
        $region46: #{tpu_custom_call.1} parent=39 // pred_check_branch
          %289 = sbr.rel (%p287) target = $region48
        $region47: #{tpu_custom_call.1} parent=39 // pred_region
          %p290 = scmp.lt.s32.totalorder %s24, 1
          %s291 = scalar_select %p290, %s24, 1
          %s292 = smul.addr %s291, 16
          %s293 = smul.addr %s292, 8
          %s294 = scalar_lea.vmem %s1, %s293
        $region48: #{tpu_custom_call.1} parent=39 // pred_fallthru
          _
      $region40: #{tpu_custom_call.1} parent=5 // pred_fallthru
        _
      %p295 = scmp.le.s32.totalorder 1, %s17
      %p296 = scmp.lt.s32.totalorder %s17, 3
      %p297 = pnand %p295, %p296
      %p298 = pneg %p297
      // Predicated region
      $region49: #{tpu_custom_call.1} parent=5 // pred_check
        _
      $region50: #{tpu_custom_call.1} parent=5 // pred_check_branch
        %300 = sbr.rel (%p297) target = $region52
      $region51: #{tpu_custom_call.1} parent=5 // pred_region
        %s301 = ssub.s32 %s17, 1
        %s302 = smul.u32 2, %s27
        %p303 = scmp.lt.s32.totalorder %s26, 1
        %s304 = scalar_select %p303, %s26, 1
        %p305 = scmp.lt.s32.totalorder %s302, 1
        %s306 = scalar_select %p305, %s302, 1
        %s307 = smul.addr %s304, 16
        %s308 = sadd.s32 %s306, %s307
        %s309 = smul.addr %s308, 8
        %s310 = scalar_lea.vmem %s0, %s309
        %p311 = pneg %p57
        %p312 = pneg %p54
        %p313 = scmp.lt.s32.totalorder %s26, 1
        %s314 = scalar_select %p313, %s26, 1
        %s315 = smul.addr %s314, 16
        %s316 = smul.addr %s315, 8
        %s317 = scalar_lea.vmem %s1, %s316
        %p318 = pneg %p83
        %p319 = pneg %p80
        %p320 = pneg %p104
        %p321 = pneg %p101
        %p322 = pneg %p125
        %p323 = pneg %p122
        %p324 = pneg %p146
        %p325 = pneg %p143
        %p326 = pneg %p167
        %p327 = pneg %p164
        %p328 = pneg %p188
        %p329 = pneg %p185
        %p330 = pneg %p209
        %p331 = pneg %p206
        %p332 = pneg %p237
        %p333 = pneg %p234
        %s334 = sand.u32 %s224, 1
        %s335 = scalar_lea.sflag [#allocation5], %s334
        %s336 = sand.u32 %s224, 1
        %s337 = smul.addr %s336, 128
        %s338 = scalar_lea.vmem [#allocation4], %s337
        %s339 = smul.u32 2, %s27
        %p340 = scmp.lt.s32.totalorder %s26, 1
        %s341 = scalar_select %p340, %s26, 1
        %p342 = scmp.lt.s32.totalorder %s339, 1
        %s343 = scalar_select %p342, %s339, 1
        %s344 = smul.addr %s341, 16
        %s345 = sadd.s32 %s343, %s344
        %s346 = smul.addr %s345, 8
        %s347 = scalar_lea.vmem %s0, %s346
        %s348 = smul.u32 2, %s27
        %p349 = scmp.lt.s32.totalorder %s26, 1
        %s350 = scalar_select %p349, %s26, 1
        %s351 = smul.addr %s350, 16
        %s352 = smul.addr %s351, 8
        %s353 = scalar_lea.vmem %s1, %s352
        %s354 = smul.u32 2, %s27
        %p356 = scmp.eq.s32.totalorder %s27, 0
        // Predicated region
        $region53: #{tpu_custom_call.1} parent=51 // pred_check
          %p357 = pneg %p356
        $region54: #{tpu_custom_call.1} parent=51 // pred_check_branch
          %359 = sbr.rel (%p357) target = $region56
        $region55: #{tpu_custom_call.1} parent=51 // pred_region
          %v360 = vld [vmem:[%s353] sm:$0xff]
          %v361 = vld [vmem:[%s353 + $0x8] sm:$0xff]
          %v362 = vld [vmem:[%s353 + $0x10] sm:$0xff]
          %v363 = vld [vmem:[%s353 + $0x18] sm:$0xff]
          %v364 = vld [vmem:[%s353 + $0x20] sm:$0xff]
          %v365 = vld [vmem:[%s353 + $0x28] sm:$0xff]
          %v366 = vld [vmem:[%s353 + $0x30] sm:$0xff]
          %v367 = vld [vmem:[%s353 + $0x38] sm:$0xff]
          %v368 = vld [vmem:[%s353 + $0x40] sm:$0xff]
          %v369 = vld [vmem:[%s353 + $0x48] sm:$0xff]
          %v370 = vld [vmem:[%s353 + $0x50] sm:$0xff]
          %v371 = vld [vmem:[%s353 + $0x58] sm:$0xff]
          %v372 = vld [vmem:[%s353 + $0x60] sm:$0xff]
          %v373 = vld [vmem:[%s353 + $0x68] sm:$0xff]
          %v374 = vld [vmem:[%s353 + $0x70] sm:$0xff]
          %v375 = vld [vmem:[%s353 + $0x78] sm:$0xff]
          %v376 = vpack.c.bf16 %v362, %v360
          %v377 = vpack.c.bf16 %v363, %v361
          %v378 = vpack.c.bf16 %v366, %v364
          %v379 = vpack.c.bf16 %v367, %v365
          %v380 = vpack.c.bf16 %v370, %v368
          %v381 = vpack.c.bf16 %v371, %v369
          %v382 = vpack.c.bf16 %v374, %v372
          %v383 = vpack.c.bf16 %v375, %v373
          %v384 = vld [vmem:[%s4] sm:$0xf]
          %v385 = vld [vmem:[%s4 + $0x4] sm:$0xf]
          %v386 = vld [vmem:[%s4 + $0x8] sm:$0xf]
          %v387 = vld [vmem:[%s4 + $0xc] sm:$0xf]
          %v388 = vld [vmem:[%s4 + $0x10] sm:$0xf]
          %v389 = vld [vmem:[%s4 + $0x14] sm:$0xf]
          %v390 = vld [vmem:[%s4 + $0x18] sm:$0xf]
          %v391 = vld [vmem:[%s4 + $0x1c] sm:$0xf]
          %v392 = vld [vmem:[%s4 + $0x20] sm:$0xf]
          %v393 = vld [vmem:[%s4 + $0x24] sm:$0xf]
          %v394 = vld [vmem:[%s4 + $0x28] sm:$0xf]
          %v395 = vld [vmem:[%s4 + $0x2c] sm:$0xf]
          %v396 = vld [vmem:[%s4 + $0x30] sm:$0xf]
          %v397 = vld [vmem:[%s4 + $0x34] sm:$0xf]
          %v398 = vld [vmem:[%s4 + $0x38] sm:$0xf]
          %v399 = vld [vmem:[%s4 + $0x3c] sm:$0xf]
          %v400 = vld [vmem:[%s4 + $0x40] sm:$0xf]
          %v401 = vld [vmem:[%s4 + $0x44] sm:$0xf]
          %v402 = vld [vmem:[%s4 + $0x48] sm:$0xf]
          %v403 = vld [vmem:[%s4 + $0x4c] sm:$0xf]
          %v404 = vld [vmem:[%s4 + $0x50] sm:$0xf]
          %v405 = vld [vmem:[%s4 + $0x54] sm:$0xf]
          %v406 = vld [vmem:[%s4 + $0x58] sm:$0xf]
          %v407 = vld [vmem:[%s4 + $0x5c] sm:$0xf]
          %v408 = vld [vmem:[%s4 + $0x60] sm:$0xf]
          %v409 = vld [vmem:[%s4 + $0x64] sm:$0xf]
          %v410 = vld [vmem:[%s4 + $0x68] sm:$0xf]
          %v411 = vld [vmem:[%s4 + $0x6c] sm:$0xf]
          %v412 = vld [vmem:[%s4 + $0x70] sm:$0xf]
          %v413 = vld [vmem:[%s4 + $0x74] sm:$0xf]
          %v414 = vld [vmem:[%s4 + $0x78] sm:$0xf]
          %v415 = vld [vmem:[%s4 + $0x7c] sm:$0xf]
          %v416 = vld [vmem:[%s5] sm:$0xff]
          %v417 = vld [vmem:[%s5 + $0x8] sm:$0xff]
          %v418 = vld [vmem:[%s5 + $0x10] sm:$0xff]
          %v419 = vld [vmem:[%s5 + $0x18] sm:$0xff]
          %v420 = vld [vmem:[%s5 + $0x20] sm:$0xff]
          %v421 = vld [vmem:[%s5 + $0x28] sm:$0xff]
          %v422 = vld [vmem:[%s5 + $0x30] sm:$0xff]
          %v423 = vld [vmem:[%s5 + $0x38] sm:$0xff]
          %v424 = vld [vmem:[%s5 + $0x40] sm:$0xff]
          %v425 = vld [vmem:[%s5 + $0x48] sm:$0xff]
          %v426 = vld [vmem:[%s5 + $0x50] sm:$0xff]
          %v427 = vld [vmem:[%s5 + $0x58] sm:$0xff]
          %v428 = vld [vmem:[%s5 + $0x60] sm:$0xff]
          %v429 = vld [vmem:[%s5 + $0x68] sm:$0xff]
          %v430 = vld [vmem:[%s5 + $0x70] sm:$0xff]
          %v431 = vld [vmem:[%s5 + $0x78] sm:$0xff]
          %v432 = vld [vmem:[%s5 + $0x80] sm:$0xff]
          %v433 = vld [vmem:[%s5 + $0x88] sm:$0xff]
          %v434 = vld [vmem:[%s5 + $0x90] sm:$0xff]
          %v435 = vld [vmem:[%s5 + $0x98] sm:$0xff]
          %v436 = vld [vmem:[%s5 + $0xa0] sm:$0xff]
          %v437 = vld [vmem:[%s5 + $0xa8] sm:$0xff]
          %v438 = vld [vmem:[%s5 + $0xb0] sm:$0xff]
          %v439 = vld [vmem:[%s5 + $0xb8] sm:$0xff]
          %v440 = vld [vmem:[%s5 + $0xc0] sm:$0xff]
          %v441 = vld [vmem:[%s5 + $0xc8] sm:$0xff]
          %v442 = vld [vmem:[%s5 + $0xd0] sm:$0xff]
          %v443 = vld [vmem:[%s5 + $0xd8] sm:$0xff]
          %v444 = vld [vmem:[%s5 + $0xe0] sm:$0xff]
          %v445 = vld [vmem:[%s5 + $0xe8] sm:$0xff]
          %v446 = vld [vmem:[%s5 + $0xf0] sm:$0xff]
          %v447 = vld [vmem:[%s5 + $0xf8] sm:$0xff]
          %449 = vset.pattern.permute.xlu0 0
          %450 = vperm.xlu0 %449, %v416
          %v451 = vpop.permute.xlu0 %450
          %454 = vset.pattern.permute.xlu0 0
          %455 = vperm.xlu0 %454, %v417
          %v456 = vpop.permute.xlu0 %455
          %459 = vset.pattern.permute.xlu0 0
          %460 = vperm.xlu0 %459, %v418
          %v461 = vpop.permute.xlu0 %460
          %464 = vset.pattern.permute.xlu0 0
          %465 = vperm.xlu0 %464, %v419
          %v466 = vpop.permute.xlu0 %465
          %469 = vset.pattern.permute.xlu0 0
          %470 = vperm.xlu0 %469, %v420
          %v471 = vpop.permute.xlu0 %470
          %474 = vset.pattern.permute.xlu0 0
          %475 = vperm.xlu0 %474, %v421
          %v476 = vpop.permute.xlu0 %475
          %479 = vset.pattern.permute.xlu0 0
          %480 = vperm.xlu0 %479, %v422
          %v481 = vpop.permute.xlu0 %480
          %484 = vset.pattern.permute.xlu0 0
          %485 = vperm.xlu0 %484, %v423
          %v486 = vpop.permute.xlu0 %485
          %489 = vset.pattern.permute.xlu0 0
          %490 = vperm.xlu0 %489, %v424
          %v491 = vpop.permute.xlu0 %490
          %494 = vset.pattern.permute.xlu0 0
          %495 = vperm.xlu0 %494, %v425
          %v496 = vpop.permute.xlu0 %495
          %499 = vset.pattern.permute.xlu0 0
          %500 = vperm.xlu0 %499, %v426
          %v501 = vpop.permute.xlu0 %500
          %504 = vset.pattern.permute.xlu0 0
          %505 = vperm.xlu0 %504, %v427
          %v506 = vpop.permute.xlu0 %505
          %509 = vset.pattern.permute.xlu0 0
          %510 = vperm.xlu0 %509, %v428
          %v511 = vpop.permute.xlu0 %510
          %514 = vset.pattern.permute.xlu0 0
          %515 = vperm.xlu0 %514, %v429
          %v516 = vpop.permute.xlu0 %515
          %519 = vset.pattern.permute.xlu0 0
          %520 = vperm.xlu0 %519, %v430
          %v521 = vpop.permute.xlu0 %520
          %524 = vset.pattern.permute.xlu0 0
          %525 = vperm.xlu0 %524, %v431
          %v526 = vpop.permute.xlu0 %525
          %529 = vset.pattern.permute.xlu0 0
          %530 = vperm.xlu0 %529, %v432
          %v531 = vpop.permute.xlu0 %530
          %534 = vset.pattern.permute.xlu0 0
          %535 = vperm.xlu0 %534, %v433
          %v536 = vpop.permute.xlu0 %535
          %539 = vset.pattern.permute.xlu0 0
          %540 = vperm.xlu0 %539, %v434
          %v541 = vpop.permute.xlu0 %540
          %544 = vset.pattern.permute.xlu0 0
          %545 = vperm.xlu0 %544, %v435
          %v546 = vpop.permute.xlu0 %545
          %549 = vset.pattern.permute.xlu0 0
          %550 = vperm.xlu0 %549, %v436
          %v551 = vpop.permute.xlu0 %550
          %554 = vset.pattern.permute.xlu0 0
          %555 = vperm.xlu0 %554, %v437
          %v556 = vpop.permute.xlu0 %555
          %559 = vset.pattern.permute.xlu0 0
          %560 = vperm.xlu0 %559, %v438
          %v561 = vpop.permute.xlu0 %560
          %564 = vset.pattern.permute.xlu0 0
          %565 = vperm.xlu0 %564, %v439
          %v566 = vpop.permute.xlu0 %565
          %569 = vset.pattern.permute.xlu0 0
          %570 = vperm.xlu0 %569, %v440
          %v571 = vpop.permute.xlu0 %570
          %574 = vset.pattern.permute.xlu0 0
          %575 = vperm.xlu0 %574, %v441
          %v576 = vpop.permute.xlu0 %575
          %579 = vset.pattern.permute.xlu0 0
          %580 = vperm.xlu0 %579, %v442
          %v581 = vpop.permute.xlu0 %580
          %584 = vset.pattern.permute.xlu0 0
          %585 = vperm.xlu0 %584, %v443
          %v586 = vpop.permute.xlu0 %585
          %589 = vset.pattern.permute.xlu0 0
          %590 = vperm.xlu0 %589, %v444
          %v591 = vpop.permute.xlu0 %590
          %594 = vset.pattern.permute.xlu0 0
          %595 = vperm.xlu0 %594, %v445
          %v596 = vpop.permute.xlu0 %595
          %599 = vset.pattern.permute.xlu0 0
          %600 = vperm.xlu0 %599, %v446
          %v601 = vpop.permute.xlu0 %600
          %604 = vset.pattern.permute.xlu0 0
          %605 = vperm.xlu0 %604, %v447
          %v606 = vpop.permute.xlu0 %605
          %v640 = vunpack.c.l.b16 %v384
          %v641 = vunpack.c.l.b16 %v385
          %v642 = vunpack.c.l.b16 %v386
          %v643 = vunpack.c.l.b16 %v387
          %v644 = vunpack.c.l.b16 %v388
          %v645 = vunpack.c.l.b16 %v389
          %v646 = vunpack.c.l.b16 %v390
          %v647 = vunpack.c.l.b16 %v391
          %v648 = vunpack.c.l.b16 %v392
          %v649 = vunpack.c.l.b16 %v393
          %v650 = vunpack.c.l.b16 %v394
          %v651 = vunpack.c.l.b16 %v395
          %v652 = vunpack.c.l.b16 %v396
          %v653 = vunpack.c.l.b16 %v397
          %v654 = vunpack.c.l.b16 %v398
          %v655 = vunpack.c.l.b16 %v399
          %v656 = vunpack.c.l.b16 %v400
          %v657 = vunpack.c.l.b16 %v401
          %v658 = vunpack.c.l.b16 %v402
          %v659 = vunpack.c.l.b16 %v403
          %v660 = vunpack.c.l.b16 %v404
          %v661 = vunpack.c.l.b16 %v405
          %v662 = vunpack.c.l.b16 %v406
          %v663 = vunpack.c.l.b16 %v407
          %v664 = vunpack.c.l.b16 %v408
          %v665 = vunpack.c.l.b16 %v409
          %v666 = vunpack.c.l.b16 %v410
          %v667 = vunpack.c.l.b16 %v411
          %v668 = vunpack.c.l.b16 %v412
          %v669 = vunpack.c.l.b16 %v413
          %v670 = vunpack.c.l.b16 %v414
          %v671 = vunpack.c.l.b16 %v415
          %v672 = vpack.c.b16 %v641, %v640
          %v673 = vpack.c.b16 %v643, %v642
          %v674 = vpack.c.b16 %v645, %v644
          %v675 = vpack.c.b16 %v647, %v646
          %v676 = vpack.c.b16 %v649, %v648
          %v677 = vpack.c.b16 %v651, %v650
          %v678 = vpack.c.b16 %v653, %v652
          %v679 = vpack.c.b16 %v655, %v654
          %v680 = vpack.c.b16 %v657, %v656
          %v681 = vpack.c.b16 %v659, %v658
          %v682 = vpack.c.b16 %v661, %v660
          %v683 = vpack.c.b16 %v663, %v662
          %v684 = vpack.c.b16 %v665, %v664
          %v685 = vpack.c.b16 %v667, %v666
          %v686 = vpack.c.b16 %v669, %v668
          %v687 = vpack.c.b16 %v671, %v670
          %vm688 = vcmask 523264
          %v690 = vsel %vm688, %v672, 0
          %v693 = vsel %vm688, %v673, 0
          %v696 = vsel %vm688, %v674, 0
          %v699 = vsel %vm688, %v675, 0
          %v702 = vsel %vm688, %v676, 0
          %v705 = vsel %vm688, %v677, 0
          %v708 = vsel %vm688, %v678, 0
          %v711 = vsel %vm688, %v679, 0
          %v714 = vsel %vm688, %v680, 0
          %v717 = vsel %vm688, %v681, 0
          %v720 = vsel %vm688, %v682, 0
          %v723 = vsel %vm688, %v683, 0
          %v726 = vsel %vm688, %v684, 0
          %v729 = vsel %vm688, %v685, 0
          %v732 = vsel %vm688, %v686, 0
          %v735 = vsel %vm688, %v687, 0
          %737 = vmatprep.subr.bf16.mxu0 %v377
          %738 = vmatpush1.bf16.msra.mxu0 %v376
          %739 = vmatprep.subr.bf16.mxu0 %v379
          %740 = vmatpush1.bf16.msra.mxu0 %v378
          %741 = vmatprep.subr.bf16.mxu0 %v381
          %742 = vmatpush1.bf16.msra.mxu0 %v380
          %743 = vmatprep.subr.bf16.mxu0 %v383
          %744 = vmatpush1.bf16.msra.mxu0 %v382
          %745 = vmatprep.subr.bf16.mxu0 0
          %746 = vmatpush1.bf16.msra.mxu0 0
          %747 = vmatprep.subr.bf16.mxu0 0
          %748 = vmatpush1.bf16.msra.mxu0 0
          %749 = vmatprep.subr.bf16.mxu0 0
          %750 = vmatpush1.bf16.msra.mxu0 0
          %751 = vmatprep.subr.bf16.mxu0 0
          %752 = vmatpush1.bf16.msra.mxu0 0
          %753 = vmatprep.subr.bf16.mxu0 0
          %754 = vmatpush1.bf16.msra.mxu0 0
          %755 = vmatprep.subr.bf16.mxu0 0
          %756 = vmatpush1.bf16.msra.mxu0 0
          %757 = vmatprep.subr.bf16.mxu0 0
          %758 = vmatpush1.bf16.msra.mxu0 0
          %759 = vmatprep.subr.bf16.mxu0 0
          %760 = vmatpush1.bf16.msra.mxu0 0
          %761 = vmatprep.subr.bf16.mxu0 0
          %762 = vmatpush1.bf16.msra.mxu0 0
          %763 = vmatprep.subr.bf16.mxu0 0
          %764 = vmatpush1.bf16.msra.mxu0 0
          %765 = vmatprep.subr.bf16.mxu0 0
          %766 = vmatpush1.bf16.msra.mxu0 0
          %767 = vmatprep.subr.bf16.mxu0 0
          %768 = vmatpush1.bf16.msra.mxu0 0
          %769 = vmatprep.mubr.bf16.mxu0 0
          %770 = vmatmul.mubr.bf16.gmra.mrb[0].mxu0 %v690
          %v771 = vpop.f32.mrb[0].mxu0
          %v772 = vadd.f32 %v451, %v771
          %v773 = vpop.f32.mrb[0].mxu0
          %v774 = vadd.f32 %v451, %v773
          %v775 = vpop.f32.mrb[0].mxu0
          %v776 = vadd.f32 %v456, %v775
          %v777 = vpop.f32.mrb[0].mxu0
          %v778 = vadd.f32 %v456, %v777
          %779 = vmatprep.mubr.bf16.mxu0 0
          %780 = vmatmul.mubr.bf16.gmra.mrb[0].mxu0 %v693
          %v781 = vpop.f32.mrb[0].mxu0
          %v782 = vadd.f32 %v461, %v781
          %v783 = vpop.f32.mrb[0].mxu0
          %v784 = vadd.f32 %v461, %v783
          %v785 = vpop.f32.mrb[0].mxu0
          %v786 = vadd.f32 %v466, %v785
          %v787 = vpop.f32.mrb[0].mxu0
          %v788 = vadd.f32 %v466, %v787
          %789 = vmatprep.mubr.bf16.mxu0 0
          %790 = vmatmul.mubr.bf16.gmra.mrb[0].mxu0 %v696
          %v791 = vpop.f32.mrb[0].mxu0
          %v792 = vadd.f32 %v471, %v791
          %v793 = vpop.f32.mrb[0].mxu0
          %v794 = vadd.f32 %v471, %v793
          %v795 = vpop.f32.mrb[0].mxu0
          %v796 = vadd.f32 %v476, %v795
          %v797 = vpop.f32.mrb[0].mxu0
          %v798 = vadd.f32 %v476, %v797
          %799 = vmatprep.mubr.bf16.mxu0 0
          %800 = vmatmul.mubr.bf16.gmra.mrb[0].mxu0 %v699
          %v801 = vpop.f32.mrb[0].mxu0
          %v802 = vadd.f32 %v481, %v801
          %v803 = vpop.f32.mrb[0].mxu0
          %v804 = vadd.f32 %v481, %v803
          %v805 = vpop.f32.mrb[0].mxu0
          %v806 = vadd.f32 %v486, %v805
          %v807 = vpop.f32.mrb[0].mxu0
          %v808 = vadd.f32 %v486, %v807
          %809 = vmatprep.mubr.bf16.mxu0 0
          %810 = vmatmul.mubr.bf16.gmra.mrb[0].mxu0 %v702
          %v811 = vpop.f32.mrb[0].mxu0
          %v812 = vadd.f32 %v491, %v811
          %v813 = vpop.f32.mrb[0].mxu0
          %v814 = vadd.f32 %v491, %v813
          %v815 = vpop.f32.mrb[0].mxu0
          %v816 = vadd.f32 %v496, %v815
          %v817 = vpop.f32.mrb[0].mxu0
          %v818 = vadd.f32 %v496, %v817
          %819 = vmatprep.mubr.bf16.mxu0 0
          %820 = vmatmul.mubr.bf16.gmra.mrb[0].mxu0 %v705
          %v821 = vpop.f32.mrb[0].mxu0
          %v822 = vadd.f32 %v501, %v821
          %v823 = vpop.f32.mrb[0].mxu0
          %v824 = vadd.f32 %v501, %v823
          %v825 = vpop.f32.mrb[0].mxu0
          %v826 = vadd.f32 %v506, %v825
          %v827 = vpop.f32.mrb[0].mxu0
          %v828 = vadd.f32 %v506, %v827
          %829 = vmatprep.mubr.bf16.mxu0 0
          %830 = vmatmul.mubr.bf16.gmra.mrb[0].mxu0 %v708
          %v831 = vpop.f32.mrb[0].mxu0
          %v832 = vadd.f32 %v511, %v831
          %v833 = vpop.f32.mrb[0].mxu0
          %v834 = vadd.f32 %v511, %v833
          %v835 = vpop.f32.mrb[0].mxu0
          %v836 = vadd.f32 %v516, %v835
          %v837 = vpop.f32.mrb[0].mxu0
          %v838 = vadd.f32 %v516, %v837
          %839 = vmatprep.mubr.bf16.mxu0 0
          %840 = vmatmul.mubr.bf16.gmra.mrb[0].mxu0 %v711
          %v841 = vpop.f32.mrb[0].mxu0
          %v842 = vadd.f32 %v521, %v841
          %v843 = vpop.f32.mrb[0].mxu0
          %v844 = vadd.f32 %v521, %v843
          %v845 = vpop.f32.mrb[0].mxu0
          %v846 = vadd.f32 %v526, %v845
          %v847 = vpop.f32.mrb[0].mxu0
          %v848 = vadd.f32 %v526, %v847
          %849 = vmatprep.mubr.bf16.mxu0 0
          %850 = vmatmul.mubr.bf16.gmra.mrb[0].mxu0 %v714
          %v851 = vpop.f32.mrb[0].mxu0
          %v852 = vadd.f32 %v531, %v851
          %v853 = vpop.f32.mrb[0].mxu0
          %v854 = vadd.f32 %v531, %v853
          %v855 = vpop.f32.mrb[0].mxu0
          %v856 = vadd.f32 %v536, %v855
          %v857 = vpop.f32.mrb[0].mxu0
          %v858 = vadd.f32 %v536, %v857
          %859 = vmatprep.mubr.bf16.mxu0 0
          %860 = vmatmul.mubr.bf16.gmra.mrb[0].mxu0 %v717
          %v861 = vpop.f32.mrb[0].mxu0
          %v862 = vadd.f32 %v541, %v861
          %v863 = vpop.f32.mrb[0].mxu0
          %v864 = vadd.f32 %v541, %v863
          %v865 = vpop.f32.mrb[0].mxu0
          %v866 = vadd.f32 %v546, %v865
          %v867 = vpop.f32.mrb[0].mxu0
          %v868 = vadd.f32 %v546, %v867
          %869 = vmatprep.mubr.bf16.mxu0 0
          %870 = vmatmul.mubr.bf16.gmra.mrb[0].mxu0 %v720
          %v871 = vpop.f32.mrb[0].mxu0
          %v872 = vadd.f32 %v551, %v871
          %v873 = vpop.f32.mrb[0].mxu0
          %v874 = vadd.f32 %v551, %v873
          %v875 = vpop.f32.mrb[0].mxu0
          %v876 = vadd.f32 %v556, %v875
          %v877 = vpop.f32.mrb[0].mxu0
          %v878 = vadd.f32 %v556, %v877
          %879 = vmatprep.mubr.bf16.mxu0 0
          %880 = vmatmul.mubr.bf16.gmra.mrb[0].mxu0 %v723
          %v881 = vpop.f32.mrb[0].mxu0
          %v882 = vadd.f32 %v561, %v881
          %v883 = vpop.f32.mrb[0].mxu0
          %v884 = vadd.f32 %v561, %v883
          %v885 = vpop.f32.mrb[0].mxu0
          %v886 = vadd.f32 %v566, %v885
          %v887 = vpop.f32.mrb[0].mxu0
          %v888 = vadd.f32 %v566, %v887
          %889 = vmatprep.mubr.bf16.mxu0 0
          %890 = vmatmul.mubr.bf16.gmra.mrb[0].mxu0 %v726
          %v891 = vpop.f32.mrb[0].mxu0
          %v892 = vadd.f32 %v571, %v891
          %v893 = vpop.f32.mrb[0].mxu0
          %v894 = vadd.f32 %v571, %v893
          %v895 = vpop.f32.mrb[0].mxu0
          %v896 = vadd.f32 %v576, %v895
          %v897 = vpop.f32.mrb[0].mxu0
          %v898 = vadd.f32 %v576, %v897
          %899 = vmatprep.mubr.bf16.mxu0 0
          %900 = vmatmul.mubr.bf16.gmra.mrb[0].mxu0 %v729
          %v901 = vpop.f32.mrb[0].mxu0
          %v902 = vadd.f32 %v581, %v901
          %v903 = vpop.f32.mrb[0].mxu0
          %v904 = vadd.f32 %v581, %v903
          %v905 = vpop.f32.mrb[0].mxu0
          %v906 = vadd.f32 %v586, %v905
          %v907 = vpop.f32.mrb[0].mxu0
          %v908 = vadd.f32 %v586, %v907
          %909 = vmatprep.mubr.bf16.mxu0 0
          %910 = vmatmul.mubr.bf16.gmra.mrb[0].mxu0 %v732
          %v911 = vpop.f32.mrb[0].mxu0
          %v912 = vadd.f32 %v591, %v911
          %v913 = vpop.f32.mrb[0].mxu0
          %v914 = vadd.f32 %v591, %v913
          %v915 = vpop.f32.mrb[0].mxu0
          %v916 = vadd.f32 %v596, %v915
          %v917 = vpop.f32.mrb[0].mxu0
          %v918 = vadd.f32 %v596, %v917
          %919 = vmatprep.mubr.bf16.mxu0 0
          %920 = vmatmul.mubr.bf16.gmra.mrb[0].mxu0 %v735
          %v921 = vpop.f32.mrb[0].mxu0
          %v922 = vadd.f32 %v601, %v921
          %v923 = vpop.f32.mrb[0].mxu0
          %v924 = vadd.f32 %v601, %v923
          %v925 = vpop.f32.mrb[0].mxu0
          %v926 = vadd.f32 %v606, %v925
          %v927 = vpop.f32.mrb[0].mxu0
          %v928 = vadd.f32 %v606, %v927
          %929 = vdwg.mxu0
          %v930 = vpack.c.bf16 %v776, %v772
          %v931 = vpack.c.bf16 %v778, %v774
          %v932 = vpack.c.bf16 %v786, %v782
          %v933 = vpack.c.bf16 %v788, %v784
          %v934 = vpack.c.bf16 %v796, %v792
          %v935 = vpack.c.bf16 %v798, %v794
          %v936 = vpack.c.bf16 %v806, %v802
          %v937 = vpack.c.bf16 %v808, %v804
          %v938 = vpack.c.bf16 %v816, %v812
          %v939 = vpack.c.bf16 %v818, %v814
          %v940 = vpack.c.bf16 %v826, %v822
          %v941 = vpack.c.bf16 %v828, %v824
          %v942 = vpack.c.bf16 %v836, %v832
          %v943 = vpack.c.bf16 %v838, %v834
          %v944 = vpack.c.bf16 %v846, %v842
          %v945 = vpack.c.bf16 %v848, %v844
          %v946 = vpack.c.bf16 %v856, %v852
          %v947 = vpack.c.bf16 %v858, %v854
          %v948 = vpack.c.bf16 %v866, %v862
          %v949 = vpack.c.bf16 %v868, %v864
          %v950 = vpack.c.bf16 %v876, %v872
          %v951 = vpack.c.bf16 %v878, %v874
          %v952 = vpack.c.bf16 %v886, %v882
          %v953 = vpack.c.bf16 %v888, %v884
          %v954 = vpack.c.bf16 %v896, %v892
          %v955 = vpack.c.bf16 %v898, %v894
          %v956 = vpack.c.bf16 %v906, %v902
          %v957 = vpack.c.bf16 %v908, %v904
          %v958 = vpack.c.bf16 %v916, %v912
          %v959 = vpack.c.bf16 %v918, %v914
          %v960 = vpack.c.bf16 %v926, %v922
          %v961 = vpack.c.bf16 %v928, %v924
          %962 = vst [vmem:[#allocation2] sm:$0xff] %v930
          %963 = vst [vmem:[#allocation2 + $0x8] sm:$0xff] %v931
          %964 = vst [vmem:[#allocation2 + $0x10] sm:$0xff] %v932
          %965 = vst [vmem:[#allocation2 + $0x18] sm:$0xff] %v933
          %966 = vst [vmem:[#allocation2 + $0x20] sm:$0xff] %v934
          %967 = vst [vmem:[#allocation2 + $0x28] sm:$0xff] %v935
          %968 = vst [vmem:[#allocation2 + $0x30] sm:$0xff] %v936
          %969 = vst [vmem:[#allocation2 + $0x38] sm:$0xff] %v937
          %970 = vst [vmem:[#allocation2 + $0x40] sm:$0xff] %v938
          %971 = vst [vmem:[#allocation2 + $0x48] sm:$0xff] %v939
          %972 = vst [vmem:[#allocation2 + $0x50] sm:$0xff] %v940
          %973 = vst [vmem:[#allocation2 + $0x58] sm:$0xff] %v941
          %974 = vst [vmem:[#allocation2 + $0x60] sm:$0xff] %v942
          %975 = vst [vmem:[#allocation2 + $0x68] sm:$0xff] %v943
          %976 = vst [vmem:[#allocation2 + $0x70] sm:$0xff] %v944
          %977 = vst [vmem:[#allocation2 + $0x78] sm:$0xff] %v945
          %978 = vst [vmem:[#allocation2 + $0x80] sm:$0xff] %v946
          %979 = vst [vmem:[#allocation2 + $0x88] sm:$0xff] %v947
          %980 = vst [vmem:[#allocation2 + $0x90] sm:$0xff] %v948
          %981 = vst [vmem:[#allocation2 + $0x98] sm:$0xff] %v949
          %982 = vst [vmem:[#allocation2 + $0xa0] sm:$0xff] %v950
          %983 = vst [vmem:[#allocation2 + $0xa8] sm:$0xff] %v951
          %984 = vst [vmem:[#allocation2 + $0xb0] sm:$0xff] %v952
          %985 = vst [vmem:[#allocation2 + $0xb8] sm:$0xff] %v953
          %986 = vst [vmem:[#allocation2 + $0xc0] sm:$0xff] %v954
          %987 = vst [vmem:[#allocation2 + $0xc8] sm:$0xff] %v955
          %988 = vst [vmem:[#allocation2 + $0xd0] sm:$0xff] %v956
          %989 = vst [vmem:[#allocation2 + $0xd8] sm:$0xff] %v957
          %990 = vst [vmem:[#allocation2 + $0xe0] sm:$0xff] %v958
          %991 = vst [vmem:[#allocation2 + $0xe8] sm:$0xff] %v959
          %992 = vst [vmem:[#allocation2 + $0xf0] sm:$0xff] %v960
          %993 = vst [vmem:[#allocation2 + $0xf8] sm:$0xff] %v961
        $region56: #{tpu_custom_call.1} parent=51 // pred_fallthru
          _
        %v994 = vld [vmem:[%s347] sm:$0xff]
        %v995 = vld [vmem:[%s347 + $0x8] sm:$0xff]
        %v996 = vld [vmem:[%s347 + $0x10] sm:$0xff]
        %v997 = vld [vmem:[%s347 + $0x18] sm:$0xff]
        %v998 = vld [vmem:[%s347 + $0x20] sm:$0xff]
        %v999 = vld [vmem:[%s347 + $0x28] sm:$0xff]
        %v1000 = vld [vmem:[%s347 + $0x30] sm:$0xff]
        %v1001 = vld [vmem:[%s347 + $0x38] sm:$0xff]
        %v1002 = vld [vmem:[%s347 + $0x40] sm:$0xff]
        %v1003 = vld [vmem:[%s347 + $0x48] sm:$0xff]
        %v1004 = vld [vmem:[%s347 + $0x50] sm:$0xff]
        %v1005 = vld [vmem:[%s347 + $0x58] sm:$0xff]
        %v1006 = vld [vmem:[%s347 + $0x60] sm:$0xff]
        %v1007 = vld [vmem:[%s347 + $0x68] sm:$0xff]
        %v1008 = vld [vmem:[%s347 + $0x70] sm:$0xff]
        %v1009 = vld [vmem:[%s347 + $0x78] sm:$0xff]
        %v1010 = vpack.c.bf16 %v996, %v994
        %v1011 = vpack.c.bf16 %v997, %v995
        %v1012 = vpack.c.bf16 %v1000, %v998
        %v1013 = vpack.c.bf16 %v1001, %v999
        %v1014 = vpack.c.bf16 %v1004, %v1002
        %v1015 = vpack.c.bf16 %v1005, %v1003
        %v1016 = vpack.c.bf16 %v1008, %v1006
        %v1017 = vpack.c.bf16 %v1009, %v1007
        %v1018 = vld [vmem:[%s2] sm:$0xf]
        %v1019 = vld [vmem:[%s2 + $0x4] sm:$0xf]
        %v1020 = vld [vmem:[%s2 + $0x8] sm:$0xf]
        %v1021 = vld [vmem:[%s2 + $0xc] sm:$0xf]
        %v1022 = vld [vmem:[%s2 + $0x10] sm:$0xf]
        %v1023 = vld [vmem:[%s2 + $0x14] sm:$0xf]
        %v1024 = vld [vmem:[%s2 + $0x18] sm:$0xf]
        %v1025 = vld [vmem:[%s2 + $0x1c] sm:$0xf]
        %v1026 = vld [vmem:[%s2 + $0x20] sm:$0xf]
        %v1027 = vld [vmem:[%s2 + $0x24] sm:$0xf]
        %v1028 = vld [vmem:[%s2 + $0x28] sm:$0xf]
        %v1029 = vld [vmem:[%s2 + $0x2c] sm:$0xf]
        %v1030 = vld [vmem:[%s2 + $0x30] sm:$0xf]
        %v1031 = vld [vmem:[%s2 + $0x34] sm:$0xf]
        %v1032 = vld [vmem:[%s2 + $0x38] sm:$0xf]
        %v1033 = vld [vmem:[%s2 + $0x3c] sm:$0xf]
        %v1034 = vld [vmem:[%s3] sm:$0xff]
        %v1035 = vld [vmem:[%s3 + $0x8] sm:$0xff]
        %v1036 = vld [vmem:[%s3 + $0x10] sm:$0xff]
        %v1037 = vld [vmem:[%s3 + $0x18] sm:$0xff]
        %v1038 = vld [vmem:[%s3 + $0x20] sm:$0xff]
        %v1039 = vld [vmem:[%s3 + $0x28] sm:$0xff]
        %v1040 = vld [vmem:[%s3 + $0x30] sm:$0xff]
        %v1041 = vld [vmem:[%s3 + $0x38] sm:$0xff]
        %v1042 = vld [vmem:[%s3 + $0x40] sm:$0xff]
        %v1043 = vld [vmem:[%s3 + $0x48] sm:$0xff]
        %v1044 = vld [vmem:[%s3 + $0x50] sm:$0xff]
        %v1045 = vld [vmem:[%s3 + $0x58] sm:$0xff]
        %v1046 = vld [vmem:[%s3 + $0x60] sm:$0xff]
        %v1047 = vld [vmem:[%s3 + $0x68] sm:$0xff]
        %v1048 = vld [vmem:[%s3 + $0x70] sm:$0xff]
        %v1049 = vld [vmem:[%s3 + $0x78] sm:$0xff]
        %1051 = vset.pattern.permute.xlu0 0
        %1052 = vperm.xlu0 %1051, %v1034
        %v1053 = vpop.permute.xlu0 %1052
        %1056 = vset.pattern.permute.xlu0 0
        %1057 = vperm.xlu0 %1056, %v1035
        %v1058 = vpop.permute.xlu0 %1057
        %1061 = vset.pattern.permute.xlu0 0
        %1062 = vperm.xlu0 %1061, %v1036
        %v1063 = vpop.permute.xlu0 %1062
        %1066 = vset.pattern.permute.xlu0 0
        %1067 = vperm.xlu0 %1066, %v1037
        %v1068 = vpop.permute.xlu0 %1067
        %1071 = vset.pattern.permute.xlu0 0
        %1072 = vperm.xlu0 %1071, %v1038
        %v1073 = vpop.permute.xlu0 %1072
        %1076 = vset.pattern.permute.xlu0 0
        %1077 = vperm.xlu0 %1076, %v1039
        %v1078 = vpop.permute.xlu0 %1077
        %1081 = vset.pattern.permute.xlu0 0
        %1082 = vperm.xlu0 %1081, %v1040
        %v1083 = vpop.permute.xlu0 %1082
        %1086 = vset.pattern.permute.xlu0 0
        %1087 = vperm.xlu0 %1086, %v1041
        %v1088 = vpop.permute.xlu0 %1087
        %1091 = vset.pattern.permute.xlu0 0
        %1092 = vperm.xlu0 %1091, %v1042
        %v1093 = vpop.permute.xlu0 %1092
        %1096 = vset.pattern.permute.xlu0 0
        %1097 = vperm.xlu0 %1096, %v1043
        %v1098 = vpop.permute.xlu0 %1097
        %1101 = vset.pattern.permute.xlu0 0
        %1102 = vperm.xlu0 %1101, %v1044
        %v1103 = vpop.permute.xlu0 %1102
        %1106 = vset.pattern.permute.xlu0 0
        %1107 = vperm.xlu0 %1106, %v1045
        %v1108 = vpop.permute.xlu0 %1107
        %1111 = vset.pattern.permute.xlu0 0
        %1112 = vperm.xlu0 %1111, %v1046
        %v1113 = vpop.permute.xlu0 %1112
        %1116 = vset.pattern.permute.xlu0 0
        %1117 = vperm.xlu0 %1116, %v1047
        %v1118 = vpop.permute.xlu0 %1117
        %1121 = vset.pattern.permute.xlu0 0
        %1122 = vperm.xlu0 %1121, %v1048
        %v1123 = vpop.permute.xlu0 %1122
        %1126 = vset.pattern.permute.xlu0 0
        %1127 = vperm.xlu0 %1126, %v1049
        %v1128 = vpop.permute.xlu0 %1127
        %v1146 = vunpack.c.l.b16 %v1018
        %v1147 = vunpack.c.l.b16 %v1019
        %v1148 = vunpack.c.l.b16 %v1020
        %v1149 = vunpack.c.l.b16 %v1021
        %v1150 = vunpack.c.l.b16 %v1022
        %v1151 = vunpack.c.l.b16 %v1023
        %v1152 = vunpack.c.l.b16 %v1024
        %v1153 = vunpack.c.l.b16 %v1025
        %v1154 = vunpack.c.l.b16 %v1026
        %v1155 = vunpack.c.l.b16 %v1027
        %v1156 = vunpack.c.l.b16 %v1028
        %v1157 = vunpack.c.l.b16 %v1029
        %v1158 = vunpack.c.l.b16 %v1030
        %v1159 = vunpack.c.l.b16 %v1031
        %v1160 = vunpack.c.l.b16 %v1032
        %v1161 = vunpack.c.l.b16 %v1033
        %v1162 = vpack.c.b16 %v1147, %v1146
        %v1163 = vpack.c.b16 %v1149, %v1148
        %v1164 = vpack.c.b16 %v1151, %v1150
        %v1165 = vpack.c.b16 %v1153, %v1152
        %v1166 = vpack.c.b16 %v1155, %v1154
        %v1167 = vpack.c.b16 %v1157, %v1156
        %v1168 = vpack.c.b16 %v1159, %v1158
        %v1169 = vpack.c.b16 %v1161, %v1160
        %vm1170 = vcmask 523264
        %v1172 = vsel %vm1170, %v1162, 0
        %v1175 = vsel %vm1170, %v1163, 0
        %v1178 = vsel %vm1170, %v1164, 0
        %v1181 = vsel %vm1170, %v1165, 0
        %v1184 = vsel %vm1170, %v1166, 0
        %v1187 = vsel %vm1170, %v1167, 0
        %v1190 = vsel %vm1170, %v1168, 0
        %v1193 = vsel %vm1170, %v1169, 0
        %1195 = vmatprep.subr.bf16.mxu0 %v1011
        %1196 = vmatpush1.bf16.msra.mxu0 %v1010
        %1197 = vmatprep.subr.bf16.mxu0 %v1013
        %1198 = vmatpush1.bf16.msra.mxu0 %v1012
        %1199 = vmatprep.subr.bf16.mxu0 %v1015
        %1200 = vmatpush1.bf16.msra.mxu0 %v1014
        %1201 = vmatprep.subr.bf16.mxu0 %v1017
        %1202 = vmatpush1.bf16.msra.mxu0 %v1016
        %1203 = vmatprep.subr.bf16.mxu0 0
        %1204 = vmatpush1.bf16.msra.mxu0 0
        %1205 = vmatprep.subr.bf16.mxu0 0
        %1206 = vmatpush1.bf16.msra.mxu0 0
        %1207 = vmatprep.subr.bf16.mxu0 0
        %1208 = vmatpush1.bf16.msra.mxu0 0
        %1209 = vmatprep.subr.bf16.mxu0 0
        %1210 = vmatpush1.bf16.msra.mxu0 0
        %1211 = vmatprep.subr.bf16.mxu0 0
        %1212 = vmatpush1.bf16.msra.mxu0 0
        %1213 = vmatprep.subr.bf16.mxu0 0
        %1214 = vmatpush1.bf16.msra.mxu0 0
        %1215 = vmatprep.subr.bf16.mxu0 0
        %1216 = vmatpush1.bf16.msra.mxu0 0
        %1217 = vmatprep.subr.bf16.mxu0 0
        %1218 = vmatpush1.bf16.msra.mxu0 0
        %1219 = vmatprep.subr.bf16.mxu0 0
        %1220 = vmatpush1.bf16.msra.mxu0 0
        %1221 = vmatprep.subr.bf16.mxu0 0
        %1222 = vmatpush1.bf16.msra.mxu0 0
        %1223 = vmatprep.subr.bf16.mxu0 0
        %1224 = vmatpush1.bf16.msra.mxu0 0
        %1225 = vmatprep.subr.bf16.mxu0 0
        %1226 = vmatpush1.bf16.msra.mxu0 0
        %1227 = vmatprep.mubr.bf16.mxu0 0
        %1228 = vmatmul.mubr.bf16.gmra.mrb[0].mxu0 %v1172
        %v1229 = vpop.f32.mrb[0].mxu0
        %v1230 = vadd.f32 %v1053, %v1229
        %v1231 = vpop.f32.mrb[0].mxu0
        %v1232 = vadd.f32 %v1053, %v1231
        %v1233 = vpop.f32.mrb[0].mxu0
        %v1234 = vadd.f32 %v1058, %v1233
        %v1235 = vpop.f32.mrb[0].mxu0
        %v1236 = vadd.f32 %v1058, %v1235
        %1237 = vmatprep.mubr.bf16.mxu0 0
        %1238 = vmatmul.mubr.bf16.gmra.mrb[0].mxu0 %v1175
        %v1239 = vpop.f32.mrb[0].mxu0
        %v1240 = vadd.f32 %v1063, %v1239
        %v1241 = vpop.f32.mrb[0].mxu0
        %v1242 = vadd.f32 %v1063, %v1241
        %v1243 = vpop.f32.mrb[0].mxu0
        %v1244 = vadd.f32 %v1068, %v1243
        %v1245 = vpop.f32.mrb[0].mxu0
        %v1246 = vadd.f32 %v1068, %v1245
        %1247 = vmatprep.mubr.bf16.mxu0 0
        %1248 = vmatmul.mubr.bf16.gmra.mrb[0].mxu0 %v1178
        %v1249 = vpop.f32.mrb[0].mxu0
        %v1250 = vadd.f32 %v1073, %v1249
        %v1251 = vpop.f32.mrb[0].mxu0
        %v1252 = vadd.f32 %v1073, %v1251
        %v1253 = vpop.f32.mrb[0].mxu0
        %v1254 = vadd.f32 %v1078, %v1253
        %v1255 = vpop.f32.mrb[0].mxu0
        %v1256 = vadd.f32 %v1078, %v1255
        %1257 = vmatprep.mubr.bf16.mxu0 0
        %1258 = vmatmul.mubr.bf16.gmra.mrb[0].mxu0 %v1181
        %v1259 = vpop.f32.mrb[0].mxu0
        %v1260 = vadd.f32 %v1083, %v1259
        %v1261 = vpop.f32.mrb[0].mxu0
        %v1262 = vadd.f32 %v1083, %v1261
        %v1263 = vpop.f32.mrb[0].mxu0
        %v1264 = vadd.f32 %v1088, %v1263
        %v1265 = vpop.f32.mrb[0].mxu0
        %v1266 = vadd.f32 %v1088, %v1265
        %1267 = vmatprep.mubr.bf16.mxu0 0
        %1268 = vmatmul.mubr.bf16.gmra.mrb[0].mxu0 %v1184
        %v1269 = vpop.f32.mrb[0].mxu0
        %v1270 = vadd.f32 %v1093, %v1269
        %v1271 = vpop.f32.mrb[0].mxu0
        %v1272 = vadd.f32 %v1093, %v1271
        %v1273 = vpop.f32.mrb[0].mxu0
        %v1274 = vadd.f32 %v1098, %v1273
        %v1275 = vpop.f32.mrb[0].mxu0
        %v1276 = vadd.f32 %v1098, %v1275
        %1277 = vmatprep.mubr.bf16.mxu0 0
        %1278 = vmatmul.mubr.bf16.gmra.mrb[0].mxu0 %v1187
        %v1279 = vpop.f32.mrb[0].mxu0
        %v1280 = vadd.f32 %v1103, %v1279
        %v1281 = vpop.f32.mrb[0].mxu0
        %v1282 = vadd.f32 %v1103, %v1281
        %v1283 = vpop.f32.mrb[0].mxu0
        %v1284 = vadd.f32 %v1108, %v1283
        %v1285 = vpop.f32.mrb[0].mxu0
        %v1286 = vadd.f32 %v1108, %v1285
        %1287 = vmatprep.mubr.bf16.mxu0 0
        %1288 = vmatmul.mubr.bf16.gmra.mrb[0].mxu0 %v1190
        %v1289 = vpop.f32.mrb[0].mxu0
        %v1290 = vadd.f32 %v1113, %v1289
        %v1291 = vpop.f32.mrb[0].mxu0
        %v1292 = vadd.f32 %v1113, %v1291
        %v1293 = vpop.f32.mrb[0].mxu0
        %v1294 = vadd.f32 %v1118, %v1293
        %v1295 = vpop.f32.mrb[0].mxu0
        %v1296 = vadd.f32 %v1118, %v1295
        %1297 = vmatprep.mubr.bf16.mxu0 0
        %1298 = vmatmul.mubr.bf16.gmra.mrb[0].mxu0 %v1193
        %v1299 = vpop.f32.mrb[0].mxu0
        %v1300 = vadd.f32 %v1123, %v1299
        %v1301 = vpop.f32.mrb[0].mxu0
        %v1302 = vadd.f32 %v1123, %v1301
        %v1303 = vpop.f32.mrb[0].mxu0
        %v1304 = vadd.f32 %v1128, %v1303
        %v1305 = vpop.f32.mrb[0].mxu0
        %v1306 = vadd.f32 %v1128, %v1305
        %1307 = vdwg.mxu0
        %1308 = vxpose.xlu0.b32.start [1/16] %v1230, 128
        %1309 = vxpose.xlu0.b32.cont [2/16] %v1234, 128
        %1310 = vxpose.xlu0.b32.cont [3/16] %v1240, 128
        %1311 = vxpose.xlu0.b32.cont [4/16] %v1244, 128
        %1312 = vxpose.xlu0.b32.cont [5/16] 0.0, 128
        %1313 = vxpose.xlu0.b32.cont [6/16] 0.0, 128
        %1314 = vxpose.xlu0.b32.cont [7/16] 0.0, 128
        %1315 = vxpose.xlu0.b32.cont [8/16] 0.0, 128
        %1316 = vxpose.xlu0.b32.cont [9/16] 0.0, 128
        %1317 = vxpose.xlu0.b32.cont [10/16] 0.0, 128
        %1318 = vxpose.xlu0.b32.cont [11/16] 0.0, 128
        %1319 = vxpose.xlu0.b32.cont [12/16] 0.0, 128
        %1320 = vxpose.xlu0.b32.cont [13/16] 0.0, 128
        %1321 = vxpose.xlu0.b32.cont [14/16] 0.0, 128
        %1322 = vxpose.xlu0.b32.cont [15/16] 0.0, 128
        %1323 = vxpose.xlu0.b32.end [16/16] 0.0, 128
        %v1324 = vpop.trf.xlu0
        %v1325 = vpop.trf.xlu0
        %v1326 = vpop.trf.xlu0
        %v1327 = vpop.trf.xlu0
        %v1328 = vpop.trf.xlu0
        %v1329 = vpop.trf.xlu0
        %v1330 = vpop.trf.xlu0
        %v1331 = vpop.trf.xlu0
        %v1332 = vpop.trf.xlu0
        %v1333 = vpop.trf.xlu0
        %v1334 = vpop.trf.xlu0
        %v1335 = vpop.trf.xlu0
        %v1336 = vpop.trf.xlu0
        %v1337 = vpop.trf.xlu0
        %v1338 = vpop.trf.xlu0
        %v1339 = vpop.trf.xlu0
        %1340 = vxpose.xlu0.b32.start [1/16] %v1232, 128
        %1341 = vxpose.xlu0.b32.cont [2/16] %v1236, 128
        %1342 = vxpose.xlu0.b32.cont [3/16] %v1242, 128
        %1343 = vxpose.xlu0.b32.cont [4/16] %v1246, 128
        %1344 = vxpose.xlu0.b32.cont [5/16] 0.0, 128
        %1345 = vxpose.xlu0.b32.cont [6/16] 0.0, 128
        %1346 = vxpose.xlu0.b32.cont [7/16] 0.0, 128
        %1347 = vxpose.xlu0.b32.cont [8/16] 0.0, 128
        %1348 = vxpose.xlu0.b32.cont [9/16] 0.0, 128
        %1349 = vxpose.xlu0.b32.cont [10/16] 0.0, 128
        %1350 = vxpose.xlu0.b32.cont [11/16] 0.0, 128
        %1351 = vxpose.xlu0.b32.cont [12/16] 0.0, 128
        %1352 = vxpose.xlu0.b32.cont [13/16] 0.0, 128
        %1353 = vxpose.xlu0.b32.cont [14/16] 0.0, 128
        %1354 = vxpose.xlu0.b32.cont [15/16] 0.0, 128
        %1355 = vxpose.xlu0.b32.end [16/16] 0.0, 128
        %v1356 = vpop.trf.xlu0
        %v1357 = vpop.trf.xlu0
        %v1358 = vpop.trf.xlu0
        %v1359 = vpop.trf.xlu0
        %v1360 = vpop.trf.xlu0
        %v1361 = vpop.trf.xlu0
        %v1362 = vpop.trf.xlu0
        %v1363 = vpop.trf.xlu0
        %v1364 = vpop.trf.xlu0
        %v1365 = vpop.trf.xlu0
        %v1366 = vpop.trf.xlu0
        %v1367 = vpop.trf.xlu0
        %v1368 = vpop.trf.xlu0
        %v1369 = vpop.trf.xlu0
        %v1370 = vpop.trf.xlu0
        %v1371 = vpop.trf.xlu0
        %v1372 = vpack.c.bf16 %v1325, %v1324
        %v1373 = vpack.c.bf16 %v1327, %v1326
        %v1374 = vpack.c.bf16 %v1329, %v1328
        %v1375 = vpack.c.bf16 %v1331, %v1330
        %v1376 = vpack.c.bf16 %v1333, %v1332
        %v1377 = vpack.c.bf16 %v1335, %v1334
        %v1378 = vpack.c.bf16 %v1337, %v1336
        %v1379 = vpack.c.bf16 %v1339, %v1338
        %v1380 = vpack.c.bf16 %v1357, %v1356
        %v1381 = vpack.c.bf16 %v1359, %v1358
        %v1382 = vpack.c.bf16 %v1361, %v1360
        %v1383 = vpack.c.bf16 %v1363, %v1362
        %v1384 = vpack.c.bf16 %v1365, %v1364
        %v1385 = vpack.c.bf16 %v1367, %v1366
        %v1386 = vpack.c.bf16 %v1369, %v1368
        %v1387 = vpack.c.bf16 %v1371, %v1370
        %v1388 = vld [vmem:[#allocation2] sm:$0xff]
        %v1389 = vld [vmem:[#allocation2 + $0x8] sm:$0xff]
        %v1390 = vld [vmem:[#allocation2 + $0x10] sm:$0xff]
        %v1391 = vld [vmem:[#allocation2 + $0x18] sm:$0xff]
        %v1392 = vld [vmem:[#allocation2 + $0x80] sm:$0xff]
        %v1393 = vld [vmem:[#allocation2 + $0x88] sm:$0xff]
        %v1394 = vld [vmem:[#allocation2 + $0x90] sm:$0xff]
        %v1395 = vld [vmem:[#allocation2 + $0x98] sm:$0xff]
        %vm1396 = vcmask 261120
        %v1398 = vsel %vm1396, %v1372, 0
        %v1401 = vsel %vm1396, %v1373, 0
        %v1404 = vsel %vm1396, %v1374, 0
        %v1407 = vsel %vm1396, %v1375, 0
        %v1410 = vsel %vm1396, %v1376, 0
        %v1413 = vsel %vm1396, %v1377, 0
        %v1416 = vsel %vm1396, %v1378, 0
        %v1419 = vsel %vm1396, %v1379, 0
        %v1422 = vsel %vm1396, %v1380, 0
        %v1425 = vsel %vm1396, %v1381, 0
        %v1428 = vsel %vm1396, %v1382, 0
        %v1431 = vsel %vm1396, %v1383, 0
        %v1434 = vsel %vm1396, %v1384, 0
        %v1437 = vsel %vm1396, %v1385, 0
        %v1440 = vsel %vm1396, %v1386, 0
        %v1443 = vsel %vm1396, %v1387, 0
        %1445 = vmatprep.subr.bf16.mxu0 %v1389
        %1446 = vmatpush1.bf16.msra.mxu0 %v1388
        %1447 = vmatprep.subr.bf16.mxu0 %v1391
        %1448 = vmatpush1.bf16.msra.mxu0 %v1390
        %1449 = vmatprep.subr.bf16.mxu0 0
        %1450 = vmatpush1.bf16.msra.mxu0 0
        %1451 = vmatprep.subr.bf16.mxu0 0
        %1452 = vmatpush1.bf16.msra.mxu0 0
        %1453 = vmatprep.subr.bf16.mxu0 0
        %1454 = vmatpush1.bf16.msra.mxu0 0
        %1455 = vmatprep.subr.bf16.mxu0 0
        %1456 = vmatpush1.bf16.msra.mxu0 0
        %1457 = vmatprep.subr.bf16.mxu0 0
        %1458 = vmatpush1.bf16.msra.mxu0 0
        %1459 = vmatprep.subr.bf16.mxu0 0
        %1460 = vmatpush1.bf16.msra.mxu0 0
        %1461 = vmatprep.subr.bf16.mxu0 0
        %1462 = vmatpush1.bf16.msra.mxu0 0
        %1463 = vmatprep.subr.bf16.mxu0 0
        %1464 = vmatpush1.bf16.msra.mxu0 0
        %1465 = vmatprep.subr.bf16.mxu0 0
        %1466 = vmatpush1.bf16.msra.mxu0 0
        %1467 = vmatprep.subr.bf16.mxu0 0
        %1468 = vmatpush1.bf16.msra.mxu0 0
        %1469 = vmatprep.subr.bf16.mxu0 0
        %1470 = vmatpush1.bf16.msra.mxu0 0
        %1471 = vmatprep.subr.bf16.mxu0 0
        %1472 = vmatpush1.bf16.msra.mxu0 0
        %1473 = vmatprep.subr.bf16.mxu0 0
        %1474 = vmatpush1.bf16.msra.mxu0 0
        %1475 = vmatprep.subr.bf16.mxu0 0
        %1476 = vmatpush1.bf16.msra.mxu0 0
        %1477 = vmatprep.mubr.bf16.mxu0 0
        %1478 = vmatmul.mubr.bf16.gmra.mrb[0].mxu0 %v1398
        %v1479 = vpop.f32.mrb[0].mxu0
        %v1480 = vadd.f32 0.0, %v1479
        %v1481 = vpop.f32.mrb[0].mxu0
        %v1482 = vadd.f32 0.0, %v1481
        %v1483 = vpop.f32.mrb[0].mxu0
        %v1484 = vadd.f32 0.0, %v1483
        %v1485 = vpop.f32.mrb[0].mxu0
        %v1486 = vadd.f32 0.0, %v1485
        %1487 = vmatprep.mubr.bf16.mxu0 0
        %1488 = vmatmul.mubr.bf16.gmra.mrb[0].mxu0 %v1401
        %v1489 = vpop.f32.mrb[0].mxu0
        %v1490 = vadd.f32 0.0, %v1489
        %v1491 = vpop.f32.mrb[0].mxu0
        %v1492 = vadd.f32 0.0, %v1491
        %v1493 = vpop.f32.mrb[0].mxu0
        %v1494 = vadd.f32 0.0, %v1493
        %v1495 = vpop.f32.mrb[0].mxu0
        %v1496 = vadd.f32 0.0, %v1495
        %1497 = vmatprep.mubr.bf16.mxu0 0
        %1498 = vmatmul.mubr.bf16.gmra.mrb[0].mxu0 %v1404
        %v1499 = vpop.f32.mrb[0].mxu0
        %v1500 = vadd.f32 0.0, %v1499
        %v1501 = vpop.f32.mrb[0].mxu0
        %v1502 = vadd.f32 0.0, %v1501
        %v1503 = vpop.f32.mrb[0].mxu0
        %v1504 = vadd.f32 0.0, %v1503
        %v1505 = vpop.f32.mrb[0].mxu0
        %v1506 = vadd.f32 0.0, %v1505
        %1507 = vmatprep.mubr.bf16.mxu0 0
        %1508 = vmatmul.mubr.bf16.gmra.mrb[0].mxu0 %v1407
        %v1509 = vpop.f32.mrb[0].mxu0
        %v1510 = vadd.f32 0.0, %v1509
        %v1511 = vpop.f32.mrb[0].mxu0
        %v1512 = vadd.f32 0.0, %v1511
        %v1513 = vpop.f32.mrb[0].mxu0
        %v1514 = vadd.f32 0.0, %v1513
        %v1515 = vpop.f32.mrb[0].mxu0
        %v1516 = vadd.f32 0.0, %v1515
        %1517 = vmatprep.mubr.bf16.mxu0 0
        %1518 = vmatmul.mubr.bf16.gmra.mrb[0].mxu0 %v1410
        %v1519 = vpop.f32.mrb[0].mxu0
        %v1520 = vadd.f32 0.0, %v1519
        %v1521 = vpop.f32.mrb[0].mxu0
        %v1522 = vadd.f32 0.0, %v1521
        %v1523 = vpop.f32.mrb[0].mxu0
        %v1524 = vadd.f32 0.0, %v1523
        %v1525 = vpop.f32.mrb[0].mxu0
        %v1526 = vadd.f32 0.0, %v1525
        %1527 = vmatprep.mubr.bf16.mxu0 0
        %1528 = vmatmul.mubr.bf16.gmra.mrb[0].mxu0 %v1413
        %v1529 = vpop.f32.mrb[0].mxu0
        %v1530 = vadd.f32 0.0, %v1529
        %v1531 = vpop.f32.mrb[0].mxu0
        %v1532 = vadd.f32 0.0, %v1531
        %v1533 = vpop.f32.mrb[0].mxu0
        %v1534 = vadd.f32 0.0, %v1533
        %v1535 = vpop.f32.mrb[0].mxu0
        %v1536 = vadd.f32 0.0, %v1535
        %1537 = vmatprep.mubr.bf16.mxu0 0
        %1538 = vmatmul.mubr.bf16.gmra.mrb[0].mxu0 %v1416
        %v1539 = vpop.f32.mrb[0].mxu0
        %v1540 = vadd.f32 0.0, %v1539
        %v1541 = vpop.f32.mrb[0].mxu0
        %v1542 = vadd.f32 0.0, %v1541
        %v1543 = vpop.f32.mrb[0].mxu0
        %v1544 = vadd.f32 0.0, %v1543
        %v1545 = vpop.f32.mrb[0].mxu0
        %v1546 = vadd.f32 0.0, %v1545
        %1547 = vmatprep.mubr.bf16.mxu0 0
        %1548 = vmatmul.mubr.bf16.gmra.mrb[0].mxu0 %v1419
        %v1549 = vpop.f32.mrb[0].mxu0
        %v1550 = vadd.f32 0.0, %v1549
        %v1551 = vpop.f32.mrb[0].mxu0
        %v1552 = vadd.f32 0.0, %v1551
        %v1553 = vpop.f32.mrb[0].mxu0
        %v1554 = vadd.f32 0.0, %v1553
        %v1555 = vpop.f32.mrb[0].mxu0
        %v1556 = vadd.f32 0.0, %v1555
        %1557 = vmatprep.mubr.bf16.mxu0 0
        %1558 = vmatmul.mubr.bf16.gmra.mrb[0].mxu0 %v1422
        %v1559 = vpop.f32.mrb[0].mxu0
        %v1560 = vadd.f32 0.0, %v1559
        %v1561 = vpop.f32.mrb[0].mxu0
        %v1562 = vadd.f32 0.0, %v1561
        %v1563 = vpop.f32.mrb[0].mxu0
        %v1564 = vadd.f32 0.0, %v1563
        %v1565 = vpop.f32.mrb[0].mxu0
        %v1566 = vadd.f32 0.0, %v1565
        %1567 = vmatprep.mubr.bf16.mxu0 0
        %1568 = vmatmul.mubr.bf16.gmra.mrb[0].mxu0 %v1425
        %v1569 = vpop.f32.mrb[0].mxu0
        %v1570 = vadd.f32 0.0, %v1569
        %v1571 = vpop.f32.mrb[0].mxu0
        %v1572 = vadd.f32 0.0, %v1571
        %v1573 = vpop.f32.mrb[0].mxu0
        %v1574 = vadd.f32 0.0, %v1573
        %v1575 = vpop.f32.mrb[0].mxu0
        %v1576 = vadd.f32 0.0, %v1575
        %1577 = vmatprep.mubr.bf16.mxu0 0
        %1578 = vmatmul.mubr.bf16.gmra.mrb[0].mxu0 %v1428
        %v1579 = vpop.f32.mrb[0].mxu0
        %v1580 = vadd.f32 0.0, %v1579
        %v1581 = vpop.f32.mrb[0].mxu0
        %v1582 = vadd.f32 0.0, %v1581
        %v1583 = vpop.f32.mrb[0].mxu0
        %v1584 = vadd.f32 0.0, %v1583
        %v1585 = vpop.f32.mrb[0].mxu0
        %v1586 = vadd.f32 0.0, %v1585
        %1587 = vmatprep.mubr.bf16.mxu0 0
        %1588 = vmatmul.mubr.bf16.gmra.mrb[0].mxu0 %v1431
        %v1589 = vpop.f32.mrb[0].mxu0
        %v1590 = vadd.f32 0.0, %v1589
        %v1591 = vpop.f32.mrb[0].mxu0
        %v1592 = vadd.f32 0.0, %v1591
        %v1593 = vpop.f32.mrb[0].mxu0
        %v1594 = vadd.f32 0.0, %v1593
        %v1595 = vpop.f32.mrb[0].mxu0
        %v1596 = vadd.f32 0.0, %v1595
        %1597 = vmatprep.mubr.bf16.mxu0 0
        %1598 = vmatmul.mubr.bf16.gmra.mrb[0].mxu0 %v1434
        %v1599 = vpop.f32.mrb[0].mxu0
        %v1600 = vadd.f32 0.0, %v1599
        %v1601 = vpop.f32.mrb[0].mxu0
        %v1602 = vadd.f32 0.0, %v1601
        %v1603 = vpop.f32.mrb[0].mxu0
        %v1604 = vadd.f32 0.0, %v1603
        %v1605 = vpop.f32.mrb[0].mxu0
        %v1606 = vadd.f32 0.0, %v1605
        %1607 = vmatprep.mubr.bf16.mxu0 0
        %1608 = vmatmul.mubr.bf16.gmra.mrb[0].mxu0 %v1437
        %v1609 = vpop.f32.mrb[0].mxu0
        %v1610 = vadd.f32 0.0, %v1609
        %v1611 = vpop.f32.mrb[0].mxu0
        %v1612 = vadd.f32 0.0, %v1611
        %v1613 = vpop.f32.mrb[0].mxu0
        %v1614 = vadd.f32 0.0, %v1613
        %v1615 = vpop.f32.mrb[0].mxu0
        %v1616 = vadd.f32 0.0, %v1615
        %1617 = vmatprep.mubr.bf16.mxu0 0
        %1618 = vmatmul.mubr.bf16.gmra.mrb[0].mxu0 %v1440
        %v1619 = vpop.f32.mrb[0].mxu0
        %v1620 = vadd.f32 0.0, %v1619
        %v1621 = vpop.f32.mrb[0].mxu0
        %v1622 = vadd.f32 0.0, %v1621
        %v1623 = vpop.f32.mrb[0].mxu0
        %v1624 = vadd.f32 0.0, %v1623
        %v1625 = vpop.f32.mrb[0].mxu0
        %v1626 = vadd.f32 0.0, %v1625
        %1627 = vmatprep.mubr.bf16.mxu0 0
        %1628 = vmatmul.mubr.bf16.gmra.mrb[0].mxu0 %v1443
        %v1629 = vpop.f32.mrb[0].mxu0
        %v1630 = vadd.f32 0.0, %v1629
        %v1631 = vpop.f32.mrb[0].mxu0
        %v1632 = vadd.f32 0.0, %v1631
        %v1633 = vpop.f32.mrb[0].mxu0
        %v1634 = vadd.f32 0.0, %v1633
        %v1635 = vpop.f32.mrb[0].mxu0
        %v1636 = vadd.f32 0.0, %v1635
        %1637 = vdwg.mxu0
        %v1638 = vmax.f32 %v1480, %v1482
        %1639 = vmax.xlane.f32.xlu0 %v1638
        %v1640 = vpop.xlane.xlu0 %1639
        %v1641 = vmax.f32 %v1484, %v1486
        %1642 = vmax.xlane.f32.xlu0 %v1641
        %v1643 = vpop.xlane.xlu0 %1642
        %v1644 = vmax.f32 %v1490, %v1492
        %1645 = vmax.xlane.f32.xlu0 %v1644
        %v1646 = vpop.xlane.xlu0 %1645
        %v1647 = vmax.f32 %v1494, %v1496
        %1648 = vmax.xlane.f32.xlu0 %v1647
        %v1649 = vpop.xlane.xlu0 %1648
        %v1650 = vmax.f32 %v1500, %v1502
        %1651 = vmax.xlane.f32.xlu0 %v1650
        %v1652 = vpop.xlane.xlu0 %1651
        %v1653 = vmax.f32 %v1504, %v1506
        %1654 = vmax.xlane.f32.xlu0 %v1653
        %v1655 = vpop.xlane.xlu0 %1654
        %v1656 = vmax.f32 %v1510, %v1512
        %1657 = vmax.xlane.f32.xlu0 %v1656
        %v1658 = vpop.xlane.xlu0 %1657
        %v1659 = vmax.f32 %v1514, %v1516
        %1660 = vmax.xlane.f32.xlu0 %v1659
        %v1661 = vpop.xlane.xlu0 %1660
        %v1662 = vmax.f32 %v1520, %v1522
        %1663 = vmax.xlane.f32.xlu0 %v1662
        %v1664 = vpop.xlane.xlu0 %1663
        %v1665 = vmax.f32 %v1524, %v1526
        %1666 = vmax.xlane.f32.xlu0 %v1665
        %v1667 = vpop.xlane.xlu0 %1666
        %v1668 = vmax.f32 %v1530, %v1532
        %1669 = vmax.xlane.f32.xlu0 %v1668
        %v1670 = vpop.xlane.xlu0 %1669
        %v1671 = vmax.f32 %v1534, %v1536
        %1672 = vmax.xlane.f32.xlu0 %v1671
        %v1673 = vpop.xlane.xlu0 %1672
        %v1674 = vmax.f32 %v1540, %v1542
        %1675 = vmax.xlane.f32.xlu0 %v1674
        %v1676 = vpop.xlane.xlu0 %1675
        %v1677 = vmax.f32 %v1544, %v1546
        %1678 = vmax.xlane.f32.xlu0 %v1677
        %v1679 = vpop.xlane.xlu0 %1678
        %v1680 = vmax.f32 %v1550, %v1552
        %1681 = vmax.xlane.f32.xlu0 %v1680
        %v1682 = vpop.xlane.xlu0 %1681
        %v1683 = vmax.f32 %v1554, %v1556
        %1684 = vmax.xlane.f32.xlu0 %v1683
        %v1685 = vpop.xlane.xlu0 %1684
        %v1686 = vmax.f32 %v1560, %v1562
        %1687 = vmax.xlane.f32.xlu0 %v1686
        %v1688 = vpop.xlane.xlu0 %1687
        %v1689 = vmax.f32 %v1564, %v1566
        %1690 = vmax.xlane.f32.xlu0 %v1689
        %v1691 = vpop.xlane.xlu0 %1690
        %v1692 = vmax.f32 %v1570, %v1572
        %1693 = vmax.xlane.f32.xlu0 %v1692
        %v1694 = vpop.xlane.xlu0 %1693
        %v1695 = vmax.f32 %v1574, %v1576
        %1696 = vmax.xlane.f32.xlu0 %v1695
        %v1697 = vpop.xlane.xlu0 %1696
        %v1698 = vmax.f32 %v1580, %v1582
        %1699 = vmax.xlane.f32.xlu0 %v1698
        %v1700 = vpop.xlane.xlu0 %1699
        %v1701 = vmax.f32 %v1584, %v1586
        %1702 = vmax.xlane.f32.xlu0 %v1701
        %v1703 = vpop.xlane.xlu0 %1702
        %v1704 = vmax.f32 %v1590, %v1592
        %1705 = vmax.xlane.f32.xlu0 %v1704
        %v1706 = vpop.xlane.xlu0 %1705
        %v1707 = vmax.f32 %v1594, %v1596
        %1708 = vmax.xlane.f32.xlu0 %v1707
        %v1709 = vpop.xlane.xlu0 %1708
        %v1710 = vmax.f32 %v1600, %v1602
        %1711 = vmax.xlane.f32.xlu0 %v1710
        %v1712 = vpop.xlane.xlu0 %1711
        %v1713 = vmax.f32 %v1604, %v1606
        %1714 = vmax.xlane.f32.xlu0 %v1713
        %v1715 = vpop.xlane.xlu0 %1714
        %v1716 = vmax.f32 %v1610, %v1612
        %1717 = vmax.xlane.f32.xlu0 %v1716
        %v1718 = vpop.xlane.xlu0 %1717
        %v1719 = vmax.f32 %v1614, %v1616
        %1720 = vmax.xlane.f32.xlu0 %v1719
        %v1721 = vpop.xlane.xlu0 %1720
        %v1722 = vmax.f32 %v1620, %v1622
        %1723 = vmax.xlane.f32.xlu0 %v1722
        %v1724 = vpop.xlane.xlu0 %1723
        %v1725 = vmax.f32 %v1624, %v1626
        %1726 = vmax.xlane.f32.xlu0 %v1725
        %v1727 = vpop.xlane.xlu0 %1726
        %v1728 = vmax.f32 %v1630, %v1632
        %1729 = vmax.xlane.f32.xlu0 %v1728
        %v1730 = vpop.xlane.xlu0 %1729
        %v1731 = vmax.f32 %v1634, %v1636
        %1732 = vmax.xlane.f32.xlu0 %v1731
        %v1733 = vpop.xlane.xlu0 %1732
        %v1734 = vsub.f32 %v1480, %v1640
        %v1735 = vsub.f32 %v1482, %v1640
        %v1736 = vsub.f32 %v1484, %v1643
        %v1737 = vsub.f32 %v1486, %v1643
        %v1738 = vsub.f32 %v1490, %v1646
        %v1739 = vsub.f32 %v1492, %v1646
        %v1740 = vsub.f32 %v1494, %v1649
        %v1741 = vsub.f32 %v1496, %v1649
        %v1742 = vsub.f32 %v1500, %v1652
        %v1743 = vsub.f32 %v1502, %v1652
        %v1744 = vsub.f32 %v1504, %v1655
        %v1745 = vsub.f32 %v1506, %v1655
        %v1746 = vsub.f32 %v1510, %v1658
        %v1747 = vsub.f32 %v1512, %v1658
        %v1748 = vsub.f32 %v1514, %v1661
        %v1749 = vsub.f32 %v1516, %v1661
        %v1750 = vsub.f32 %v1520, %v1664
        %v1751 = vsub.f32 %v1522, %v1664
        %v1752 = vsub.f32 %v1524, %v1667
        %v1753 = vsub.f32 %v1526, %v1667
        %v1754 = vsub.f32 %v1530, %v1670
        %v1755 = vsub.f32 %v1532, %v1670
        %v1756 = vsub.f32 %v1534, %v1673
        %v1757 = vsub.f32 %v1536, %v1673
        %v1758 = vsub.f32 %v1540, %v1676
        %v1759 = vsub.f32 %v1542, %v1676
        %v1760 = vsub.f32 %v1544, %v1679
        %v1761 = vsub.f32 %v1546, %v1679
        %v1762 = vsub.f32 %v1550, %v1682
        %v1763 = vsub.f32 %v1552, %v1682
        %v1764 = vsub.f32 %v1554, %v1685
        %v1765 = vsub.f32 %v1556, %v1685
        %v1766 = vsub.f32 %v1560, %v1688
        %v1767 = vsub.f32 %v1562, %v1688
        %v1768 = vsub.f32 %v1564, %v1691
        %v1769 = vsub.f32 %v1566, %v1691
        %v1770 = vsub.f32 %v1570, %v1694
        %v1771 = vsub.f32 %v1572, %v1694
        %v1772 = vsub.f32 %v1574, %v1697
        %v1773 = vsub.f32 %v1576, %v1697
        %v1774 = vsub.f32 %v1580, %v1700
        %v1775 = vsub.f32 %v1582, %v1700
        %v1776 = vsub.f32 %v1584, %v1703
        %v1777 = vsub.f32 %v1586, %v1703
        %v1778 = vsub.f32 %v1590, %v1706
        %v1779 = vsub.f32 %v1592, %v1706
        %v1780 = vsub.f32 %v1594, %v1709
        %v1781 = vsub.f32 %v1596, %v1709
        %v1782 = vsub.f32 %v1600, %v1712
        %v1783 = vsub.f32 %v1602, %v1712
        %v1784 = vsub.f32 %v1604, %v1715
        %v1785 = vsub.f32 %v1606, %v1715
        %v1786 = vsub.f32 %v1610, %v1718
        %v1787 = vsub.f32 %v1612, %v1718
        %v1788 = vsub.f32 %v1614, %v1721
        %v1789 = vsub.f32 %v1616, %v1721
        %v1790 = vsub.f32 %v1620, %v1724
        %v1791 = vsub.f32 %v1622, %v1724
        %v1792 = vsub.f32 %v1624, %v1727
        %v1793 = vsub.f32 %v1626, %v1727
        %v1794 = vsub.f32 %v1630, %v1730
        %v1795 = vsub.f32 %v1632, %v1730
        %v1796 = vsub.f32 %v1634, %v1733
        %v1797 = vsub.f32 %v1636, %v1733
        %v1798 = vmul.f32 %v1734, 1.442695
        %v1799 = vpow.pop %v1798
        %v1800 = vmul.f32 %v1735, 1.442695
        %v1801 = vpow.pop %v1800
        %v1802 = vmul.f32 %v1736, 1.442695
        %v1803 = vpow.pop %v1802
        %v1804 = vmul.f32 %v1737, 1.442695
        %v1805 = vpow.pop %v1804
        %v1806 = vmul.f32 %v1738, 1.442695
        %v1807 = vpow.pop %v1806
        %v1808 = vmul.f32 %v1739, 1.442695
        %v1809 = vpow.pop %v1808
        %v1810 = vmul.f32 %v1740, 1.442695
        %v1811 = vpow.pop %v1810
        %v1812 = vmul.f32 %v1741, 1.442695
        %v1813 = vpow.pop %v1812
        %v1814 = vmul.f32 %v1742, 1.442695
        %v1815 = vpow.pop %v1814
        %v1816 = vmul.f32 %v1743, 1.442695
        %v1817 = vpow.pop %v1816
        %v1818 = vmul.f32 %v1744, 1.442695
        %v1819 = vpow.pop %v1818
        %v1820 = vmul.f32 %v1745, 1.442695
        %v1821 = vpow.pop %v1820
        %v1822 = vmul.f32 %v1746, 1.442695
        %v1823 = vpow.pop %v1822
        %v1824 = vmul.f32 %v1747, 1.442695
        %v1825 = vpow.pop %v1824
        %v1826 = vmul.f32 %v1748, 1.442695
        %v1827 = vpow.pop %v1826
        %v1828 = vmul.f32 %v1749, 1.442695
        %v1829 = vpow.pop %v1828
        %v1830 = vmul.f32 %v1750, 1.442695
        %v1831 = vpow.pop %v1830
        %v1832 = vmul.f32 %v1751, 1.442695
        %v1833 = vpow.pop %v1832
        %v1834 = vmul.f32 %v1752, 1.442695
        %v1835 = vpow.pop %v1834
        %v1836 = vmul.f32 %v1753, 1.442695
        %v1837 = vpow.pop %v1836
        %v1838 = vmul.f32 %v1754, 1.442695
        %v1839 = vpow.pop %v1838
        %v1840 = vmul.f32 %v1755, 1.442695
        %v1841 = vpow.pop %v1840
        %v1842 = vmul.f32 %v1756, 1.442695
        %v1843 = vpow.pop %v1842
        %v1844 = vmul.f32 %v1757, 1.442695
        %v1845 = vpow.pop %v1844
        %v1846 = vmul.f32 %v1758, 1.442695
        %v1847 = vpow.pop %v1846
        %v1848 = vmul.f32 %v1759, 1.442695
        %v1849 = vpow.pop %v1848
        %v1850 = vmul.f32 %v1760, 1.442695
        %v1851 = vpow.pop %v1850
        %v1852 = vmul.f32 %v1761, 1.442695
        %v1853 = vpow.pop %v1852
        %v1854 = vmul.f32 %v1762, 1.442695
        %v1855 = vpow.pop %v1854
        %v1856 = vmul.f32 %v1763, 1.442695
        %v1857 = vpow.pop %v1856
        %v1858 = vmul.f32 %v1764, 1.442695
        %v1859 = vpow.pop %v1858
        %v1860 = vmul.f32 %v1765, 1.442695
        %v1861 = vpow.pop %v1860
        %v1862 = vmul.f32 %v1766, 1.442695
        %v1863 = vpow.pop %v1862
        %v1864 = vmul.f32 %v1767, 1.442695
        %v1865 = vpow.pop %v1864
        %v1866 = vmul.f32 %v1768, 1.442695
        %v1867 = vpow.pop %v1866
        %v1868 = vmul.f32 %v1769, 1.442695
        %v1869 = vpow.pop %v1868
        %v1870 = vmul.f32 %v1770, 1.442695
        %v1871 = vpow.pop %v1870
        %v1872 = vmul.f32 %v1771, 1.442695
        %v1873 = vpow.pop %v1872
        %v1874 = vmul.f32 %v1772, 1.442695
        %v1875 = vpow.pop %v1874
        %v1876 = vmul.f32 %v1773, 1.442695
        %v1877 = vpow.pop %v1876
        %v1878 = vmul.f32 %v1774, 1.442695
        %v1879 = vpow.pop %v1878
        %v1880 = vmul.f32 %v1775, 1.442695
        %v1881 = vpow.pop %v1880
        %v1882 = vmul.f32 %v1776, 1.442695
        %v1883 = vpow.pop %v1882
        %v1884 = vmul.f32 %v1777, 1.442695
        %v1885 = vpow.pop %v1884
        %v1886 = vmul.f32 %v1778, 1.442695
        %v1887 = vpow.pop %v1886
        %v1888 = vmul.f32 %v1779, 1.442695
        %v1889 = vpow.pop %v1888
        %v1890 = vmul.f32 %v1780, 1.442695
        %v1891 = vpow.pop %v1890
        %v1892 = vmul.f32 %v1781, 1.442695
        %v1893 = vpow.pop %v1892
        %v1894 = vmul.f32 %v1782, 1.442695
        %v1895 = vpow.pop %v1894
        %v1896 = vmul.f32 %v1783, 1.442695
        %v1897 = vpow.pop %v1896
        %v1898 = vmul.f32 %v1784, 1.442695
        %v1899 = vpow.pop %v1898
        %v1900 = vmul.f32 %v1785, 1.442695
        %v1901 = vpow.pop %v1900
        %v1902 = vmul.f32 %v1786, 1.442695
        %v1903 = vpow.pop %v1902
        %v1904 = vmul.f32 %v1787, 1.442695
        %v1905 = vpow.pop %v1904
        %v1906 = vmul.f32 %v1788, 1.442695
        %v1907 = vpow.pop %v1906
        %v1908 = vmul.f32 %v1789, 1.442695
        %v1909 = vpow.pop %v1908
        %v1910 = vmul.f32 %v1790, 1.442695
        %v1911 = vpow.pop %v1910
        %v1912 = vmul.f32 %v1791, 1.442695
        %v1913 = vpow.pop %v1912
        %v1914 = vmul.f32 %v1792, 1.442695
        %v1915 = vpow.pop %v1914
        %v1916 = vmul.f32 %v1793, 1.442695
        %v1917 = vpow.pop %v1916
        %v1918 = vmul.f32 %v1794, 1.442695
        %v1919 = vpow.pop %v1918
        %v1920 = vmul.f32 %v1795, 1.442695
        %v1921 = vpow.pop %v1920
        %v1922 = vmul.f32 %v1796, 1.442695
        %v1923 = vpow.pop %v1922
        %v1924 = vmul.f32 %v1797, 1.442695
        %v1925 = vpow.pop %v1924
        %v1926 = vadd.f32 %v1799, %v1801
        %1927 = vadd.xlane.f32.xlu0 %v1926
        %v1928 = vpop.xlane.xlu0 %1927
        %v1929 = vadd.f32 %v1803, %v1805
        %1930 = vadd.xlane.f32.xlu0 %v1929
        %v1931 = vpop.xlane.xlu0 %1930
        %v1932 = vadd.f32 %v1807, %v1809
        %1933 = vadd.xlane.f32.xlu0 %v1932
        %v1934 = vpop.xlane.xlu0 %1933
        %v1935 = vadd.f32 %v1811, %v1813
        %1936 = vadd.xlane.f32.xlu0 %v1935
        %v1937 = vpop.xlane.xlu0 %1936
        %v1938 = vadd.f32 %v1815, %v1817
        %1939 = vadd.xlane.f32.xlu0 %v1938
        %v1940 = vpop.xlane.xlu0 %1939
        %v1941 = vadd.f32 %v1819, %v1821
        %1942 = vadd.xlane.f32.xlu0 %v1941
        %v1943 = vpop.xlane.xlu0 %1942
        %v1944 = vadd.f32 %v1823, %v1825
        %1945 = vadd.xlane.f32.xlu0 %v1944
        %v1946 = vpop.xlane.xlu0 %1945
        %v1947 = vadd.f32 %v1827, %v1829
        %1948 = vadd.xlane.f32.xlu0 %v1947
        %v1949 = vpop.xlane.xlu0 %1948
        %v1950 = vadd.f32 %v1831, %v1833
        %1951 = vadd.xlane.f32.xlu0 %v1950
        %v1952 = vpop.xlane.xlu0 %1951
        %v1953 = vadd.f32 %v1835, %v1837
        %1954 = vadd.xlane.f32.xlu0 %v1953
        %v1955 = vpop.xlane.xlu0 %1954
        %v1956 = vadd.f32 %v1839, %v1841
        %1957 = vadd.xlane.f32.xlu0 %v1956
        %v1958 = vpop.xlane.xlu0 %1957
        %v1959 = vadd.f32 %v1843, %v1845
        %1960 = vadd.xlane.f32.xlu0 %v1959
        %v1961 = vpop.xlane.xlu0 %1960
        %v1962 = vadd.f32 %v1847, %v1849
        %1963 = vadd.xlane.f32.xlu0 %v1962
        %v1964 = vpop.xlane.xlu0 %1963
        %v1965 = vadd.f32 %v1851, %v1853
        %1966 = vadd.xlane.f32.xlu0 %v1965
        %v1967 = vpop.xlane.xlu0 %1966
        %v1968 = vadd.f32 %v1855, %v1857
        %1969 = vadd.xlane.f32.xlu0 %v1968
        %v1970 = vpop.xlane.xlu0 %1969
        %v1971 = vadd.f32 %v1859, %v1861
        %1972 = vadd.xlane.f32.xlu0 %v1971
        %v1973 = vpop.xlane.xlu0 %1972
        %v1974 = vadd.f32 %v1863, %v1865
        %1975 = vadd.xlane.f32.xlu0 %v1974
        %v1976 = vpop.xlane.xlu0 %1975
        %v1977 = vadd.f32 %v1867, %v1869
        %1978 = vadd.xlane.f32.xlu0 %v1977
        %v1979 = vpop.xlane.xlu0 %1978
        %v1980 = vadd.f32 %v1871, %v1873
        %1981 = vadd.xlane.f32.xlu0 %v1980
        %v1982 = vpop.xlane.xlu0 %1981
        %v1983 = vadd.f32 %v1875, %v1877
        %1984 = vadd.xlane.f32.xlu0 %v1983
        %v1985 = vpop.xlane.xlu0 %1984
        %v1986 = vadd.f32 %v1879, %v1881
        %1987 = vadd.xlane.f32.xlu0 %v1986
        %v1988 = vpop.xlane.xlu0 %1987
        %v1989 = vadd.f32 %v1883, %v1885
        %1990 = vadd.xlane.f32.xlu0 %v1989
        %v1991 = vpop.xlane.xlu0 %1990
        %v1992 = vadd.f32 %v1887, %v1889
        %1993 = vadd.xlane.f32.xlu0 %v1992
        %v1994 = vpop.xlane.xlu0 %1993
        %v1995 = vadd.f32 %v1891, %v1893
        %1996 = vadd.xlane.f32.xlu0 %v1995
        %v1997 = vpop.xlane.xlu0 %1996
        %v1998 = vadd.f32 %v1895, %v1897
        %1999 = vadd.xlane.f32.xlu0 %v1998
        %v2000 = vpop.xlane.xlu0 %1999
        %v2001 = vadd.f32 %v1899, %v1901
        %2002 = vadd.xlane.f32.xlu0 %v2001
        %v2003 = vpop.xlane.xlu0 %2002
        %v2004 = vadd.f32 %v1903, %v1905
        %2005 = vadd.xlane.f32.xlu0 %v2004
        %v2006 = vpop.xlane.xlu0 %2005
        %v2007 = vadd.f32 %v1907, %v1909
        %2008 = vadd.xlane.f32.xlu0 %v2007
        %v2009 = vpop.xlane.xlu0 %2008
        %v2010 = vadd.f32 %v1911, %v1913
        %2011 = vadd.xlane.f32.xlu0 %v2010
        %v2012 = vpop.xlane.xlu0 %2011
        %v2013 = vadd.f32 %v1915, %v1917
        %2014 = vadd.xlane.f32.xlu0 %v2013
        %v2015 = vpop.xlane.xlu0 %2014
        %v2016 = vadd.f32 %v1919, %v1921
        %2017 = vadd.xlane.f32.xlu0 %v2016
        %v2018 = vpop.xlane.xlu0 %2017
        %v2019 = vadd.f32 %v1923, %v1925
        %2020 = vadd.xlane.f32.xlu0 %v2019
        %v2021 = vpop.xlane.xlu0 %2020
        %v2022 = vrcp.pop %v1928
        %v2023 = vrcp.pop %v1931
        %v2024 = vrcp.pop %v1934
        %v2025 = vrcp.pop %v1937
        %v2026 = vrcp.pop %v1940
        %v2027 = vrcp.pop %v1943
        %v2028 = vrcp.pop %v1946
        %v2029 = vrcp.pop %v1949
        %v2030 = vrcp.pop %v1952
        %v2031 = vrcp.pop %v1955
        %v2032 = vrcp.pop %v1958
        %v2033 = vrcp.pop %v1961
        %v2034 = vrcp.pop %v1964
        %v2035 = vrcp.pop %v1967
        %v2036 = vrcp.pop %v1970
        %v2037 = vrcp.pop %v1973
        %v2038 = vrcp.pop %v1976
        %v2039 = vrcp.pop %v1979
        %v2040 = vrcp.pop %v1982
        %v2041 = vrcp.pop %v1985
        %v2042 = vrcp.pop %v1988
        %v2043 = vrcp.pop %v1991
        %v2044 = vrcp.pop %v1994
        %v2045 = vrcp.pop %v1997
        %v2046 = vrcp.pop %v2000
        %v2047 = vrcp.pop %v2003
        %v2048 = vrcp.pop %v2006
        %v2049 = vrcp.pop %v2009
        %v2050 = vrcp.pop %v2012
        %v2051 = vrcp.pop %v2015
        %v2052 = vrcp.pop %v2018
        %v2053 = vrcp.pop %v2021
        %v2054 = vmul.f32 %v1799, %v2022
        %v2055 = vmul.f32 %v1801, %v2022
        %v2056 = vmul.f32 %v1803, %v2023
        %v2057 = vmul.f32 %v1805, %v2023
        %v2058 = vmul.f32 %v1807, %v2024
        %v2059 = vmul.f32 %v1809, %v2024
        %v2060 = vmul.f32 %v1811, %v2025
        %v2061 = vmul.f32 %v1813, %v2025
        %v2062 = vmul.f32 %v1815, %v2026
        %v2063 = vmul.f32 %v1817, %v2026
        %v2064 = vmul.f32 %v1819, %v2027
        %v2065 = vmul.f32 %v1821, %v2027
        %v2066 = vmul.f32 %v1823, %v2028
        %v2067 = vmul.f32 %v1825, %v2028
        %v2068 = vmul.f32 %v1827, %v2029
        %v2069 = vmul.f32 %v1829, %v2029
        %v2070 = vmul.f32 %v1831, %v2030
        %v2071 = vmul.f32 %v1833, %v2030
        %v2072 = vmul.f32 %v1835, %v2031
        %v2073 = vmul.f32 %v1837, %v2031
        %v2074 = vmul.f32 %v1839, %v2032
        %v2075 = vmul.f32 %v1841, %v2032
        %v2076 = vmul.f32 %v1843, %v2033
        %v2077 = vmul.f32 %v1845, %v2033
        %v2078 = vmul.f32 %v1847, %v2034
        %v2079 = vmul.f32 %v1849, %v2034
        %v2080 = vmul.f32 %v1851, %v2035
        %v2081 = vmul.f32 %v1853, %v2035
        %v2082 = vmul.f32 %v1855, %v2036
        %v2083 = vmul.f32 %v1857, %v2036
        %v2084 = vmul.f32 %v1859, %v2037
        %v2085 = vmul.f32 %v1861, %v2037
        %v2086 = vmul.f32 %v1863, %v2038
        %v2087 = vmul.f32 %v1865, %v2038
        %v2088 = vmul.f32 %v1867, %v2039
        %v2089 = vmul.f32 %v1869, %v2039
        %v2090 = vmul.f32 %v1871, %v2040
        %v2091 = vmul.f32 %v1873, %v2040
        %v2092 = vmul.f32 %v1875, %v2041
        %v2093 = vmul.f32 %v1877, %v2041
        %v2094 = vmul.f32 %v1879, %v2042
        %v2095 = vmul.f32 %v1881, %v2042
        %v2096 = vmul.f32 %v1883, %v2043
        %v2097 = vmul.f32 %v1885, %v2043
        %v2098 = vmul.f32 %v1887, %v2044
        %v2099 = vmul.f32 %v1889, %v2044
        %v2100 = vmul.f32 %v1891, %v2045
        %v2101 = vmul.f32 %v1893, %v2045
        %v2102 = vmul.f32 %v1895, %v2046
        %v2103 = vmul.f32 %v1897, %v2046
        %v2104 = vmul.f32 %v1899, %v2047
        %v2105 = vmul.f32 %v1901, %v2047
        %v2106 = vmul.f32 %v1903, %v2048
        %v2107 = vmul.f32 %v1905, %v2048
        %v2108 = vmul.f32 %v1907, %v2049
        %v2109 = vmul.f32 %v1909, %v2049
        %v2110 = vmul.f32 %v1911, %v2050
        %v2111 = vmul.f32 %v1913, %v2050
        %v2112 = vmul.f32 %v1915, %v2051
        %v2113 = vmul.f32 %v1917, %v2051
        %v2114 = vmul.f32 %v1919, %v2052
        %v2115 = vmul.f32 %v1921, %v2052
        %v2116 = vmul.f32 %v1923, %v2053
        %v2117 = vmul.f32 %v1925, %v2053
        %v2118 = vpack.c.bf16 %v2056, %v2054
        %v2119 = vpack.c.bf16 %v2057, %v2055
        %v2120 = vpack.c.bf16 %v2060, %v2058
        %v2121 = vpack.c.bf16 %v2061, %v2059
        %v2122 = vpack.c.bf16 %v2064, %v2062
        %v2123 = vpack.c.bf16 %v2065, %v2063
        %v2124 = vpack.c.bf16 %v2068, %v2066
        %v2125 = vpack.c.bf16 %v2069, %v2067
        %v2126 = vpack.c.bf16 %v2072, %v2070
        %v2127 = vpack.c.bf16 %v2073, %v2071
        %v2128 = vpack.c.bf16 %v2076, %v2074
        %v2129 = vpack.c.bf16 %v2077, %v2075
        %v2130 = vpack.c.bf16 %v2080, %v2078
        %v2131 = vpack.c.bf16 %v2081, %v2079
        %v2132 = vpack.c.bf16 %v2084, %v2082
        %v2133 = vpack.c.bf16 %v2085, %v2083
        %v2134 = vpack.c.bf16 %v2088, %v2086
        %v2135 = vpack.c.bf16 %v2089, %v2087
        %v2136 = vpack.c.bf16 %v2092, %v2090
        %v2137 = vpack.c.bf16 %v2093, %v2091
        %v2138 = vpack.c.bf16 %v2096, %v2094
        %v2139 = vpack.c.bf16 %v2097, %v2095
        %v2140 = vpack.c.bf16 %v2100, %v2098
        %v2141 = vpack.c.bf16 %v2101, %v2099
        %v2142 = vpack.c.bf16 %v2104, %v2102
        %v2143 = vpack.c.bf16 %v2105, %v2103
        %v2144 = vpack.c.bf16 %v2108, %v2106
        %v2145 = vpack.c.bf16 %v2109, %v2107
        %v2146 = vpack.c.bf16 %v2112, %v2110
        %v2147 = vpack.c.bf16 %v2113, %v2111
        %v2148 = vpack.c.bf16 %v2116, %v2114
        %v2149 = vpack.c.bf16 %v2117, %v2115
        %2150 = vmatprep.subr.bf16.mxu0 %v2119
        %2151 = vmatpush1.bf16.xpose.msra.mxu0 %v2118
        %2152 = vmatprep.subr.bf16.mxu0 %v2121
        %2153 = vmatpush1.bf16.xpose.msra.mxu0 %v2120
        %2154 = vmatprep.subr.bf16.mxu0 %v2123
        %2155 = vmatpush1.bf16.xpose.msra.mxu0 %v2122
        %2156 = vmatprep.subr.bf16.mxu0 %v2125
        %2157 = vmatpush1.bf16.xpose.msra.mxu0 %v2124
        %2158 = vmatprep.subr.bf16.mxu0 %v2127
        %2159 = vmatpush1.bf16.xpose.msra.mxu0 %v2126
        %2160 = vmatprep.subr.bf16.mxu0 %v2129
        %2161 = vmatpush1.bf16.xpose.msra.mxu0 %v2128
        %2162 = vmatprep.subr.bf16.mxu0 %v2131
        %2163 = vmatpush1.bf16.xpose.msra.mxu0 %v2130
        %2164 = vmatprep.subr.bf16.mxu0 %v2133
        %2165 = vmatpush1.bf16.xpose.msra.mxu0 %v2132
        %2166 = vmatprep.subr.bf16.mxu0 %v2135
        %2167 = vmatpush1.bf16.xpose.msra.mxu0 %v2134
        %2168 = vmatprep.subr.bf16.mxu0 %v2137
        %2169 = vmatpush1.bf16.xpose.msra.mxu0 %v2136
        %2170 = vmatprep.subr.bf16.mxu0 %v2139
        %2171 = vmatpush1.bf16.xpose.msra.mxu0 %v2138
        %2172 = vmatprep.subr.bf16.mxu0 %v2141
        %2173 = vmatpush1.bf16.xpose.msra.mxu0 %v2140
        %2174 = vmatprep.subr.bf16.mxu0 %v2143
        %2175 = vmatpush1.bf16.xpose.msra.mxu0 %v2142
        %2176 = vmatprep.subr.bf16.mxu0 %v2145
        %2177 = vmatpush1.bf16.xpose.msra.mxu0 %v2144
        %2178 = vmatprep.subr.bf16.mxu0 %v2147
        %2179 = vmatpush1.bf16.xpose.msra.mxu0 %v2146
        %2180 = vmatprep.subr.bf16.mxu0 %v2149
        %2181 = vmatpush1.bf16.xpose.msra.mxu0 %v2148
        %2182 = vmatprep.mubr.bf16.mxu0 %v1393
        %2183 = vmatmul.mubr.bf16.gmra.mrb[0].mxu0 %v1392
        %v2184 = vpop.f32.mrb[0].mxu0
        %v2185 = vadd.f32 0.0, %v2184
        %v2186 = vpop.f32.mrb[0].mxu0
        %v2187 = vadd.f32 0.0, %v2186
        %v2188 = vpop.f32.mrb[0].mxu0
        %v2189 = vadd.f32 0.0, %v2188
        %v2190 = vpop.f32.mrb[0].mxu0
        %v2191 = vadd.f32 0.0, %v2190
        %2192 = vmatprep.mubr.bf16.mxu0 %v1395
        %2193 = vmatmul.mubr.bf16.gmra.mrb[0].mxu0 %v1394
        %v2194 = vpop.f32.mrb[0].mxu0
        %v2195 = vadd.f32 0.0, %v2194
        %v2196 = vpop.f32.mrb[0].mxu0
        %v2197 = vadd.f32 0.0, %v2196
        %v2198 = vpop.f32.mrb[0].mxu0
        %v2199 = vadd.f32 0.0, %v2198
        %v2200 = vpop.f32.mrb[0].mxu0
        %v2201 = vadd.f32 0.0, %v2200
        %2202 = vdwg.mxu0
        %v2203 = vpack.c.bf16 %v2189, %v2185
        %v2204 = vpack.c.bf16 %v2191, %v2187
        %v2205 = vpack.c.bf16 %v2199, %v2195
        %v2206 = vpack.c.bf16 %v2201, %v2197
        %2207 = vst [vmem:[#allocation3] sm:$0xff] %v2203
        %2208 = vst [vmem:[#allocation3 + $0x8] sm:$0xff] %v2204
        %2209 = vst [vmem:[#allocation3 + $0x10] sm:$0xff] %v2205
        %2210 = vst [vmem:[#allocation3 + $0x18] sm:$0xff] %v2206
        %2211 = vxpose.xlu0.b32.start [1/16] %v1250, 128
        %2212 = vxpose.xlu0.b32.cont [2/16] %v1254, 128
        %2213 = vxpose.xlu0.b32.cont [3/16] %v1260, 128
        %2214 = vxpose.xlu0.b32.cont [4/16] %v1264, 128
        %2215 = vxpose.xlu0.b32.cont [5/16] 0.0, 128
        %2216 = vxpose.xlu0.b32.cont [6/16] 0.0, 128
        %2217 = vxpose.xlu0.b32.cont [7/16] 0.0, 128
        %2218 = vxpose.xlu0.b32.cont [8/16] 0.0, 128
        %2219 = vxpose.xlu0.b32.cont [9/16] 0.0, 128
        %2220 = vxpose.xlu0.b32.cont [10/16] 0.0, 128
        %2221 = vxpose.xlu0.b32.cont [11/16] 0.0, 128
        %2222 = vxpose.xlu0.b32.cont [12/16] 0.0, 128
        %2223 = vxpose.xlu0.b32.cont [13/16] 0.0, 128
        %2224 = vxpose.xlu0.b32.cont [14/16] 0.0, 128
        %2225 = vxpose.xlu0.b32.cont [15/16] 0.0, 128
        %2226 = vxpose.xlu0.b32.end [16/16] 0.0, 128
        %v2227 = vpop.trf.xlu0
        %v2228 = vpop.trf.xlu0
        %v2229 = vpop.trf.xlu0
        %v2230 = vpop.trf.xlu0
        %v2231 = vpop.trf.xlu0
        %v2232 = vpop.trf.xlu0
        %v2233 = vpop.trf.xlu0
        %v2234 = vpop.trf.xlu0
        %v2235 = vpop.trf.xlu0
        %v2236 = vpop.trf.xlu0
        %v2237 = vpop.trf.xlu0
        %v2238 = vpop.trf.xlu0
        %v2239 = vpop.trf.xlu0
        %v2240 = vpop.trf.xlu0
        %v2241 = vpop.trf.xlu0
        %v2242 = vpop.trf.xlu0
        %2243 = vxpose.xlu0.b32.start [1/16] %v1252, 128
        %2244 = vxpose.xlu0.b32.cont [2/16] %v1256, 128
        %2245 = vxpose.xlu0.b32.cont [3/16] %v1262, 128
        %2246 = vxpose.xlu0.b32.cont [4/16] %v1266, 128
        %2247 = vxpose.xlu0.b32.cont [5/16] 0.0, 128
        %2248 = vxpose.xlu0.b32.cont [6/16] 0.0, 128
        %2249 = vxpose.xlu0.b32.cont [7/16] 0.0, 128
        %2250 = vxpose.xlu0.b32.cont [8/16] 0.0, 128
        %2251 = vxpose.xlu0.b32.cont [9/16] 0.0, 128
        %2252 = vxpose.xlu0.b32.cont [10/16] 0.0, 128
        %2253 = vxpose.xlu0.b32.cont [11/16] 0.0, 128
        %2254 = vxpose.xlu0.b32.cont [12/16] 0.0, 128
        %2255 = vxpose.xlu0.b32.cont [13/16] 0.0, 128
        %2256 = vxpose.xlu0.b32.cont [14/16] 0.0, 128
        %2257 = vxpose.xlu0.b32.cont [15/16] 0.0, 128
        %2258 = vxpose.xlu0.b32.end [16/16] 0.0, 128
        %v2259 = vpop.trf.xlu0
        %v2260 = vpop.trf.xlu0
        %v2261 = vpop.trf.xlu0
        %v2262 = vpop.trf.xlu0
        %v2263 = vpop.trf.xlu0
        %v2264 = vpop.trf.xlu0
        %v2265 = vpop.trf.xlu0
        %v2266 = vpop.trf.xlu0
        %v2267 = vpop.trf.xlu0
        %v2268 = vpop.trf.xlu0
        %v2269 = vpop.trf.xlu0
        %v2270 = vpop.trf.xlu0
        %v2271 = vpop.trf.xlu0
        %v2272 = vpop.trf.xlu0
        %v2273 = vpop.trf.xlu0
        %v2274 = vpop.trf.xlu0
        %v2275 = vpack.c.bf16 %v2228, %v2227
        %v2276 = vpack.c.bf16 %v2230, %v2229
        %v2277 = vpack.c.bf16 %v2232, %v2231
        %v2278 = vpack.c.bf16 %v2234, %v2233
        %v2279 = vpack.c.bf16 %v2236, %v2235
        %v2280 = vpack.c.bf16 %v2238, %v2237
        %v2281 = vpack.c.bf16 %v2240, %v2239
        %v2282 = vpack.c.bf16 %v2242, %v2241
        %v2283 = vpack.c.bf16 %v2260, %v2259
        %v2284 = vpack.c.bf16 %v2262, %v2261
        %v2285 = vpack.c.bf16 %v2264, %v2263
        %v2286 = vpack.c.bf16 %v2266, %v2265
        %v2287 = vpack.c.bf16 %v2268, %v2267
        %v2288 = vpack.c.bf16 %v2270, %v2269
        %v2289 = vpack.c.bf16 %v2272, %v2271
        %v2290 = vpack.c.bf16 %v2274, %v2273
        %v2291 = vld [vmem:[#allocation2 + $0x20] sm:$0xff]
        %v2292 = vld [vmem:[#allocation2 + $0x28] sm:$0xff]
        %v2293 = vld [vmem:[#allocation2 + $0x30] sm:$0xff]
        %v2294 = vld [vmem:[#allocation2 + $0x38] sm:$0xff]
        %v2295 = vld [vmem:[#allocation2 + $0xa0] sm:$0xff]
        %v2296 = vld [vmem:[#allocation2 + $0xa8] sm:$0xff]
        %v2297 = vld [vmem:[#allocation2 + $0xb0] sm:$0xff]
        %v2298 = vld [vmem:[#allocation2 + $0xb8] sm:$0xff]
        %v2300 = vsel %vm1396, %v2275, 0
        %v2303 = vsel %vm1396, %v2276, 0
        %v2306 = vsel %vm1396, %v2277, 0
        %v2309 = vsel %vm1396, %v2278, 0
        %v2312 = vsel %vm1396, %v2279, 0
        %v2315 = vsel %vm1396, %v2280, 0
        %v2318 = vsel %vm1396, %v2281, 0
        %v2321 = vsel %vm1396, %v2282, 0
        %v2324 = vsel %vm1396, %v2283, 0
        %v2327 = vsel %vm1396, %v2284, 0
        %v2330 = vsel %vm1396, %v2285, 0
        %v2333 = vsel %vm1396, %v2286, 0
        %v2336 = vsel %vm1396, %v2287, 0
        %v2339 = vsel %vm1396, %v2288, 0
        %v2342 = vsel %vm1396, %v2289, 0
        %v2345 = vsel %vm1396, %v2290, 0
        %2347 = vmatprep.subr.bf16.mxu0 %v2292
        %2348 = vmatpush1.bf16.msra.mxu0 %v2291
        %2349 = vmatprep.subr.bf16.mxu0 %v2294
        %2350 = vmatpush1.bf16.msra.mxu0 %v2293
        %2351 = vmatprep.subr.bf16.mxu0 0
        %2352 = vmatpush1.bf16.msra.mxu0 0
        %2353 = vmatprep.subr.bf16.mxu0 0
        %2354 = vmatpush1.bf16.msra.mxu0 0
        %2355 = vmatprep.subr.bf16.mxu0 0
        %2356 = vmatpush1.bf16.msra.mxu0 0
        %2357 = vmatprep.subr.bf16.mxu0 0
        %2358 = vmatpush1.bf16.msra.mxu0 0
        %2359 = vmatprep.subr.bf16.mxu0 0
        %2360 = vmatpush1.bf16.msra.mxu0 0
        %2361 = vmatprep.subr.bf16.mxu0 0
        %2362 = vmatpush1.bf16.msra.mxu0 0
        %2363 = vmatprep.subr.bf16.mxu0 0
        %2364 = vmatpush1.bf16.msra.mxu0 0
        %2365 = vmatprep.subr.bf16.mxu0 0
        %2366 = vmatpush1.bf16.msra.mxu0 0
        %2367 = vmatprep.subr.bf16.mxu0 0
        %2368 = vmatpush1.bf16.msra.mxu0 0
        %2369 = vmatprep.subr.bf16.mxu0 0
        %2370 = vmatpush1.bf16.msra.mxu0 0
        %2371 = vmatprep.subr.bf16.mxu0 0
        %2372 = vmatpush1.bf16.msra.mxu0 0
        %2373 = vmatprep.subr.bf16.mxu0 0
        %2374 = vmatpush1.bf16.msra.mxu0 0
        %2375 = vmatprep.subr.bf16.mxu0 0
        %2376 = vmatpush1.bf16.msra.mxu0 0
        %2377 = vmatprep.subr.bf16.mxu0 0
        %2378 = vmatpush1.bf16.msra.mxu0 0
        %2379 = vmatprep.mubr.bf16.mxu0 0
        %2380 = vmatmul.mubr.bf16.gmra.mrb[0].mxu0 %v2300
        %v2381 = vpop.f32.mrb[0].mxu0
        %v2382 = vadd.f32 0.0, %v2381
        %v2383 = vpop.f32.mrb[0].mxu0
        %v2384 = vadd.f32 0.0, %v2383
        %v2385 = vpop.f32.mrb[0].mxu0
        %v2386 = vadd.f32 0.0, %v2385
        %v2387 = vpop.f32.mrb[0].mxu0
        %v2388 = vadd.f32 0.0, %v2387
        %2389 = vmatprep.mubr.bf16.mxu0 0
        %2390 = vmatmul.mubr.bf16.gmra.mrb[0].mxu0 %v2303
        %v2391 = vpop.f32.mrb[0].mxu0
        %v2392 = vadd.f32 0.0, %v2391
        %v2393 = vpop.f32.mrb[0].mxu0
        %v2394 = vadd.f32 0.0, %v2393
        %v2395 = vpop.f32.mrb[0].mxu0
        %v2396 = vadd.f32 0.0, %v2395
        %v2397 = vpop.f32.mrb[0].mxu0
        %v2398 = vadd.f32 0.0, %v2397
        %2399 = vmatprep.mubr.bf16.mxu0 0
        %2400 = vmatmul.mubr.bf16.gmra.mrb[0].mxu0 %v2306
        %v2401 = vpop.f32.mrb[0].mxu0
        %v2402 = vadd.f32 0.0, %v2401
        %v2403 = vpop.f32.mrb[0].mxu0
        %v2404 = vadd.f32 0.0, %v2403
        %v2405 = vpop.f32.mrb[0].mxu0
        %v2406 = vadd.f32 0.0, %v2405
        %v2407 = vpop.f32.mrb[0].mxu0
        %v2408 = vadd.f32 0.0, %v2407
        %2409 = vmatprep.mubr.bf16.mxu0 0
        %2410 = vmatmul.mubr.bf16.gmra.mrb[0].mxu0 %v2309
        %v2411 = vpop.f32.mrb[0].mxu0
        %v2412 = vadd.f32 0.0, %v2411
        %v2413 = vpop.f32.mrb[0].mxu0
        %v2414 = vadd.f32 0.0, %v2413
        %v2415 = vpop.f32.mrb[0].mxu0
        %v2416 = vadd.f32 0.0, %v2415
        %v2417 = vpop.f32.mrb[0].mxu0
        %v2418 = vadd.f32 0.0, %v2417
        %2419 = vmatprep.mubr.bf16.mxu0 0
        %2420 = vmatmul.mubr.bf16.gmra.mrb[0].mxu0 %v2312
        %v2421 = vpop.f32.mrb[0].mxu0
        %v2422 = vadd.f32 0.0, %v2421
        %v2423 = vpop.f32.mrb[0].mxu0
        %v2424 = vadd.f32 0.0, %v2423
        %v2425 = vpop.f32.mrb[0].mxu0
        %v2426 = vadd.f32 0.0, %v2425
        %v2427 = vpop.f32.mrb[0].mxu0
        %v2428 = vadd.f32 0.0, %v2427
        %2429 = vmatprep.mubr.bf16.mxu0 0
        %2430 = vmatmul.mubr.bf16.gmra.mrb[0].mxu0 %v2315
        %v2431 = vpop.f32.mrb[0].mxu0
        %v2432 = vadd.f32 0.0, %v2431
        %v2433 = vpop.f32.mrb[0].mxu0
        %v2434 = vadd.f32 0.0, %v2433
        %v2435 = vpop.f32.mrb[0].mxu0
        %v2436 = vadd.f32 0.0, %v2435
        %v2437 = vpop.f32.mrb[0].mxu0
        %v2438 = vadd.f32 0.0, %v2437
        %2439 = vmatprep.mubr.bf16.mxu0 0
        %2440 = vmatmul.mubr.bf16.gmra.mrb[0].mxu0 %v2318
        %v2441 = vpop.f32.mrb[0].mxu0
        %v2442 = vadd.f32 0.0, %v2441
        %v2443 = vpop.f32.mrb[0].mxu0
        %v2444 = vadd.f32 0.0, %v2443
        %v2445 = vpop.f32.mrb[0].mxu0
        %v2446 = vadd.f32 0.0, %v2445
        %v2447 = vpop.f32.mrb[0].mxu0
        %v2448 = vadd.f32 0.0, %v2447
        %2449 = vmatprep.mubr.bf16.mxu0 0
        %2450 = vmatmul.mubr.bf16.gmra.mrb[0].mxu0 %v2321
        %v2451 = vpop.f32.mrb[0].mxu0
        %v2452 = vadd.f32 0.0, %v2451
        %v2453 = vpop.f32.mrb[0].mxu0
        %v2454 = vadd.f32 0.0, %v2453
        %v2455 = vpop.f32.mrb[0].mxu0
        %v2456 = vadd.f32 0.0, %v2455
        %v2457 = vpop.f32.mrb[0].mxu0
        %v2458 = vadd.f32 0.0, %v2457
        %2459 = vmatprep.mubr.bf16.mxu0 0
        %2460 = vmatmul.mubr.bf16.gmra.mrb[0].mxu0 %v2324
        %v2461 = vpop.f32.mrb[0].mxu0
        %v2462 = vadd.f32 0.0, %v2461
        %v2463 = vpop.f32.mrb[0].mxu0
        %v2464 = vadd.f32 0.0, %v2463
        %v2465 = vpop.f32.mrb[0].mxu0
        %v2466 = vadd.f32 0.0, %v2465
        %v2467 = vpop.f32.mrb[0].mxu0
        %v2468 = vadd.f32 0.0, %v2467
        %2469 = vmatprep.mubr.bf16.mxu0 0
        %2470 = vmatmul.mubr.bf16.gmra.mrb[0].mxu0 %v2327
        %v2471 = vpop.f32.mrb[0].mxu0
        %v2472 = vadd.f32 0.0, %v2471
        %v2473 = vpop.f32.mrb[0].mxu0
        %v2474 = vadd.f32 0.0, %v2473
        %v2475 = vpop.f32.mrb[0].mxu0
        %v2476 = vadd.f32 0.0, %v2475
        %v2477 = vpop.f32.mrb[0].mxu0
        %v2478 = vadd.f32 0.0, %v2477
        %2479 = vmatprep.mubr.bf16.mxu0 0
        %2480 = vmatmul.mubr.bf16.gmra.mrb[0].mxu0 %v2330
        %v2481 = vpop.f32.mrb[0].mxu0
        %v2482 = vadd.f32 0.0, %v2481
        %v2483 = vpop.f32.mrb[0].mxu0
        %v2484 = vadd.f32 0.0, %v2483
        %v2485 = vpop.f32.mrb[0].mxu0
        %v2486 = vadd.f32 0.0, %v2485
        %v2487 = vpop.f32.mrb[0].mxu0
        %v2488 = vadd.f32 0.0, %v2487
        %2489 = vmatprep.mubr.bf16.mxu0 0
        %2490 = vmatmul.mubr.bf16.gmra.mrb[0].mxu0 %v2333
        %v2491 = vpop.f32.mrb[0].mxu0
        %v2492 = vadd.f32 0.0, %v2491
        %v2493 = vpop.f32.mrb[0].mxu0
        %v2494 = vadd.f32 0.0, %v2493
        %v2495 = vpop.f32.mrb[0].mxu0
        %v2496 = vadd.f32 0.0, %v2495
        %v2497 = vpop.f32.mrb[0].mxu0
        %v2498 = vadd.f32 0.0, %v2497
        %2499 = vmatprep.mubr.bf16.mxu0 0
        %2500 = vmatmul.mubr.bf16.gmra.mrb[0].mxu0 %v2336
        %v2501 = vpop.f32.mrb[0].mxu0
        %v2502 = vadd.f32 0.0, %v2501
        %v2503 = vpop.f32.mrb[0].mxu0
        %v2504 = vadd.f32 0.0, %v2503
        %v2505 = vpop.f32.mrb[0].mxu0
        %v2506 = vadd.f32 0.0, %v2505
        %v2507 = vpop.f32.mrb[0].mxu0
        %v2508 = vadd.f32 0.0, %v2507
        %2509 = vmatprep.mubr.bf16.mxu0 0
        %2510 = vmatmul.mubr.bf16.gmra.mrb[0].mxu0 %v2339
        %v2511 = vpop.f32.mrb[0].mxu0
        %v2512 = vadd.f32 0.0, %v2511
        %v2513 = vpop.f32.mrb[0].mxu0
        %v2514 = vadd.f32 0.0, %v2513
        %v2515 = vpop.f32.mrb[0].mxu0
        %v2516 = vadd.f32 0.0, %v2515
        %v2517 = vpop.f32.mrb[0].mxu0
        %v2518 = vadd.f32 0.0, %v2517
        %2519 = vmatprep.mubr.bf16.mxu0 0
        %2520 = vmatmul.mubr.bf16.gmra.mrb[0].mxu0 %v2342
        %v2521 = vpop.f32.mrb[0].mxu0
        %v2522 = vadd.f32 0.0, %v2521
        %v2523 = vpop.f32.mrb[0].mxu0
        %v2524 = vadd.f32 0.0, %v2523
        %v2525 = vpop.f32.mrb[0].mxu0
        %v2526 = vadd.f32 0.0, %v2525
        %v2527 = vpop.f32.mrb[0].mxu0
        %v2528 = vadd.f32 0.0, %v2527
        %2529 = vmatprep.mubr.bf16.mxu0 0
        %2530 = vmatmul.mubr.bf16.gmra.mrb[0].mxu0 %v2345
        %v2531 = vpop.f32.mrb[0].mxu0
        %v2532 = vadd.f32 0.0, %v2531
        %v2533 = vpop.f32.mrb[0].mxu0
        %v2534 = vadd.f32 0.0, %v2533
        %v2535 = vpop.f32.mrb[0].mxu0
        %v2536 = vadd.f32 0.0, %v2535
        %v2537 = vpop.f32.mrb[0].mxu0
        %v2538 = vadd.f32 0.0, %v2537
        %2539 = vdwg.mxu0
        %v2540 = vmax.f32 %v2382, %v2384
        %2541 = vmax.xlane.f32.xlu0 %v2540
        %v2542 = vpop.xlane.xlu0 %2541
        %v2543 = vmax.f32 %v2386, %v2388
        %2544 = vmax.xlane.f32.xlu0 %v2543
        %v2545 = vpop.xlane.xlu0 %2544
        %v2546 = vmax.f32 %v2392, %v2394
        %2547 = vmax.xlane.f32.xlu0 %v2546
        %v2548 = vpop.xlane.xlu0 %2547
        %v2549 = vmax.f32 %v2396, %v2398
        %2550 = vmax.xlane.f32.xlu0 %v2549
        %v2551 = vpop.xlane.xlu0 %2550
        %v2552 = vmax.f32 %v2402, %v2404
        %2553 = vmax.xlane.f32.xlu0 %v2552
        %v2554 = vpop.xlane.xlu0 %2553
        %v2555 = vmax.f32 %v2406, %v2408
        %2556 = vmax.xlane.f32.xlu0 %v2555
        %v2557 = vpop.xlane.xlu0 %2556
        %v2558 = vmax.f32 %v2412, %v2414
        %2559 = vmax.xlane.f32.xlu0 %v2558
        %v2560 = vpop.xlane.xlu0 %2559
        %v2561 = vmax.f32 %v2416, %v2418
        %2562 = vmax.xlane.f32.xlu0 %v2561
        %v2563 = vpop.xlane.xlu0 %2562
        %v2564 = vmax.f32 %v2422, %v2424
        %2565 = vmax.xlane.f32.xlu0 %v2564
        %v2566 = vpop.xlane.xlu0 %2565
        %v2567 = vmax.f32 %v2426, %v2428
        %2568 = vmax.xlane.f32.xlu0 %v2567
        %v2569 = vpop.xlane.xlu0 %2568
        %v2570 = vmax.f32 %v2432, %v2434
        %2571 = vmax.xlane.f32.xlu0 %v2570
        %v2572 = vpop.xlane.xlu0 %2571
        %v2573 = vmax.f32 %v2436, %v2438
        %2574 = vmax.xlane.f32.xlu0 %v2573
        %v2575 = vpop.xlane.xlu0 %2574
        %v2576 = vmax.f32 %v2442, %v2444
        %2577 = vmax.xlane.f32.xlu0 %v2576
        %v2578 = vpop.xlane.xlu0 %2577
        %v2579 = vmax.f32 %v2446, %v2448
        %2580 = vmax.xlane.f32.xlu0 %v2579
        %v2581 = vpop.xlane.xlu0 %2580
        %v2582 = vmax.f32 %v2452, %v2454
        %2583 = vmax.xlane.f32.xlu0 %v2582
        %v2584 = vpop.xlane.xlu0 %2583
        %v2585 = vmax.f32 %v2456, %v2458
        %2586 = vmax.xlane.f32.xlu0 %v2585
        %v2587 = vpop.xlane.xlu0 %2586
        %v2588 = vmax.f32 %v2462, %v2464
        %2589 = vmax.xlane.f32.xlu0 %v2588
        %v2590 = vpop.xlane.xlu0 %2589
        %v2591 = vmax.f32 %v2466, %v2468
        %2592 = vmax.xlane.f32.xlu0 %v2591
        %v2593 = vpop.xlane.xlu0 %2592
        %v2594 = vmax.f32 %v2472, %v2474
        %2595 = vmax.xlane.f32.xlu0 %v2594
        %v2596 = vpop.xlane.xlu0 %2595
        %v2597 = vmax.f32 %v2476, %v2478
        %2598 = vmax.xlane.f32.xlu0 %v2597
        %v2599 = vpop.xlane.xlu0 %2598
        %v2600 = vmax.f32 %v2482, %v2484
        %2601 = vmax.xlane.f32.xlu0 %v2600
        %v2602 = vpop.xlane.xlu0 %2601
        %v2603 = vmax.f32 %v2486, %v2488
        %2604 = vmax.xlane.f32.xlu0 %v2603
        %v2605 = vpop.xlane.xlu0 %2604
        %v2606 = vmax.f32 %v2492, %v2494
        %2607 = vmax.xlane.f32.xlu0 %v2606
        %v2608 = vpop.xlane.xlu0 %2607
        %v2609 = vmax.f32 %v2496, %v2498
        %2610 = vmax.xlane.f32.xlu0 %v2609
        %v2611 = vpop.xlane.xlu0 %2610
        %v2612 = vmax.f32 %v2502, %v2504
        %2613 = vmax.xlane.f32.xlu0 %v2612
        %v2614 = vpop.xlane.xlu0 %2613
        %v2615 = vmax.f32 %v2506, %v2508
        %2616 = vmax.xlane.f32.xlu0 %v2615
        %v2617 = vpop.xlane.xlu0 %2616
        %v2618 = vmax.f32 %v2512, %v2514
        %2619 = vmax.xlane.f32.xlu0 %v2618
        %v2620 = vpop.xlane.xlu0 %2619
        %v2621 = vmax.f32 %v2516, %v2518
        %2622 = vmax.xlane.f32.xlu0 %v2621
        %v2623 = vpop.xlane.xlu0 %2622
        %v2624 = vmax.f32 %v2522, %v2524
        %2625 = vmax.xlane.f32.xlu0 %v2624
        %v2626 = vpop.xlane.xlu0 %2625
        %v2627 = vmax.f32 %v2526, %v2528
        %2628 = vmax.xlane.f32.xlu0 %v2627
        %v2629 = vpop.xlane.xlu0 %2628
        %v2630 = vmax.f32 %v2532, %v2534
        %2631 = vmax.xlane.f32.xlu0 %v2630
        %v2632 = vpop.xlane.xlu0 %2631
        %v2633 = vmax.f32 %v2536, %v2538
        %2634 = vmax.xlane.f32.xlu0 %v2633
        %v2635 = vpop.xlane.xlu0 %2634
        %v2636 = vsub.f32 %v2382, %v2542
        %v2637 = vsub.f32 %v2384, %v2542
        %v2638 = vsub.f32 %v2386, %v2545
        %v2639 = vsub.f32 %v2388, %v2545
        %v2640 = vsub.f32 %v2392, %v2548
        %v2641 = vsub.f32 %v2394, %v2548
        %v2642 = vsub.f32 %v2396, %v2551
        %v2643 = vsub.f32 %v2398, %v2551
        %v2644 = vsub.f32 %v2402, %v2554
        %v2645 = vsub.f32 %v2404, %v2554
        %v2646 = vsub.f32 %v2406, %v2557
        %v2647 = vsub.f32 %v2408, %v2557
        %v2648 = vsub.f32 %v2412, %v2560
        %v2649 = vsub.f32 %v2414, %v2560
        %v2650 = vsub.f32 %v2416, %v2563
        %v2651 = vsub.f32 %v2418, %v2563
        %v2652 = vsub.f32 %v2422, %v2566
        %v2653 = vsub.f32 %v2424, %v2566
        %v2654 = vsub.f32 %v2426, %v2569
        %v2655 = vsub.f32 %v2428, %v2569
        %v2656 = vsub.f32 %v2432, %v2572
        %v2657 = vsub.f32 %v2434, %v2572
        %v2658 = vsub.f32 %v2436, %v2575
        %v2659 = vsub.f32 %v2438, %v2575
        %v2660 = vsub.f32 %v2442, %v2578
        %v2661 = vsub.f32 %v2444, %v2578
        %v2662 = vsub.f32 %v2446, %v2581
        %v2663 = vsub.f32 %v2448, %v2581
        %v2664 = vsub.f32 %v2452, %v2584
        %v2665 = vsub.f32 %v2454, %v2584
        %v2666 = vsub.f32 %v2456, %v2587
        %v2667 = vsub.f32 %v2458, %v2587
        %v2668 = vsub.f32 %v2462, %v2590
        %v2669 = vsub.f32 %v2464, %v2590
        %v2670 = vsub.f32 %v2466, %v2593
        %v2671 = vsub.f32 %v2468, %v2593
        %v2672 = vsub.f32 %v2472, %v2596
        %v2673 = vsub.f32 %v2474, %v2596
        %v2674 = vsub.f32 %v2476, %v2599
        %v2675 = vsub.f32 %v2478, %v2599
        %v2676 = vsub.f32 %v2482, %v2602
        %v2677 = vsub.f32 %v2484, %v2602
        %v2678 = vsub.f32 %v2486, %v2605
        %v2679 = vsub.f32 %v2488, %v2605
        %v2680 = vsub.f32 %v2492, %v2608
        %v2681 = vsub.f32 %v2494, %v2608
        %v2682 = vsub.f32 %v2496, %v2611
        %v2683 = vsub.f32 %v2498, %v2611
        %v2684 = vsub.f32 %v2502, %v2614
        %v2685 = vsub.f32 %v2504, %v2614
        %v2686 = vsub.f32 %v2506, %v2617
        %v2687 = vsub.f32 %v2508, %v2617
        %v2688 = vsub.f32 %v2512, %v2620
        %v2689 = vsub.f32 %v2514, %v2620
        %v2690 = vsub.f32 %v2516, %v2623
        %v2691 = vsub.f32 %v2518, %v2623
        %v2692 = vsub.f32 %v2522, %v2626
        %v2693 = vsub.f32 %v2524, %v2626
        %v2694 = vsub.f32 %v2526, %v2629
        %v2695 = vsub.f32 %v2528, %v2629
        %v2696 = vsub.f32 %v2532, %v2632
        %v2697 = vsub.f32 %v2534, %v2632
        %v2698 = vsub.f32 %v2536, %v2635
        %v2699 = vsub.f32 %v2538, %v2635
        %v2700 = vmul.f32 %v2636, 1.442695
        %v2701 = vpow.pop %v2700
        %v2702 = vmul.f32 %v2637, 1.442695
        %v2703 = vpow.pop %v2702
        %v2704 = vmul.f32 %v2638, 1.442695
        %v2705 = vpow.pop %v2704
        %v2706 = vmul.f32 %v2639, 1.442695
        %v2707 = vpow.pop %v2706
        %v2708 = vmul.f32 %v2640, 1.442695
        %v2709 = vpow.pop %v2708
        %v2710 = vmul.f32 %v2641, 1.442695
        %v2711 = vpow.pop %v2710
        %v2712 = vmul.f32 %v2642, 1.442695
        %v2713 = vpow.pop %v2712
        %v2714 = vmul.f32 %v2643, 1.442695
        %v2715 = vpow.pop %v2714
        %v2716 = vmul.f32 %v2644, 1.442695
        %v2717 = vpow.pop %v2716
        %v2718 = vmul.f32 %v2645, 1.442695
        %v2719 = vpow.pop %v2718
        %v2720 = vmul.f32 %v2646, 1.442695
        %v2721 = vpow.pop %v2720
        %v2722 = vmul.f32 %v2647, 1.442695
        %v2723 = vpow.pop %v2722
        %v2724 = vmul.f32 %v2648, 1.442695
        %v2725 = vpow.pop %v2724
        %v2726 = vmul.f32 %v2649, 1.442695
        %v2727 = vpow.pop %v2726
        %v2728 = vmul.f32 %v2650, 1.442695
        %v2729 = vpow.pop %v2728
        %v2730 = vmul.f32 %v2651, 1.442695
        %v2731 = vpow.pop %v2730
        %v2732 = vmul.f32 %v2652, 1.442695
        %v2733 = vpow.pop %v2732
        %v2734 = vmul.f32 %v2653, 1.442695
        %v2735 = vpow.pop %v2734
        %v2736 = vmul.f32 %v2654, 1.442695
        %v2737 = vpow.pop %v2736
        %v2738 = vmul.f32 %v2655, 1.442695
        %v2739 = vpow.pop %v2738
        %v2740 = vmul.f32 %v2656, 1.442695
        %v2741 = vpow.pop %v2740
        %v2742 = vmul.f32 %v2657, 1.442695
        %v2743 = vpow.pop %v2742
        %v2744 = vmul.f32 %v2658, 1.442695
        %v2745 = vpow.pop %v2744
        %v2746 = vmul.f32 %v2659, 1.442695
        %v2747 = vpow.pop %v2746
        %v2748 = vmul.f32 %v2660, 1.442695
        %v2749 = vpow.pop %v2748
        %v2750 = vmul.f32 %v2661, 1.442695
        %v2751 = vpow.pop %v2750
        %v2752 = vmul.f32 %v2662, 1.442695
        %v2753 = vpow.pop %v2752
        %v2754 = vmul.f32 %v2663, 1.442695
        %v2755 = vpow.pop %v2754
        %v2756 = vmul.f32 %v2664, 1.442695
        %v2757 = vpow.pop %v2756
        %v2758 = vmul.f32 %v2665, 1.442695
        %v2759 = vpow.pop %v2758
        %v2760 = vmul.f32 %v2666, 1.442695
        %v2761 = vpow.pop %v2760
        %v2762 = vmul.f32 %v2667, 1.442695
        %v2763 = vpow.pop %v2762
        %v2764 = vmul.f32 %v2668, 1.442695
        %v2765 = vpow.pop %v2764
        %v2766 = vmul.f32 %v2669, 1.442695
        %v2767 = vpow.pop %v2766
        %v2768 = vmul.f32 %v2670, 1.442695
        %v2769 = vpow.pop %v2768
        %v2770 = vmul.f32 %v2671, 1.442695
        %v2771 = vpow.pop %v2770
        %v2772 = vmul.f32 %v2672, 1.442695
        %v2773 = vpow.pop %v2772
        %v2774 = vmul.f32 %v2673, 1.442695
        %v2775 = vpow.pop %v2774
        %v2776 = vmul.f32 %v2674, 1.442695
        %v2777 = vpow.pop %v2776
        %v2778 = vmul.f32 %v2675, 1.442695
        %v2779 = vpow.pop %v2778
        %v2780 = vmul.f32 %v2676, 1.442695
        %v2781 = vpow.pop %v2780
        %v2782 = vmul.f32 %v2677, 1.442695
        %v2783 = vpow.pop %v2782
        %v2784 = vmul.f32 %v2678, 1.442695
        %v2785 = vpow.pop %v2784
        %v2786 = vmul.f32 %v2679, 1.442695
        %v2787 = vpow.pop %v2786
        %v2788 = vmul.f32 %v2680, 1.442695
        %v2789 = vpow.pop %v2788
        %v2790 = vmul.f32 %v2681, 1.442695
        %v2791 = vpow.pop %v2790
        %v2792 = vmul.f32 %v2682, 1.442695
        %v2793 = vpow.pop %v2792
        %v2794 = vmul.f32 %v2683, 1.442695
        %v2795 = vpow.pop %v2794
        %v2796 = vmul.f32 %v2684, 1.442695
        %v2797 = vpow.pop %v2796
        %v2798 = vmul.f32 %v2685, 1.442695
        %v2799 = vpow.pop %v2798
        %v2800 = vmul.f32 %v2686, 1.442695
        %v2801 = vpow.pop %v2800
        %v2802 = vmul.f32 %v2687, 1.442695
        %v2803 = vpow.pop %v2802
        %v2804 = vmul.f32 %v2688, 1.442695
        %v2805 = vpow.pop %v2804
        %v2806 = vmul.f32 %v2689, 1.442695
        %v2807 = vpow.pop %v2806
        %v2808 = vmul.f32 %v2690, 1.442695
        %v2809 = vpow.pop %v2808
        %v2810 = vmul.f32 %v2691, 1.442695
        %v2811 = vpow.pop %v2810
        %v2812 = vmul.f32 %v2692, 1.442695
        %v2813 = vpow.pop %v2812
        %v2814 = vmul.f32 %v2693, 1.442695
        %v2815 = vpow.pop %v2814
        %v2816 = vmul.f32 %v2694, 1.442695
        %v2817 = vpow.pop %v2816
        %v2818 = vmul.f32 %v2695, 1.442695
        %v2819 = vpow.pop %v2818
        %v2820 = vmul.f32 %v2696, 1.442695
        %v2821 = vpow.pop %v2820
        %v2822 = vmul.f32 %v2697, 1.442695
        %v2823 = vpow.pop %v2822
        %v2824 = vmul.f32 %v2698, 1.442695
        %v2825 = vpow.pop %v2824
        %v2826 = vmul.f32 %v2699, 1.442695
        %v2827 = vpow.pop %v2826
        %v2828 = vadd.f32 %v2701, %v2703
        %2829 = vadd.xlane.f32.xlu0 %v2828
        %v2830 = vpop.xlane.xlu0 %2829
        %v2831 = vadd.f32 %v2705, %v2707
        %2832 = vadd.xlane.f32.xlu0 %v2831
        %v2833 = vpop.xlane.xlu0 %2832
        %v2834 = vadd.f32 %v2709, %v2711
        %2835 = vadd.xlane.f32.xlu0 %v2834
        %v2836 = vpop.xlane.xlu0 %2835
        %v2837 = vadd.f32 %v2713, %v2715
        %2838 = vadd.xlane.f32.xlu0 %v2837
        %v2839 = vpop.xlane.xlu0 %2838
        %v2840 = vadd.f32 %v2717, %v2719
        %2841 = vadd.xlane.f32.xlu0 %v2840
        %v2842 = vpop.xlane.xlu0 %2841
        %v2843 = vadd.f32 %v2721, %v2723
        %2844 = vadd.xlane.f32.xlu0 %v2843
        %v2845 = vpop.xlane.xlu0 %2844
        %v2846 = vadd.f32 %v2725, %v2727
        %2847 = vadd.xlane.f32.xlu0 %v2846
        %v2848 = vpop.xlane.xlu0 %2847
        %v2849 = vadd.f32 %v2729, %v2731
        %2850 = vadd.xlane.f32.xlu0 %v2849
        %v2851 = vpop.xlane.xlu0 %2850
        %v2852 = vadd.f32 %v2733, %v2735
        %2853 = vadd.xlane.f32.xlu0 %v2852
        %v2854 = vpop.xlane.xlu0 %2853
        %v2855 = vadd.f32 %v2737, %v2739
        %2856 = vadd.xlane.f32.xlu0 %v2855
        %v2857 = vpop.xlane.xlu0 %2856
        %v2858 = vadd.f32 %v2741, %v2743
        %2859 = vadd.xlane.f32.xlu0 %v2858
        %v2860 = vpop.xlane.xlu0 %2859
        %v2861 = vadd.f32 %v2745, %v2747
        %2862 = vadd.xlane.f32.xlu0 %v2861
        %v2863 = vpop.xlane.xlu0 %2862
        %v2864 = vadd.f32 %v2749, %v2751
        %2865 = vadd.xlane.f32.xlu0 %v2864
        %v2866 = vpop.xlane.xlu0 %2865
        %v2867 = vadd.f32 %v2753, %v2755
        %2868 = vadd.xlane.f32.xlu0 %v2867
        %v2869 = vpop.xlane.xlu0 %2868
        %v2870 = vadd.f32 %v2757, %v2759
        %2871 = vadd.xlane.f32.xlu0 %v2870
        %v2872 = vpop.xlane.xlu0 %2871
        %v2873 = vadd.f32 %v2761, %v2763
        %2874 = vadd.xlane.f32.xlu0 %v2873
        %v2875 = vpop.xlane.xlu0 %2874
        %v2876 = vadd.f32 %v2765, %v2767
        %2877 = vadd.xlane.f32.xlu0 %v2876
        %v2878 = vpop.xlane.xlu0 %2877
        %v2879 = vadd.f32 %v2769, %v2771
        %2880 = vadd.xlane.f32.xlu0 %v2879
        %v2881 = vpop.xlane.xlu0 %2880
        %v2882 = vadd.f32 %v2773, %v2775
        %2883 = vadd.xlane.f32.xlu0 %v2882
        %v2884 = vpop.xlane.xlu0 %2883
        %v2885 = vadd.f32 %v2777, %v2779
        %2886 = vadd.xlane.f32.xlu0 %v2885
        %v2887 = vpop.xlane.xlu0 %2886
        %v2888 = vadd.f32 %v2781, %v2783
        %2889 = vadd.xlane.f32.xlu0 %v2888
        %v2890 = vpop.xlane.xlu0 %2889
        %v2891 = vadd.f32 %v2785, %v2787
        %2892 = vadd.xlane.f32.xlu0 %v2891
        %v2893 = vpop.xlane.xlu0 %2892
        %v2894 = vadd.f32 %v2789, %v2791
        %2895 = vadd.xlane.f32.xlu0 %v2894
        %v2896 = vpop.xlane.xlu0 %2895
        %v2897 = vadd.f32 %v2793, %v2795
        %2898 = vadd.xlane.f32.xlu0 %v2897
        %v2899 = vpop.xlane.xlu0 %2898
        %v2900 = vadd.f32 %v2797, %v2799
        %2901 = vadd.xlane.f32.xlu0 %v2900
        %v2902 = vpop.xlane.xlu0 %2901
        %v2903 = vadd.f32 %v2801, %v2803
        %2904 = vadd.xlane.f32.xlu0 %v2903
        %v2905 = vpop.xlane.xlu0 %2904
        %v2906 = vadd.f32 %v2805, %v2807
        %2907 = vadd.xlane.f32.xlu0 %v2906
        %v2908 = vpop.xlane.xlu0 %2907
        %v2909 = vadd.f32 %v2809, %v2811
        %2910 = vadd.xlane.f32.xlu0 %v2909
        %v2911 = vpop.xlane.xlu0 %2910
        %v2912 = vadd.f32 %v2813, %v2815
        %2913 = vadd.xlane.f32.xlu0 %v2912
        %v2914 = vpop.xlane.xlu0 %2913
        %v2915 = vadd.f32 %v2817, %v2819
        %2916 = vadd.xlane.f32.xlu0 %v2915
        %v2917 = vpop.xlane.xlu0 %2916
        %v2918 = vadd.f32 %v2821, %v2823
        %2919 = vadd.xlane.f32.xlu0 %v2918
        %v2920 = vpop.xlane.xlu0 %2919
        %v2921 = vadd.f32 %v2825, %v2827
        %2922 = vadd.xlane.f32.xlu0 %v2921
        %v2923 = vpop.xlane.xlu0 %2922
        %v2924 = vrcp.pop %v2830
        %v2925 = vrcp.pop %v2833
        %v2926 = vrcp.pop %v2836
        %v2927 = vrcp.pop %v2839
        %v2928 = vrcp.pop %v2842
        %v2929 = vrcp.pop %v2845
        %v2930 = vrcp.pop %v2848
        %v2931 = vrcp.pop %v2851
        %v2932 = vrcp.pop %v2854
        %v2933 = vrcp.pop %v2857
        %v2934 = vrcp.pop %v2860
        %v2935 = vrcp.pop %v2863
        %v2936 = vrcp.pop %v2866
        %v2937 = vrcp.pop %v2869
        %v2938 = vrcp.pop %v2872
        %v2939 = vrcp.pop %v2875
        %v2940 = vrcp.pop %v2878
        %v2941 = vrcp.pop %v2881
        %v2942 = vrcp.pop %v2884
        %v2943 = vrcp.pop %v2887
        %v2944 = vrcp.pop %v2890
        %v2945 = vrcp.pop %v2893
        %v2946 = vrcp.pop %v2896
        %v2947 = vrcp.pop %v2899
        %v2948 = vrcp.pop %v2902
        %v2949 = vrcp.pop %v2905
        %v2950 = vrcp.pop %v2908
        %v2951 = vrcp.pop %v2911
        %v2952 = vrcp.pop %v2914
        %v2953 = vrcp.pop %v2917
        %v2954 = vrcp.pop %v2920
        %v2955 = vrcp.pop %v2923
        %v2956 = vmul.f32 %v2701, %v2924
        %v2957 = vmul.f32 %v2703, %v2924
        %v2958 = vmul.f32 %v2705, %v2925
        %v2959 = vmul.f32 %v2707, %v2925
        %v2960 = vmul.f32 %v2709, %v2926
        %v2961 = vmul.f32 %v2711, %v2926
        %v2962 = vmul.f32 %v2713, %v2927
        %v2963 = vmul.f32 %v2715, %v2927
        %v2964 = vmul.f32 %v2717, %v2928
        %v2965 = vmul.f32 %v2719, %v2928
        %v2966 = vmul.f32 %v2721, %v2929
        %v2967 = vmul.f32 %v2723, %v2929
        %v2968 = vmul.f32 %v2725, %v2930
        %v2969 = vmul.f32 %v2727, %v2930
        %v2970 = vmul.f32 %v2729, %v2931
        %v2971 = vmul.f32 %v2731, %v2931
        %v2972 = vmul.f32 %v2733, %v2932
        %v2973 = vmul.f32 %v2735, %v2932
        %v2974 = vmul.f32 %v2737, %v2933
        %v2975 = vmul.f32 %v2739, %v2933
        %v2976 = vmul.f32 %v2741, %v2934
        %v2977 = vmul.f32 %v2743, %v2934
        %v2978 = vmul.f32 %v2745, %v2935
        %v2979 = vmul.f32 %v2747, %v2935
        %v2980 = vmul.f32 %v2749, %v2936
        %v2981 = vmul.f32 %v2751, %v2936
        %v2982 = vmul.f32 %v2753, %v2937
        %v2983 = vmul.f32 %v2755, %v2937
        %v2984 = vmul.f32 %v2757, %v2938
        %v2985 = vmul.f32 %v2759, %v2938
        %v2986 = vmul.f32 %v2761, %v2939
        %v2987 = vmul.f32 %v2763, %v2939
        %v2988 = vmul.f32 %v2765, %v2940
        %v2989 = vmul.f32 %v2767, %v2940
        %v2990 = vmul.f32 %v2769, %v2941
        %v2991 = vmul.f32 %v2771, %v2941
        %v2992 = vmul.f32 %v2773, %v2942
        %v2993 = vmul.f32 %v2775, %v2942
        %v2994 = vmul.f32 %v2777, %v2943
        %v2995 = vmul.f32 %v2779, %v2943
        %v2996 = vmul.f32 %v2781, %v2944
        %v2997 = vmul.f32 %v2783, %v2944
        %v2998 = vmul.f32 %v2785, %v2945
        %v2999 = vmul.f32 %v2787, %v2945
        %v3000 = vmul.f32 %v2789, %v2946
        %v3001 = vmul.f32 %v2791, %v2946
        %v3002 = vmul.f32 %v2793, %v2947
        %v3003 = vmul.f32 %v2795, %v2947
        %v3004 = vmul.f32 %v2797, %v2948
        %v3005 = vmul.f32 %v2799, %v2948
        %v3006 = vmul.f32 %v2801, %v2949
        %v3007 = vmul.f32 %v2803, %v2949
        %v3008 = vmul.f32 %v2805, %v2950
        %v3009 = vmul.f32 %v2807, %v2950
        %v3010 = vmul.f32 %v2809, %v2951
        %v3011 = vmul.f32 %v2811, %v2951
        %v3012 = vmul.f32 %v2813, %v2952
        %v3013 = vmul.f32 %v2815, %v2952
        %v3014 = vmul.f32 %v2817, %v2953
        %v3015 = vmul.f32 %v2819, %v2953
        %v3016 = vmul.f32 %v2821, %v2954
        %v3017 = vmul.f32 %v2823, %v2954
        %v3018 = vmul.f32 %v2825, %v2955
        %v3019 = vmul.f32 %v2827, %v2955
        %v3020 = vpack.c.bf16 %v2958, %v2956
        %v3021 = vpack.c.bf16 %v2959, %v2957
        %v3022 = vpack.c.bf16 %v2962, %v2960
        %v3023 = vpack.c.bf16 %v2963, %v2961
        %v3024 = vpack.c.bf16 %v2966, %v2964
        %v3025 = vpack.c.bf16 %v2967, %v2965
        %v3026 = vpack.c.bf16 %v2970, %v2968
        %v3027 = vpack.c.bf16 %v2971, %v2969
        %v3028 = vpack.c.bf16 %v2974, %v2972
        %v3029 = vpack.c.bf16 %v2975, %v2973
        %v3030 = vpack.c.bf16 %v2978, %v2976
        %v3031 = vpack.c.bf16 %v2979, %v2977
        %v3032 = vpack.c.bf16 %v2982, %v2980
        %v3033 = vpack.c.bf16 %v2983, %v2981
        %v3034 = vpack.c.bf16 %v2986, %v2984
        %v3035 = vpack.c.bf16 %v2987, %v2985
        %v3036 = vpack.c.bf16 %v2990, %v2988
        %v3037 = vpack.c.bf16 %v2991, %v2989
        %v3038 = vpack.c.bf16 %v2994, %v2992
        %v3039 = vpack.c.bf16 %v2995, %v2993
        %v3040 = vpack.c.bf16 %v2998, %v2996
        %v3041 = vpack.c.bf16 %v2999, %v2997
        %v3042 = vpack.c.bf16 %v3002, %v3000
        %v3043 = vpack.c.bf16 %v3003, %v3001
        %v3044 = vpack.c.bf16 %v3006, %v3004
        %v3045 = vpack.c.bf16 %v3007, %v3005
        %v3046 = vpack.c.bf16 %v3010, %v3008
        %v3047 = vpack.c.bf16 %v3011, %v3009
        %v3048 = vpack.c.bf16 %v3014, %v3012
        %v3049 = vpack.c.bf16 %v3015, %v3013
        %v3050 = vpack.c.bf16 %v3018, %v3016
        %v3051 = vpack.c.bf16 %v3019, %v3017
        %3052 = vmatprep.subr.bf16.mxu0 %v3021
        %3053 = vmatpush1.bf16.xpose.msra.mxu0 %v3020
        %3054 = vmatprep.subr.bf16.mxu0 %v3023
        %3055 = vmatpush1.bf16.xpose.msra.mxu0 %v3022
        %3056 = vmatprep.subr.bf16.mxu0 %v3025
        %3057 = vmatpush1.bf16.xpose.msra.mxu0 %v3024
        %3058 = vmatprep.subr.bf16.mxu0 %v3027
        %3059 = vmatpush1.bf16.xpose.msra.mxu0 %v3026
        %3060 = vmatprep.subr.bf16.mxu0 %v3029
        %3061 = vmatpush1.bf16.xpose.msra.mxu0 %v3028
        %3062 = vmatprep.subr.bf16.mxu0 %v3031
        %3063 = vmatpush1.bf16.xpose.msra.mxu0 %v3030
        %3064 = vmatprep.subr.bf16.mxu0 %v3033
        %3065 = vmatpush1.bf16.xpose.msra.mxu0 %v3032
        %3066 = vmatprep.subr.bf16.mxu0 %v3035
        %3067 = vmatpush1.bf16.xpose.msra.mxu0 %v3034
        %3068 = vmatprep.subr.bf16.mxu0 %v3037
        %3069 = vmatpush1.bf16.xpose.msra.mxu0 %v3036
        %3070 = vmatprep.subr.bf16.mxu0 %v3039
        %3071 = vmatpush1.bf16.xpose.msra.mxu0 %v3038
        %3072 = vmatprep.subr.bf16.mxu0 %v3041
        %3073 = vmatpush1.bf16.xpose.msra.mxu0 %v3040
        %3074 = vmatprep.subr.bf16.mxu0 %v3043
        %3075 = vmatpush1.bf16.xpose.msra.mxu0 %v3042
        %3076 = vmatprep.subr.bf16.mxu0 %v3045
        %3077 = vmatpush1.bf16.xpose.msra.mxu0 %v3044
        %3078 = vmatprep.subr.bf16.mxu0 %v3047
        %3079 = vmatpush1.bf16.xpose.msra.mxu0 %v3046
        %3080 = vmatprep.subr.bf16.mxu0 %v3049
        %3081 = vmatpush1.bf16.xpose.msra.mxu0 %v3048
        %3082 = vmatprep.subr.bf16.mxu0 %v3051
        %3083 = vmatpush1.bf16.xpose.msra.mxu0 %v3050
        %3084 = vmatprep.mubr.bf16.mxu0 %v2296
        %3085 = vmatmul.mubr.bf16.gmra.mrb[0].mxu0 %v2295
        %v3086 = vpop.f32.mrb[0].mxu0
        %v3087 = vadd.f32 0.0, %v3086
        %v3088 = vpop.f32.mrb[0].mxu0
        %v3089 = vadd.f32 0.0, %v3088
        %v3090 = vpop.f32.mrb[0].mxu0
        %v3091 = vadd.f32 0.0, %v3090
        %v3092 = vpop.f32.mrb[0].mxu0
        %v3093 = vadd.f32 0.0, %v3092
        %3094 = vmatprep.mubr.bf16.mxu0 %v2298
        %3095 = vmatmul.mubr.bf16.gmra.mrb[0].mxu0 %v2297
        %v3096 = vpop.f32.mrb[0].mxu0
        %v3097 = vadd.f32 0.0, %v3096
        %v3098 = vpop.f32.mrb[0].mxu0
        %v3099 = vadd.f32 0.0, %v3098
        %v3100 = vpop.f32.mrb[0].mxu0
        %v3101 = vadd.f32 0.0, %v3100
        %v3102 = vpop.f32.mrb[0].mxu0
        %v3103 = vadd.f32 0.0, %v3102
        %3104 = vdwg.mxu0
        %v3105 = vpack.c.bf16 %v3091, %v3087
        %v3106 = vpack.c.bf16 %v3093, %v3089
        %v3107 = vpack.c.bf16 %v3101, %v3097
        %v3108 = vpack.c.bf16 %v3103, %v3099
        %3109 = vst [vmem:[#allocation3 + $0x20] sm:$0xff] %v3105
        %3110 = vst [vmem:[#allocation3 + $0x28] sm:$0xff] %v3106
        %3111 = vst [vmem:[#allocation3 + $0x30] sm:$0xff] %v3107
        %3112 = vst [vmem:[#allocation3 + $0x38] sm:$0xff] %v3108
        %3113 = vxpose.xlu0.b32.start [1/16] %v1270, 128
        %3114 = vxpose.xlu0.b32.cont [2/16] %v1274, 128
        %3115 = vxpose.xlu0.b32.cont [3/16] %v1280, 128
        %3116 = vxpose.xlu0.b32.cont [4/16] %v1284, 128
        %3117 = vxpose.xlu0.b32.cont [5/16] 0.0, 128
        %3118 = vxpose.xlu0.b32.cont [6/16] 0.0, 128
        %3119 = vxpose.xlu0.b32.cont [7/16] 0.0, 128
        %3120 = vxpose.xlu0.b32.cont [8/16] 0.0, 128
        %3121 = vxpose.xlu0.b32.cont [9/16] 0.0, 128
        %3122 = vxpose.xlu0.b32.cont [10/16] 0.0, 128
        %3123 = vxpose.xlu0.b32.cont [11/16] 0.0, 128
        %3124 = vxpose.xlu0.b32.cont [12/16] 0.0, 128
        %3125 = vxpose.xlu0.b32.cont [13/16] 0.0, 128
        %3126 = vxpose.xlu0.b32.cont [14/16] 0.0, 128
        %3127 = vxpose.xlu0.b32.cont [15/16] 0.0, 128
        %3128 = vxpose.xlu0.b32.end [16/16] 0.0, 128
        %v3129 = vpop.trf.xlu0
        %v3130 = vpop.trf.xlu0
        %v3131 = vpop.trf.xlu0
        %v3132 = vpop.trf.xlu0
        %v3133 = vpop.trf.xlu0
        %v3134 = vpop.trf.xlu0
        %v3135 = vpop.trf.xlu0
        %v3136 = vpop.trf.xlu0
        %v3137 = vpop.trf.xlu0
        %v3138 = vpop.trf.xlu0
        %v3139 = vpop.trf.xlu0
        %v3140 = vpop.trf.xlu0
        %v3141 = vpop.trf.xlu0
        %v3142 = vpop.trf.xlu0
        %v3143 = vpop.trf.xlu0
        %v3144 = vpop.trf.xlu0
        %3145 = vxpose.xlu0.b32.start [1/16] %v1272, 128
        %3146 = vxpose.xlu0.b32.cont [2/16] %v1276, 128
        %3147 = vxpose.xlu0.b32.cont [3/16] %v1282, 128
        %3148 = vxpose.xlu0.b32.cont [4/16] %v1286, 128
        %3149 = vxpose.xlu0.b32.cont [5/16] 0.0, 128
        %3150 = vxpose.xlu0.b32.cont [6/16] 0.0, 128
        %3151 = vxpose.xlu0.b32.cont [7/16] 0.0, 128
        %3152 = vxpose.xlu0.b32.cont [8/16] 0.0, 128
        %3153 = vxpose.xlu0.b32.cont [9/16] 0.0, 128
        %3154 = vxpose.xlu0.b32.cont [10/16] 0.0, 128
        %3155 = vxpose.xlu0.b32.cont [11/16] 0.0, 128
        %3156 = vxpose.xlu0.b32.cont [12/16] 0.0, 128
        %3157 = vxpose.xlu0.b32.cont [13/16] 0.0, 128
        %3158 = vxpose.xlu0.b32.cont [14/16] 0.0, 128
        %3159 = vxpose.xlu0.b32.cont [15/16] 0.0, 128
        %3160 = vxpose.xlu0.b32.end [16/16] 0.0, 128
        %v3161 = vpop.trf.xlu0
        %v3162 = vpop.trf.xlu0
        %v3163 = vpop.trf.xlu0
        %v3164 = vpop.trf.xlu0
        %v3165 = vpop.trf.xlu0
        %v3166 = vpop.trf.xlu0
        %v3167 = vpop.trf.xlu0
        %v3168 = vpop.trf.xlu0
        %v3169 = vpop.trf.xlu0
        %v3170 = vpop.trf.xlu0
        %v3171 = vpop.trf.xlu0
        %v3172 = vpop.trf.xlu0
        %v3173 = vpop.trf.xlu0
        %v3174 = vpop.trf.xlu0
        %v3175 = vpop.trf.xlu0
        %v3176 = vpop.trf.xlu0
        %v3177 = vpack.c.bf16 %v3130, %v3129
        %v3178 = vpack.c.bf16 %v3132, %v3131
        %v3179 = vpack.c.bf16 %v3134, %v3133
        %v3180 = vpack.c.bf16 %v3136, %v3135
        %v3181 = vpack.c.bf16 %v3138, %v3137
        %v3182 = vpack.c.bf16 %v3140, %v3139
        %v3183 = vpack.c.bf16 %v3142, %v3141
        %v3184 = vpack.c.bf16 %v3144, %v3143
        %v3185 = vpack.c.bf16 %v3162, %v3161
        %v3186 = vpack.c.bf16 %v3164, %v3163
        %v3187 = vpack.c.bf16 %v3166, %v3165
        %v3188 = vpack.c.bf16 %v3168, %v3167
        %v3189 = vpack.c.bf16 %v3170, %v3169
        %v3190 = vpack.c.bf16 %v3172, %v3171
        %v3191 = vpack.c.bf16 %v3174, %v3173
        %v3192 = vpack.c.bf16 %v3176, %v3175
        %v3193 = vld [vmem:[#allocation2 + $0x40] sm:$0xff]
        %v3194 = vld [vmem:[#allocation2 + $0x48] sm:$0xff]
        %v3195 = vld [vmem:[#allocation2 + $0x50] sm:$0xff]
        %v3196 = vld [vmem:[#allocation2 + $0x58] sm:$0xff]
        %v3197 = vld [vmem:[#allocation2 + $0xc0] sm:$0xff]
        %v3198 = vld [vmem:[#allocation2 + $0xc8] sm:$0xff]
        %v3199 = vld [vmem:[#allocation2 + $0xd0] sm:$0xff]
        %v3200 = vld [vmem:[#allocation2 + $0xd8] sm:$0xff]
        %v3202 = vsel %vm1396, %v3177, 0
        %v3205 = vsel %vm1396, %v3178, 0
        %v3208 = vsel %vm1396, %v3179, 0
        %v3211 = vsel %vm1396, %v3180, 0
        %v3214 = vsel %vm1396, %v3181, 0
        %v3217 = vsel %vm1396, %v3182, 0
        %v3220 = vsel %vm1396, %v3183, 0
        %v3223 = vsel %vm1396, %v3184, 0
        %v3226 = vsel %vm1396, %v3185, 0
        %v3229 = vsel %vm1396, %v3186, 0
        %v3232 = vsel %vm1396, %v3187, 0
        %v3235 = vsel %vm1396, %v3188, 0
        %v3238 = vsel %vm1396, %v3189, 0
        %v3241 = vsel %vm1396, %v3190, 0
        %v3244 = vsel %vm1396, %v3191, 0
        %v3247 = vsel %vm1396, %v3192, 0
        %3249 = vmatprep.subr.bf16.mxu0 %v3194
        %3250 = vmatpush1.bf16.msra.mxu0 %v3193
        %3251 = vmatprep.subr.bf16.mxu0 %v3196
        %3252 = vmatpush1.bf16.msra.mxu0 %v3195
        %3253 = vmatprep.subr.bf16.mxu0 0
        %3254 = vmatpush1.bf16.msra.mxu0 0
        %3255 = vmatprep.subr.bf16.mxu0 0
        %3256 = vmatpush1.bf16.msra.mxu0 0
        %3257 = vmatprep.subr.bf16.mxu0 0
        %3258 = vmatpush1.bf16.msra.mxu0 0
        %3259 = vmatprep.subr.bf16.mxu0 0
        %3260 = vmatpush1.bf16.msra.mxu0 0
        %3261 = vmatprep.subr.bf16.mxu0 0
        %3262 = vmatpush1.bf16.msra.mxu0 0
        %3263 = vmatprep.subr.bf16.mxu0 0
        %3264 = vmatpush1.bf16.msra.mxu0 0
        %3265 = vmatprep.subr.bf16.mxu0 0
        %3266 = vmatpush1.bf16.msra.mxu0 0
        %3267 = vmatprep.subr.bf16.mxu0 0
        %3268 = vmatpush1.bf16.msra.mxu0 0
        %3269 = vmatprep.subr.bf16.mxu0 0
        %3270 = vmatpush1.bf16.msra.mxu0 0
        %3271 = vmatprep.subr.bf16.mxu0 0
        %3272 = vmatpush1.bf16.msra.mxu0 0
        %3273 = vmatprep.subr.bf16.mxu0 0
        %3274 = vmatpush1.bf16.msra.mxu0 0
        %3275 = vmatprep.subr.bf16.mxu0 0
        %3276 = vmatpush1.bf16.msra.mxu0 0
        %3277 = vmatprep.subr.bf16.mxu0 0
        %3278 = vmatpush1.bf16.msra.mxu0 0
        %3279 = vmatprep.subr.bf16.mxu0 0
        %3280 = vmatpush1.bf16.msra.mxu0 0
        %3281 = vmatprep.mubr.bf16.mxu0 0
        %3282 = vmatmul.mubr.bf16.gmra.mrb[0].mxu0 %v3202
        %v3283 = vpop.f32.mrb[0].mxu0
        %v3284 = vadd.f32 0.0, %v3283
        %v3285 = vpop.f32.mrb[0].mxu0
        %v3286 = vadd.f32 0.0, %v3285
        %v3287 = vpop.f32.mrb[0].mxu0
        %v3288 = vadd.f32 0.0, %v3287
        %v3289 = vpop.f32.mrb[0].mxu0
        %v3290 = vadd.f32 0.0, %v3289
        %3291 = vmatprep.mubr.bf16.mxu0 0
        %3292 = vmatmul.mubr.bf16.gmra.mrb[0].mxu0 %v3205
        %v3293 = vpop.f32.mrb[0].mxu0
        %v3294 = vadd.f32 0.0, %v3293
        %v3295 = vpop.f32.mrb[0].mxu0
        %v3296 = vadd.f32 0.0, %v3295
        %v3297 = vpop.f32.mrb[0].mxu0
        %v3298 = vadd.f32 0.0, %v3297
        %v3299 = vpop.f32.mrb[0].mxu0
        %v3300 = vadd.f32 0.0, %v3299
        %3301 = vmatprep.mubr.bf16.mxu0 0
        %3302 = vmatmul.mubr.bf16.gmra.mrb[0].mxu0 %v3208
        %v3303 = vpop.f32.mrb[0].mxu0
        %v3304 = vadd.f32 0.0, %v3303
        %v3305 = vpop.f32.mrb[0].mxu0
        %v3306 = vadd.f32 0.0, %v3305
        %v3307 = vpop.f32.mrb[0].mxu0
        %v3308 = vadd.f32 0.0, %v3307
        %v3309 = vpop.f32.mrb[0].mxu0
        %v3310 = vadd.f32 0.0, %v3309
        %3311 = vmatprep.mubr.bf16.mxu0 0
        %3312 = vmatmul.mubr.bf16.gmra.mrb[0].mxu0 %v3211
        %v3313 = vpop.f32.mrb[0].mxu0
        %v3314 = vadd.f32 0.0, %v3313
        %v3315 = vpop.f32.mrb[0].mxu0
        %v3316 = vadd.f32 0.0, %v3315
        %v3317 = vpop.f32.mrb[0].mxu0
        %v3318 = vadd.f32 0.0, %v3317
        %v3319 = vpop.f32.mrb[0].mxu0
        %v3320 = vadd.f32 0.0, %v3319
        %3321 = vmatprep.mubr.bf16.mxu0 0
        %3322 = vmatmul.mubr.bf16.gmra.mrb[0].mxu0 %v3214
        %v3323 = vpop.f32.mrb[0].mxu0
        %v3324 = vadd.f32 0.0, %v3323
        %v3325 = vpop.f32.mrb[0].mxu0
        %v3326 = vadd.f32 0.0, %v3325
        %v3327 = vpop.f32.mrb[0].mxu0
        %v3328 = vadd.f32 0.0, %v3327
        %v3329 = vpop.f32.mrb[0].mxu0
        %v3330 = vadd.f32 0.0, %v3329
        %3331 = vmatprep.mubr.bf16.mxu0 0
        %3332 = vmatmul.mubr.bf16.gmra.mrb[0].mxu0 %v3217
        %v3333 = vpop.f32.mrb[0].mxu0
        %v3334 = vadd.f32 0.0, %v3333
        %v3335 = vpop.f32.mrb[0].mxu0
        %v3336 = vadd.f32 0.0, %v3335
        %v3337 = vpop.f32.mrb[0].mxu0
        %v3338 = vadd.f32 0.0, %v3337
        %v3339 = vpop.f32.mrb[0].mxu0
        %v3340 = vadd.f32 0.0, %v3339
        %3341 = vmatprep.mubr.bf16.mxu0 0
        %3342 = vmatmul.mubr.bf16.gmra.mrb[0].mxu0 %v3220
        %v3343 = vpop.f32.mrb[0].mxu0
        %v3344 = vadd.f32 0.0, %v3343
        %v3345 = vpop.f32.mrb[0].mxu0
        %v3346 = vadd.f32 0.0, %v3345
        %v3347 = vpop.f32.mrb[0].mxu0
        %v3348 = vadd.f32 0.0, %v3347
        %v3349 = vpop.f32.mrb[0].mxu0
        %v3350 = vadd.f32 0.0, %v3349
        %3351 = vmatprep.mubr.bf16.mxu0 0
        %3352 = vmatmul.mubr.bf16.gmra.mrb[0].mxu0 %v3223
        %v3353 = vpop.f32.mrb[0].mxu0
        %v3354 = vadd.f32 0.0, %v3353
        %v3355 = vpop.f32.mrb[0].mxu0
        %v3356 = vadd.f32 0.0, %v3355
        %v3357 = vpop.f32.mrb[0].mxu0
        %v3358 = vadd.f32 0.0, %v3357
        %v3359 = vpop.f32.mrb[0].mxu0
        %v3360 = vadd.f32 0.0, %v3359
        %3361 = vmatprep.mubr.bf16.mxu0 0
        %3362 = vmatmul.mubr.bf16.gmra.mrb[0].mxu0 %v3226
        %v3363 = vpop.f32.mrb[0].mxu0
        %v3364 = vadd.f32 0.0, %v3363
        %v3365 = vpop.f32.mrb[0].mxu0
        %v3366 = vadd.f32 0.0, %v3365
        %v3367 = vpop.f32.mrb[0].mxu0
        %v3368 = vadd.f32 0.0, %v3367
        %v3369 = vpop.f32.mrb[0].mxu0
        %v3370 = vadd.f32 0.0, %v3369
        %3371 = vmatprep.mubr.bf16.mxu0 0
        %3372 = vmatmul.mubr.bf16.gmra.mrb[0].mxu0 %v3229
        %v3373 = vpop.f32.mrb[0].mxu0
        %v3374 = vadd.f32 0.0, %v3373
        %v3375 = vpop.f32.mrb[0].mxu0
        %v3376 = vadd.f32 0.0, %v3375
        %v3377 = vpop.f32.mrb[0].mxu0
        %v3378 = vadd.f32 0.0, %v3377
        %v3379 = vpop.f32.mrb[0].mxu0
        %v3380 = vadd.f32 0.0, %v3379
        %3381 = vmatprep.mubr.bf16.mxu0 0
        %3382 = vmatmul.mubr.bf16.gmra.mrb[0].mxu0 %v3232
        %v3383 = vpop.f32.mrb[0].mxu0
        %v3384 = vadd.f32 0.0, %v3383
        %v3385 = vpop.f32.mrb[0].mxu0
        %v3386 = vadd.f32 0.0, %v3385
        %v3387 = vpop.f32.mrb[0].mxu0
        %v3388 = vadd.f32 0.0, %v3387
        %v3389 = vpop.f32.mrb[0].mxu0
        %v3390 = vadd.f32 0.0, %v3389
        %3391 = vmatprep.mubr.bf16.mxu0 0
        %3392 = vmatmul.mubr.bf16.gmra.mrb[0].mxu0 %v3235
        %v3393 = vpop.f32.mrb[0].mxu0
        %v3394 = vadd.f32 0.0, %v3393
        %v3395 = vpop.f32.mrb[0].mxu0
        %v3396 = vadd.f32 0.0, %v3395
        %v3397 = vpop.f32.mrb[0].mxu0
        %v3398 = vadd.f32 0.0, %v3397
        %v3399 = vpop.f32.mrb[0].mxu0
        %v3400 = vadd.f32 0.0, %v3399
        %3401 = vmatprep.mubr.bf16.mxu0 0
        %3402 = vmatmul.mubr.bf16.gmra.mrb[0].mxu0 %v3238
        %v3403 = vpop.f32.mrb[0].mxu0
        %v3404 = vadd.f32 0.0, %v3403
        %v3405 = vpop.f32.mrb[0].mxu0
        %v3406 = vadd.f32 0.0, %v3405
        %v3407 = vpop.f32.mrb[0].mxu0
        %v3408 = vadd.f32 0.0, %v3407
        %v3409 = vpop.f32.mrb[0].mxu0
        %v3410 = vadd.f32 0.0, %v3409
        %3411 = vmatprep.mubr.bf16.mxu0 0
        %3412 = vmatmul.mubr.bf16.gmra.mrb[0].mxu0 %v3241
        %v3413 = vpop.f32.mrb[0].mxu0
        %v3414 = vadd.f32 0.0, %v3413
        %v3415 = vpop.f32.mrb[0].mxu0
        %v3416 = vadd.f32 0.0, %v3415
        %v3417 = vpop.f32.mrb[0].mxu0
        %v3418 = vadd.f32 0.0, %v3417
        %v3419 = vpop.f32.mrb[0].mxu0
        %v3420 = vadd.f32 0.0, %v3419
        %3421 = vmatprep.mubr.bf16.mxu0 0
        %3422 = vmatmul.mubr.bf16.gmra.mrb[0].mxu0 %v3244
        %v3423 = vpop.f32.mrb[0].mxu0
        %v3424 = vadd.f32 0.0, %v3423
        %v3425 = vpop.f32.mrb[0].mxu0
        %v3426 = vadd.f32 0.0, %v3425
        %v3427 = vpop.f32.mrb[0].mxu0
        %v3428 = vadd.f32 0.0, %v3427
        %v3429 = vpop.f32.mrb[0].mxu0
        %v3430 = vadd.f32 0.0, %v3429
        %3431 = vmatprep.mubr.bf16.mxu0 0
        %3432 = vmatmul.mubr.bf16.gmra.mrb[0].mxu0 %v3247
        %v3433 = vpop.f32.mrb[0].mxu0
        %v3434 = vadd.f32 0.0, %v3433
        %v3435 = vpop.f32.mrb[0].mxu0
        %v3436 = vadd.f32 0.0, %v3435
        %v3437 = vpop.f32.mrb[0].mxu0
        %v3438 = vadd.f32 0.0, %v3437
        %v3439 = vpop.f32.mrb[0].mxu0
        %v3440 = vadd.f32 0.0, %v3439
        %3441 = vdwg.mxu0
        %v3442 = vmax.f32 %v3284, %v3286
        %3443 = vmax.xlane.f32.xlu0 %v3442
        %v3444 = vpop.xlane.xlu0 %3443
        %v3445 = vmax.f32 %v3288, %v3290
        %3446 = vmax.xlane.f32.xlu0 %v3445
        %v3447 = vpop.xlane.xlu0 %3446
        %v3448 = vmax.f32 %v3294, %v3296
        %3449 = vmax.xlane.f32.xlu0 %v3448
        %v3450 = vpop.xlane.xlu0 %3449
        %v3451 = vmax.f32 %v3298, %v3300
        %3452 = vmax.xlane.f32.xlu0 %v3451
        %v3453 = vpop.xlane.xlu0 %3452
        %v3454 = vmax.f32 %v3304, %v3306
        %3455 = vmax.xlane.f32.xlu0 %v3454
        %v3456 = vpop.xlane.xlu0 %3455
        %v3457 = vmax.f32 %v3308, %v3310
        %3458 = vmax.xlane.f32.xlu0 %v3457
        %v3459 = vpop.xlane.xlu0 %3458
        %v3460 = vmax.f32 %v3314, %v3316
        %3461 = vmax.xlane.f32.xlu0 %v3460
        %v3462 = vpop.xlane.xlu0 %3461
        %v3463 = vmax.f32 %v3318, %v3320
        %3464 = vmax.xlane.f32.xlu0 %v3463
        %v3465 = vpop.xlane.xlu0 %3464
        %v3466 = vmax.f32 %v3324, %v3326
        %3467 = vmax.xlane.f32.xlu0 %v3466
        %v3468 = vpop.xlane.xlu0 %3467
        %v3469 = vmax.f32 %v3328, %v3330
        %3470 = vmax.xlane.f32.xlu0 %v3469
        %v3471 = vpop.xlane.xlu0 %3470
        %v3472 = vmax.f32 %v3334, %v3336
        %3473 = vmax.xlane.f32.xlu0 %v3472
        %v3474 = vpop.xlane.xlu0 %3473
        %v3475 = vmax.f32 %v3338, %v3340
        %3476 = vmax.xlane.f32.xlu0 %v3475
        %v3477 = vpop.xlane.xlu0 %3476
        %v3478 = vmax.f32 %v3344, %v3346
        %3479 = vmax.xlane.f32.xlu0 %v3478
        %v3480 = vpop.xlane.xlu0 %3479
        %v3481 = vmax.f32 %v3348, %v3350
        %3482 = vmax.xlane.f32.xlu0 %v3481
        %v3483 = vpop.xlane.xlu0 %3482
        %v3484 = vmax.f32 %v3354, %v3356
        %3485 = vmax.xlane.f32.xlu0 %v3484
        %v3486 = vpop.xlane.xlu0 %3485
        %v3487 = vmax.f32 %v3358, %v3360
        %3488 = vmax.xlane.f32.xlu0 %v3487
        %v3489 = vpop.xlane.xlu0 %3488
        %v3490 = vmax.f32 %v3364, %v3366
        %3491 = vmax.xlane.f32.xlu0 %v3490
        %v3492 = vpop.xlane.xlu0 %3491
        %v3493 = vmax.f32 %v3368, %v3370
        %3494 = vmax.xlane.f32.xlu0 %v3493
        %v3495 = vpop.xlane.xlu0 %3494
        %v3496 = vmax.f32 %v3374, %v3376
        %3497 = vmax.xlane.f32.xlu0 %v3496
        %v3498 = vpop.xlane.xlu0 %3497
        %v3499 = vmax.f32 %v3378, %v3380
        %3500 = vmax.xlane.f32.xlu0 %v3499
        %v3501 = vpop.xlane.xlu0 %3500
        %v3502 = vmax.f32 %v3384, %v3386
        %3503 = vmax.xlane.f32.xlu0 %v3502
        %v3504 = vpop.xlane.xlu0 %3503
        %v3505 = vmax.f32 %v3388, %v3390
        %3506 = vmax.xlane.f32.xlu0 %v3505
        %v3507 = vpop.xlane.xlu0 %3506
        %v3508 = vmax.f32 %v3394, %v3396
        %3509 = vmax.xlane.f32.xlu0 %v3508
        %v3510 = vpop.xlane.xlu0 %3509
        %v3511 = vmax.f32 %v3398, %v3400
        %3512 = vmax.xlane.f32.xlu0 %v3511
        %v3513 = vpop.xlane.xlu0 %3512
        %v3514 = vmax.f32 %v3404, %v3406
        %3515 = vmax.xlane.f32.xlu0 %v3514
        %v3516 = vpop.xlane.xlu0 %3515
        %v3517 = vmax.f32 %v3408, %v3410
        %3518 = vmax.xlane.f32.xlu0 %v3517
        %v3519 = vpop.xlane.xlu0 %3518
        %v3520 = vmax.f32 %v3414, %v3416
        %3521 = vmax.xlane.f32.xlu0 %v3520
        %v3522 = vpop.xlane.xlu0 %3521
        %v3523 = vmax.f32 %v3418, %v3420
        %3524 = vmax.xlane.f32.xlu0 %v3523
        %v3525 = vpop.xlane.xlu0 %3524
        %v3526 = vmax.f32 %v3424, %v3426
        %3527 = vmax.xlane.f32.xlu0 %v3526
        %v3528 = vpop.xlane.xlu0 %3527
        %v3529 = vmax.f32 %v3428, %v3430
        %3530 = vmax.xlane.f32.xlu0 %v3529
        %v3531 = vpop.xlane.xlu0 %3530
        %v3532 = vmax.f32 %v3434, %v3436
        %3533 = vmax.xlane.f32.xlu0 %v3532
        %v3534 = vpop.xlane.xlu0 %3533
        %v3535 = vmax.f32 %v3438, %v3440
        %3536 = vmax.xlane.f32.xlu0 %v3535
        %v3537 = vpop.xlane.xlu0 %3536
        %v3538 = vsub.f32 %v3284, %v3444
        %v3539 = vsub.f32 %v3286, %v3444
        %v3540 = vsub.f32 %v3288, %v3447
        %v3541 = vsub.f32 %v3290, %v3447
        %v3542 = vsub.f32 %v3294, %v3450
        %v3543 = vsub.f32 %v3296, %v3450
        %v3544 = vsub.f32 %v3298, %v3453
        %v3545 = vsub.f32 %v3300, %v3453
        %v3546 = vsub.f32 %v3304, %v3456
        %v3547 = vsub.f32 %v3306, %v3456
        %v3548 = vsub.f32 %v3308, %v3459
        %v3549 = vsub.f32 %v3310, %v3459
        %v3550 = vsub.f32 %v3314, %v3462
        %v3551 = vsub.f32 %v3316, %v3462
        %v3552 = vsub.f32 %v3318, %v3465
        %v3553 = vsub.f32 %v3320, %v3465
        %v3554 = vsub.f32 %v3324, %v3468
        %v3555 = vsub.f32 %v3326, %v3468
        %v3556 = vsub.f32 %v3328, %v3471
        %v3557 = vsub.f32 %v3330, %v3471
        %v3558 = vsub.f32 %v3334, %v3474
        %v3559 = vsub.f32 %v3336, %v3474
        %v3560 = vsub.f32 %v3338, %v3477
        %v3561 = vsub.f32 %v3340, %v3477
        %v3562 = vsub.f32 %v3344, %v3480
        %v3563 = vsub.f32 %v3346, %v3480
        %v3564 = vsub.f32 %v3348, %v3483
        %v3565 = vsub.f32 %v3350, %v3483
        %v3566 = vsub.f32 %v3354, %v3486
        %v3567 = vsub.f32 %v3356, %v3486
        %v3568 = vsub.f32 %v3358, %v3489
        %v3569 = vsub.f32 %v3360, %v3489
        %v3570 = vsub.f32 %v3364, %v3492
        %v3571 = vsub.f32 %v3366, %v3492
        %v3572 = vsub.f32 %v3368, %v3495
        %v3573 = vsub.f32 %v3370, %v3495
        %v3574 = vsub.f32 %v3374, %v3498
        %v3575 = vsub.f32 %v3376, %v3498
        %v3576 = vsub.f32 %v3378, %v3501
        %v3577 = vsub.f32 %v3380, %v3501
        %v3578 = vsub.f32 %v3384, %v3504
        %v3579 = vsub.f32 %v3386, %v3504
        %v3580 = vsub.f32 %v3388, %v3507
        %v3581 = vsub.f32 %v3390, %v3507
        %v3582 = vsub.f32 %v3394, %v3510
        %v3583 = vsub.f32 %v3396, %v3510
        %v3584 = vsub.f32 %v3398, %v3513
        %v3585 = vsub.f32 %v3400, %v3513
        %v3586 = vsub.f32 %v3404, %v3516
        %v3587 = vsub.f32 %v3406, %v3516
        %v3588 = vsub.f32 %v3408, %v3519
        %v3589 = vsub.f32 %v3410, %v3519
        %v3590 = vsub.f32 %v3414, %v3522
        %v3591 = vsub.f32 %v3416, %v3522
        %v3592 = vsub.f32 %v3418, %v3525
        %v3593 = vsub.f32 %v3420, %v3525
        %v3594 = vsub.f32 %v3424, %v3528
        %v3595 = vsub.f32 %v3426, %v3528
        %v3596 = vsub.f32 %v3428, %v3531
        %v3597 = vsub.f32 %v3430, %v3531
        %v3598 = vsub.f32 %v3434, %v3534
        %v3599 = vsub.f32 %v3436, %v3534
        %v3600 = vsub.f32 %v3438, %v3537
        %v3601 = vsub.f32 %v3440, %v3537
        %v3602 = vmul.f32 %v3538, 1.442695
        %v3603 = vpow.pop %v3602
        %v3604 = vmul.f32 %v3539, 1.442695
        %v3605 = vpow.pop %v3604
        %v3606 = vmul.f32 %v3540, 1.442695
        %v3607 = vpow.pop %v3606
        %v3608 = vmul.f32 %v3541, 1.442695
        %v3609 = vpow.pop %v3608
        %v3610 = vmul.f32 %v3542, 1.442695
        %v3611 = vpow.pop %v3610
        %v3612 = vmul.f32 %v3543, 1.442695
        %v3613 = vpow.pop %v3612
        %v3614 = vmul.f32 %v3544, 1.442695
        %v3615 = vpow.pop %v3614
        %v3616 = vmul.f32 %v3545, 1.442695
        %v3617 = vpow.pop %v3616
        %v3618 = vmul.f32 %v3546, 1.442695
        %v3619 = vpow.pop %v3618
        %v3620 = vmul.f32 %v3547, 1.442695
        %v3621 = vpow.pop %v3620
        %v3622 = vmul.f32 %v3548, 1.442695
        %v3623 = vpow.pop %v3622
        %v3624 = vmul.f32 %v3549, 1.442695
        %v3625 = vpow.pop %v3624
        %v3626 = vmul.f32 %v3550, 1.442695
        %v3627 = vpow.pop %v3626
        %v3628 = vmul.f32 %v3551, 1.442695
        %v3629 = vpow.pop %v3628
        %v3630 = vmul.f32 %v3552, 1.442695
        %v3631 = vpow.pop %v3630
        %v3632 = vmul.f32 %v3553, 1.442695
        %v3633 = vpow.pop %v3632
        %v3634 = vmul.f32 %v3554, 1.442695
        %v3635 = vpow.pop %v3634
        %v3636 = vmul.f32 %v3555, 1.442695
        %v3637 = vpow.pop %v3636
        %v3638 = vmul.f32 %v3556, 1.442695
        %v3639 = vpow.pop %v3638
        %v3640 = vmul.f32 %v3557, 1.442695
        %v3641 = vpow.pop %v3640
        %v3642 = vmul.f32 %v3558, 1.442695
        %v3643 = vpow.pop %v3642
        %v3644 = vmul.f32 %v3559, 1.442695
        %v3645 = vpow.pop %v3644
        %v3646 = vmul.f32 %v3560, 1.442695
        %v3647 = vpow.pop %v3646
        %v3648 = vmul.f32 %v3561, 1.442695
        %v3649 = vpow.pop %v3648
        %v3650 = vmul.f32 %v3562, 1.442695
        %v3651 = vpow.pop %v3650
        %v3652 = vmul.f32 %v3563, 1.442695
        %v3653 = vpow.pop %v3652
        %v3654 = vmul.f32 %v3564, 1.442695
        %v3655 = vpow.pop %v3654
        %v3656 = vmul.f32 %v3565, 1.442695
        %v3657 = vpow.pop %v3656
        %v3658 = vmul.f32 %v3566, 1.442695
        %v3659 = vpow.pop %v3658
        %v3660 = vmul.f32 %v3567, 1.442695
        %v3661 = vpow.pop %v3660
        %v3662 = vmul.f32 %v3568, 1.442695
        %v3663 = vpow.pop %v3662
        %v3664 = vmul.f32 %v3569, 1.442695
        %v3665 = vpow.pop %v3664
        %v3666 = vmul.f32 %v3570, 1.442695
        %v3667 = vpow.pop %v3666
        %v3668 = vmul.f32 %v3571, 1.442695
        %v3669 = vpow.pop %v3668
        %v3670 = vmul.f32 %v3572, 1.442695
        %v3671 = vpow.pop %v3670
        %v3672 = vmul.f32 %v3573, 1.442695
        %v3673 = vpow.pop %v3672
        %v3674 = vmul.f32 %v3574, 1.442695
        %v3675 = vpow.pop %v3674
        %v3676 = vmul.f32 %v3575, 1.442695
        %v3677 = vpow.pop %v3676
        %v3678 = vmul.f32 %v3576, 1.442695
        %v3679 = vpow.pop %v3678
        %v3680 = vmul.f32 %v3577, 1.442695
        %v3681 = vpow.pop %v3680
        %v3682 = vmul.f32 %v3578, 1.442695
        %v3683 = vpow.pop %v3682
        %v3684 = vmul.f32 %v3579, 1.442695
        %v3685 = vpow.pop %v3684
        %v3686 = vmul.f32 %v3580, 1.442695
        %v3687 = vpow.pop %v3686
        %v3688 = vmul.f32 %v3581, 1.442695
        %v3689 = vpow.pop %v3688
        %v3690 = vmul.f32 %v3582, 1.442695
        %v3691 = vpow.pop %v3690
        %v3692 = vmul.f32 %v3583, 1.442695
        %v3693 = vpow.pop %v3692
        %v3694 = vmul.f32 %v3584, 1.442695
        %v3695 = vpow.pop %v3694
        %v3696 = vmul.f32 %v3585, 1.442695
        %v3697 = vpow.pop %v3696
        %v3698 = vmul.f32 %v3586, 1.442695
        %v3699 = vpow.pop %v3698
        %v3700 = vmul.f32 %v3587, 1.442695
        %v3701 = vpow.pop %v3700
        %v3702 = vmul.f32 %v3588, 1.442695
        %v3703 = vpow.pop %v3702
        %v3704 = vmul.f32 %v3589, 1.442695
        %v3705 = vpow.pop %v3704
        %v3706 = vmul.f32 %v3590, 1.442695
        %v3707 = vpow.pop %v3706
        %v3708 = vmul.f32 %v3591, 1.442695
        %v3709 = vpow.pop %v3708
        %v3710 = vmul.f32 %v3592, 1.442695
        %v3711 = vpow.pop %v3710
        %v3712 = vmul.f32 %v3593, 1.442695
        %v3713 = vpow.pop %v3712
        %v3714 = vmul.f32 %v3594, 1.442695
        %v3715 = vpow.pop %v3714
        %v3716 = vmul.f32 %v3595, 1.442695
        %v3717 = vpow.pop %v3716
        %v3718 = vmul.f32 %v3596, 1.442695
        %v3719 = vpow.pop %v3718
        %v3720 = vmul.f32 %v3597, 1.442695
        %v3721 = vpow.pop %v3720
        %v3722 = vmul.f32 %v3598, 1.442695
        %v3723 = vpow.pop %v3722
        %v3724 = vmul.f32 %v3599, 1.442695
        %v3725 = vpow.pop %v3724
        %v3726 = vmul.f32 %v3600, 1.442695
        %v3727 = vpow.pop %v3726
        %v3728 = vmul.f32 %v3601, 1.442695
        %v3729 = vpow.pop %v3728
        %v3730 = vadd.f32 %v3603, %v3605
        %3731 = vadd.xlane.f32.xlu0 %v3730
        %v3732 = vpop.xlane.xlu0 %3731
        %v3733 = vadd.f32 %v3607, %v3609
        %3734 = vadd.xlane.f32.xlu0 %v3733
        %v3735 = vpop.xlane.xlu0 %3734
        %v3736 = vadd.f32 %v3611, %v3613
        %3737 = vadd.xlane.f32.xlu0 %v3736
        %v3738 = vpop.xlane.xlu0 %3737
        %v3739 = vadd.f32 %v3615, %v3617
        %3740 = vadd.xlane.f32.xlu0 %v3739
        %v3741 = vpop.xlane.xlu0 %3740
        %v3742 = vadd.f32 %v3619, %v3621
        %3743 = vadd.xlane.f32.xlu0 %v3742
        %v3744 = vpop.xlane.xlu0 %3743
        %v3745 = vadd.f32 %v3623, %v3625
        %3746 = vadd.xlane.f32.xlu0 %v3745
        %v3747 = vpop.xlane.xlu0 %3746
        %v3748 = vadd.f32 %v3627, %v3629
        %3749 = vadd.xlane.f32.xlu0 %v3748
        %v3750 = vpop.xlane.xlu0 %3749
        %v3751 = vadd.f32 %v3631, %v3633
        %3752 = vadd.xlane.f32.xlu0 %v3751
        %v3753 = vpop.xlane.xlu0 %3752
        %v3754 = vadd.f32 %v3635, %v3637
        %3755 = vadd.xlane.f32.xlu0 %v3754
        %v3756 = vpop.xlane.xlu0 %3755
        %v3757 = vadd.f32 %v3639, %v3641
        %3758 = vadd.xlane.f32.xlu0 %v3757
        %v3759 = vpop.xlane.xlu0 %3758
        %v3760 = vadd.f32 %v3643, %v3645
        %3761 = vadd.xlane.f32.xlu0 %v3760
        %v3762 = vpop.xlane.xlu0 %3761
        %v3763 = vadd.f32 %v3647, %v3649
        %3764 = vadd.xlane.f32.xlu0 %v3763
        %v3765 = vpop.xlane.xlu0 %3764
        %v3766 = vadd.f32 %v3651, %v3653
        %3767 = vadd.xlane.f32.xlu0 %v3766
        %v3768 = vpop.xlane.xlu0 %3767
        %v3769 = vadd.f32 %v3655, %v3657
        %3770 = vadd.xlane.f32.xlu0 %v3769
        %v3771 = vpop.xlane.xlu0 %3770
        %v3772 = vadd.f32 %v3659, %v3661
        %3773 = vadd.xlane.f32.xlu0 %v3772
        %v3774 = vpop.xlane.xlu0 %3773
        %v3775 = vadd.f32 %v3663, %v3665
        %3776 = vadd.xlane.f32.xlu0 %v3775
        %v3777 = vpop.xlane.xlu0 %3776
        %v3778 = vadd.f32 %v3667, %v3669
        %3779 = vadd.xlane.f32.xlu0 %v3778
        %v3780 = vpop.xlane.xlu0 %3779
        %v3781 = vadd.f32 %v3671, %v3673
        %3782 = vadd.xlane.f32.xlu0 %v3781
        %v3783 = vpop.xlane.xlu0 %3782
        %v3784 = vadd.f32 %v3675, %v3677
        %3785 = vadd.xlane.f32.xlu0 %v3784
        %v3786 = vpop.xlane.xlu0 %3785
        %v3787 = vadd.f32 %v3679, %v3681
        %3788 = vadd.xlane.f32.xlu0 %v3787
        %v3789 = vpop.xlane.xlu0 %3788
        %v3790 = vadd.f32 %v3683, %v3685
        %3791 = vadd.xlane.f32.xlu0 %v3790
        %v3792 = vpop.xlane.xlu0 %3791
        %v3793 = vadd.f32 %v3687, %v3689
        %3794 = vadd.xlane.f32.xlu0 %v3793
        %v3795 = vpop.xlane.xlu0 %3794
        %v3796 = vadd.f32 %v3691, %v3693
        %3797 = vadd.xlane.f32.xlu0 %v3796
        %v3798 = vpop.xlane.xlu0 %3797
        %v3799 = vadd.f32 %v3695, %v3697
        %3800 = vadd.xlane.f32.xlu0 %v3799
        %v3801 = vpop.xlane.xlu0 %3800
        %v3802 = vadd.f32 %v3699, %v3701
        %3803 = vadd.xlane.f32.xlu0 %v3802
        %v3804 = vpop.xlane.xlu0 %3803
        %v3805 = vadd.f32 %v3703, %v3705
        %3806 = vadd.xlane.f32.xlu0 %v3805
        %v3807 = vpop.xlane.xlu0 %3806
        %v3808 = vadd.f32 %v3707, %v3709
        %3809 = vadd.xlane.f32.xlu0 %v3808
        %v3810 = vpop.xlane.xlu0 %3809
        %v3811 = vadd.f32 %v3711, %v3713
        %3812 = vadd.xlane.f32.xlu0 %v3811
        %v3813 = vpop.xlane.xlu0 %3812
        %v3814 = vadd.f32 %v3715, %v3717
        %3815 = vadd.xlane.f32.xlu0 %v3814
        %v3816 = vpop.xlane.xlu0 %3815
        %v3817 = vadd.f32 %v3719, %v3721
        %3818 = vadd.xlane.f32.xlu0 %v3817
        %v3819 = vpop.xlane.xlu0 %3818
        %v3820 = vadd.f32 %v3723, %v3725
        %3821 = vadd.xlane.f32.xlu0 %v3820
        %v3822 = vpop.xlane.xlu0 %3821
        %v3823 = vadd.f32 %v3727, %v3729
        %3824 = vadd.xlane.f32.xlu0 %v3823
        %v3825 = vpop.xlane.xlu0 %3824
        %v3826 = vrcp.pop %v3732
        %v3827 = vrcp.pop %v3735
        %v3828 = vrcp.pop %v3738
        %v3829 = vrcp.pop %v3741
        %v3830 = vrcp.pop %v3744
        %v3831 = vrcp.pop %v3747
        %v3832 = vrcp.pop %v3750
        %v3833 = vrcp.pop %v3753
        %v3834 = vrcp.pop %v3756
        %v3835 = vrcp.pop %v3759
        %v3836 = vrcp.pop %v3762
        %v3837 = vrcp.pop %v3765
        %v3838 = vrcp.pop %v3768
        %v3839 = vrcp.pop %v3771
        %v3840 = vrcp.pop %v3774
        %v3841 = vrcp.pop %v3777
        %v3842 = vrcp.pop %v3780
        %v3843 = vrcp.pop %v3783
        %v3844 = vrcp.pop %v3786
        %v3845 = vrcp.pop %v3789
        %v3846 = vrcp.pop %v3792
        %v3847 = vrcp.pop %v3795
        %v3848 = vrcp.pop %v3798
        %v3849 = vrcp.pop %v3801
        %v3850 = vrcp.pop %v3804
        %v3851 = vrcp.pop %v3807
        %v3852 = vrcp.pop %v3810
        %v3853 = vrcp.pop %v3813
        %v3854 = vrcp.pop %v3816
        %v3855 = vrcp.pop %v3819
        %v3856 = vrcp.pop %v3822
        %v3857 = vrcp.pop %v3825
        %v3858 = vmul.f32 %v3603, %v3826
        %v3859 = vmul.f32 %v3605, %v3826
        %v3860 = vmul.f32 %v3607, %v3827
        %v3861 = vmul.f32 %v3609, %v3827
        %v3862 = vmul.f32 %v3611, %v3828
        %v3863 = vmul.f32 %v3613, %v3828
        %v3864 = vmul.f32 %v3615, %v3829
        %v3865 = vmul.f32 %v3617, %v3829
        %v3866 = vmul.f32 %v3619, %v3830
        %v3867 = vmul.f32 %v3621, %v3830
        %v3868 = vmul.f32 %v3623, %v3831
        %v3869 = vmul.f32 %v3625, %v3831
        %v3870 = vmul.f32 %v3627, %v3832
        %v3871 = vmul.f32 %v3629, %v3832
        %v3872 = vmul.f32 %v3631, %v3833
        %v3873 = vmul.f32 %v3633, %v3833
        %v3874 = vmul.f32 %v3635, %v3834
        %v3875 = vmul.f32 %v3637, %v3834
        %v3876 = vmul.f32 %v3639, %v3835
        %v3877 = vmul.f32 %v3641, %v3835
        %v3878 = vmul.f32 %v3643, %v3836
        %v3879 = vmul.f32 %v3645, %v3836
        %v3880 = vmul.f32 %v3647, %v3837
        %v3881 = vmul.f32 %v3649, %v3837
        %v3882 = vmul.f32 %v3651, %v3838
        %v3883 = vmul.f32 %v3653, %v3838
        %v3884 = vmul.f32 %v3655, %v3839
        %v3885 = vmul.f32 %v3657, %v3839
        %v3886 = vmul.f32 %v3659, %v3840
        %v3887 = vmul.f32 %v3661, %v3840
        %v3888 = vmul.f32 %v3663, %v3841
        %v3889 = vmul.f32 %v3665, %v3841
        %v3890 = vmul.f32 %v3667, %v3842
        %v3891 = vmul.f32 %v3669, %v3842
        %v3892 = vmul.f32 %v3671, %v3843
        %v3893 = vmul.f32 %v3673, %v3843
        %v3894 = vmul.f32 %v3675, %v3844
        %v3895 = vmul.f32 %v3677, %v3844
        %v3896 = vmul.f32 %v3679, %v3845
        %v3897 = vmul.f32 %v3681, %v3845
        %v3898 = vmul.f32 %v3683, %v3846
        %v3899 = vmul.f32 %v3685, %v3846
        %v3900 = vmul.f32 %v3687, %v3847
        %v3901 = vmul.f32 %v3689, %v3847
        %v3902 = vmul.f32 %v3691, %v3848
        %v3903 = vmul.f32 %v3693, %v3848
        %v3904 = vmul.f32 %v3695, %v3849
        %v3905 = vmul.f32 %v3697, %v3849
        %v3906 = vmul.f32 %v3699, %v3850
        %v3907 = vmul.f32 %v3701, %v3850
        %v3908 = vmul.f32 %v3703, %v3851
        %v3909 = vmul.f32 %v3705, %v3851
        %v3910 = vmul.f32 %v3707, %v3852
        %v3911 = vmul.f32 %v3709, %v3852
        %v3912 = vmul.f32 %v3711, %v3853
        %v3913 = vmul.f32 %v3713, %v3853
        %v3914 = vmul.f32 %v3715, %v3854
        %v3915 = vmul.f32 %v3717, %v3854
        %v3916 = vmul.f32 %v3719, %v3855
        %v3917 = vmul.f32 %v3721, %v3855
        %v3918 = vmul.f32 %v3723, %v3856
        %v3919 = vmul.f32 %v3725, %v3856
        %v3920 = vmul.f32 %v3727, %v3857
        %v3921 = vmul.f32 %v3729, %v3857
        %v3922 = vpack.c.bf16 %v3860, %v3858
        %v3923 = vpack.c.bf16 %v3861, %v3859
        %v3924 = vpack.c.bf16 %v3864, %v3862
        %v3925 = vpack.c.bf16 %v3865, %v3863
        %v3926 = vpack.c.bf16 %v3868, %v3866
        %v3927 = vpack.c.bf16 %v3869, %v3867
        %v3928 = vpack.c.bf16 %v3872, %v3870
        %v3929 = vpack.c.bf16 %v3873, %v3871
        %v3930 = vpack.c.bf16 %v3876, %v3874
        %v3931 = vpack.c.bf16 %v3877, %v3875
        %v3932 = vpack.c.bf16 %v3880, %v3878
        %v3933 = vpack.c.bf16 %v3881, %v3879
        %v3934 = vpack.c.bf16 %v3884, %v3882
        %v3935 = vpack.c.bf16 %v3885, %v3883
        %v3936 = vpack.c.bf16 %v3888, %v3886
        %v3937 = vpack.c.bf16 %v3889, %v3887
        %v3938 = vpack.c.bf16 %v3892, %v3890
        %v3939 = vpack.c.bf16 %v3893, %v3891
        %v3940 = vpack.c.bf16 %v3896, %v3894
        %v3941 = vpack.c.bf16 %v3897, %v3895
        %v3942 = vpack.c.bf16 %v3900, %v3898
        %v3943 = vpack.c.bf16 %v3901, %v3899
        %v3944 = vpack.c.bf16 %v3904, %v3902
        %v3945 = vpack.c.bf16 %v3905, %v3903
        %v3946 = vpack.c.bf16 %v3908, %v3906
        %v3947 = vpack.c.bf16 %v3909, %v3907
        %v3948 = vpack.c.bf16 %v3912, %v3910
        %v3949 = vpack.c.bf16 %v3913, %v3911
        %v3950 = vpack.c.bf16 %v3916, %v3914
        %v3951 = vpack.c.bf16 %v3917, %v3915
        %v3952 = vpack.c.bf16 %v3920, %v3918
        %v3953 = vpack.c.bf16 %v3921, %v3919
        %3954 = vmatprep.subr.bf16.mxu0 %v3923
        %3955 = vmatpush1.bf16.xpose.msra.mxu0 %v3922
        %3956 = vmatprep.subr.bf16.mxu0 %v3925
        %3957 = vmatpush1.bf16.xpose.msra.mxu0 %v3924
        %3958 = vmatprep.subr.bf16.mxu0 %v3927
        %3959 = vmatpush1.bf16.xpose.msra.mxu0 %v3926
        %3960 = vmatprep.subr.bf16.mxu0 %v3929
        %3961 = vmatpush1.bf16.xpose.msra.mxu0 %v3928
        %3962 = vmatprep.subr.bf16.mxu0 %v3931
        %3963 = vmatpush1.bf16.xpose.msra.mxu0 %v3930
        %3964 = vmatprep.subr.bf16.mxu0 %v3933
        %3965 = vmatpush1.bf16.xpose.msra.mxu0 %v3932
        %3966 = vmatprep.subr.bf16.mxu0 %v3935
        %3967 = vmatpush1.bf16.xpose.msra.mxu0 %v3934
        %3968 = vmatprep.subr.bf16.mxu0 %v3937
        %3969 = vmatpush1.bf16.xpose.msra.mxu0 %v3936
        %3970 = vmatprep.subr.bf16.mxu0 %v3939
        %3971 = vmatpush1.bf16.xpose.msra.mxu0 %v3938
        %3972 = vmatprep.subr.bf16.mxu0 %v3941
        %3973 = vmatpush1.bf16.xpose.msra.mxu0 %v3940
        %3974 = vmatprep.subr.bf16.mxu0 %v3943
        %3975 = vmatpush1.bf16.xpose.msra.mxu0 %v3942
        %3976 = vmatprep.subr.bf16.mxu0 %v3945
        %3977 = vmatpush1.bf16.xpose.msra.mxu0 %v3944
        %3978 = vmatprep.subr.bf16.mxu0 %v3947
        %3979 = vmatpush1.bf16.xpose.msra.mxu0 %v3946
        %3980 = vmatprep.subr.bf16.mxu0 %v3949
        %3981 = vmatpush1.bf16.xpose.msra.mxu0 %v3948
        %3982 = vmatprep.subr.bf16.mxu0 %v3951
        %3983 = vmatpush1.bf16.xpose.msra.mxu0 %v3950
        %3984 = vmatprep.subr.bf16.mxu0 %v3953
        %3985 = vmatpush1.bf16.xpose.msra.mxu0 %v3952
        %3986 = vmatprep.mubr.bf16.mxu0 %v3198
        %3987 = vmatmul.mubr.bf16.gmra.mrb[0].mxu0 %v3197
        %v3988 = vpop.f32.mrb[0].mxu0
        %v3989 = vadd.f32 0.0, %v3988
        %v3990 = vpop.f32.mrb[0].mxu0
        %v3991 = vadd.f32 0.0, %v3990
        %v3992 = vpop.f32.mrb[0].mxu0
        %v3993 = vadd.f32 0.0, %v3992
        %v3994 = vpop.f32.mrb[0].mxu0
        %v3995 = vadd.f32 0.0, %v3994
        %3996 = vmatprep.mubr.bf16.mxu0 %v3200
        %3997 = vmatmul.mubr.bf16.gmra.mrb[0].mxu0 %v3199
        %v3998 = vpop.f32.mrb[0].mxu0
        %v3999 = vadd.f32 0.0, %v3998
        %v4000 = vpop.f32.mrb[0].mxu0
        %v4001 = vadd.f32 0.0, %v4000
        %v4002 = vpop.f32.mrb[0].mxu0
        %v4003 = vadd.f32 0.0, %v4002
        %v4004 = vpop.f32.mrb[0].mxu0
        %v4005 = vadd.f32 0.0, %v4004
        %4006 = vdwg.mxu0
        %v4007 = vpack.c.bf16 %v3993, %v3989
        %v4008 = vpack.c.bf16 %v3995, %v3991
        %v4009 = vpack.c.bf16 %v4003, %v3999
        %v4010 = vpack.c.bf16 %v4005, %v4001
        %4011 = vst [vmem:[#allocation3 + $0x40] sm:$0xff] %v4007
        %4012 = vst [vmem:[#allocation3 + $0x48] sm:$0xff] %v4008
        %4013 = vst [vmem:[#allocation3 + $0x50] sm:$0xff] %v4009
        %4014 = vst [vmem:[#allocation3 + $0x58] sm:$0xff] %v4010
        %4015 = vxpose.xlu0.b32.start [1/16] %v1290, 128
        %4016 = vxpose.xlu0.b32.cont [2/16] %v1294, 128
        %4017 = vxpose.xlu0.b32.cont [3/16] %v1300, 128
        %4018 = vxpose.xlu0.b32.cont [4/16] %v1304, 128
        %4019 = vxpose.xlu0.b32.cont [5/16] 0.0, 128
        %4020 = vxpose.xlu0.b32.cont [6/16] 0.0, 128
        %4021 = vxpose.xlu0.b32.cont [7/16] 0.0, 128
        %4022 = vxpose.xlu0.b32.cont [8/16] 0.0, 128
        %4023 = vxpose.xlu0.b32.cont [9/16] 0.0, 128
        %4024 = vxpose.xlu0.b32.cont [10/16] 0.0, 128
        %4025 = vxpose.xlu0.b32.cont [11/16] 0.0, 128
        %4026 = vxpose.xlu0.b32.cont [12/16] 0.0, 128
        %4027 = vxpose.xlu0.b32.cont [13/16] 0.0, 128
        %4028 = vxpose.xlu0.b32.cont [14/16] 0.0, 128
        %4029 = vxpose.xlu0.b32.cont [15/16] 0.0, 128
        %4030 = vxpose.xlu0.b32.end [16/16] 0.0, 128
        %v4031 = vpop.trf.xlu0
        %v4032 = vpop.trf.xlu0
        %v4033 = vpop.trf.xlu0
        %v4034 = vpop.trf.xlu0
        %v4035 = vpop.trf.xlu0
        %v4036 = vpop.trf.xlu0
        %v4037 = vpop.trf.xlu0
        %v4038 = vpop.trf.xlu0
        %v4039 = vpop.trf.xlu0
        %v4040 = vpop.trf.xlu0
        %v4041 = vpop.trf.xlu0
        %v4042 = vpop.trf.xlu0
        %v4043 = vpop.trf.xlu0
        %v4044 = vpop.trf.xlu0
        %v4045 = vpop.trf.xlu0
        %v4046 = vpop.trf.xlu0
        %4047 = vxpose.xlu0.b32.start [1/16] %v1292, 128
        %4048 = vxpose.xlu0.b32.cont [2/16] %v1296, 128
        %4049 = vxpose.xlu0.b32.cont [3/16] %v1302, 128
        %4050 = vxpose.xlu0.b32.cont [4/16] %v1306, 128
        %4051 = vxpose.xlu0.b32.cont [5/16] 0.0, 128
        %4052 = vxpose.xlu0.b32.cont [6/16] 0.0, 128
        %4053 = vxpose.xlu0.b32.cont [7/16] 0.0, 128
        %4054 = vxpose.xlu0.b32.cont [8/16] 0.0, 128
        %4055 = vxpose.xlu0.b32.cont [9/16] 0.0, 128
        %4056 = vxpose.xlu0.b32.cont [10/16] 0.0, 128
        %4057 = vxpose.xlu0.b32.cont [11/16] 0.0, 128
        %4058 = vxpose.xlu0.b32.cont [12/16] 0.0, 128
        %4059 = vxpose.xlu0.b32.cont [13/16] 0.0, 128
        %4060 = vxpose.xlu0.b32.cont [14/16] 0.0, 128
        %4061 = vxpose.xlu0.b32.cont [15/16] 0.0, 128
        %4062 = vxpose.xlu0.b32.end [16/16] 0.0, 128
        %v4063 = vpop.trf.xlu0
        %v4064 = vpop.trf.xlu0
        %v4065 = vpop.trf.xlu0
        %v4066 = vpop.trf.xlu0
        %v4067 = vpop.trf.xlu0
        %v4068 = vpop.trf.xlu0
        %v4069 = vpop.trf.xlu0
        %v4070 = vpop.trf.xlu0
        %v4071 = vpop.trf.xlu0
        %v4072 = vpop.trf.xlu0
        %v4073 = vpop.trf.xlu0
        %v4074 = vpop.trf.xlu0
        %v4075 = vpop.trf.xlu0
        %v4076 = vpop.trf.xlu0
        %v4077 = vpop.trf.xlu0
        %v4078 = vpop.trf.xlu0
        %v4079 = vpack.c.bf16 %v4032, %v4031
        %v4080 = vpack.c.bf16 %v4034, %v4033
        %v4081 = vpack.c.bf16 %v4036, %v4035
        %v4082 = vpack.c.bf16 %v4038, %v4037
        %v4083 = vpack.c.bf16 %v4040, %v4039
        %v4084 = vpack.c.bf16 %v4042, %v4041
        %v4085 = vpack.c.bf16 %v4044, %v4043
        %v4086 = vpack.c.bf16 %v4046, %v4045
        %v4087 = vpack.c.bf16 %v4064, %v4063
        %v4088 = vpack.c.bf16 %v4066, %v4065
        %v4089 = vpack.c.bf16 %v4068, %v4067
        %v4090 = vpack.c.bf16 %v4070, %v4069
        %v4091 = vpack.c.bf16 %v4072, %v4071
        %v4092 = vpack.c.bf16 %v4074, %v4073
        %v4093 = vpack.c.bf16 %v4076, %v4075
        %v4094 = vpack.c.bf16 %v4078, %v4077
        %v4095 = vld [vmem:[#allocation2 + $0x60] sm:$0xff]
        %v4096 = vld [vmem:[#allocation2 + $0x68] sm:$0xff]
        %v4097 = vld [vmem:[#allocation2 + $0x70] sm:$0xff]
        %v4098 = vld [vmem:[#allocation2 + $0x78] sm:$0xff]
        %v4099 = vld [vmem:[#allocation2 + $0xe0] sm:$0xff]
        %v4100 = vld [vmem:[#allocation2 + $0xe8] sm:$0xff]
        %v4101 = vld [vmem:[#allocation2 + $0xf0] sm:$0xff]
        %v4102 = vld [vmem:[#allocation2 + $0xf8] sm:$0xff]
        %v4104 = vsel %vm1396, %v4079, 0
        %v4107 = vsel %vm1396, %v4080, 0
        %v4110 = vsel %vm1396, %v4081, 0
        %v4113 = vsel %vm1396, %v4082, 0
        %v4116 = vsel %vm1396, %v4083, 0
        %v4119 = vsel %vm1396, %v4084, 0
        %v4122 = vsel %vm1396, %v4085, 0
        %v4125 = vsel %vm1396, %v4086, 0
        %v4128 = vsel %vm1396, %v4087, 0
        %v4131 = vsel %vm1396, %v4088, 0
        %v4134 = vsel %vm1396, %v4089, 0
        %v4137 = vsel %vm1396, %v4090, 0
        %v4140 = vsel %vm1396, %v4091, 0
        %v4143 = vsel %vm1396, %v4092, 0
        %v4146 = vsel %vm1396, %v4093, 0
        %v4149 = vsel %vm1396, %v4094, 0
        %4151 = vmatprep.subr.bf16.mxu0 %v4096
        %4152 = vmatpush1.bf16.msra.mxu0 %v4095
        %4153 = vmatprep.subr.bf16.mxu0 %v4098
        %4154 = vmatpush1.bf16.msra.mxu0 %v4097
        %4155 = vmatprep.subr.bf16.mxu0 0
        %4156 = vmatpush1.bf16.msra.mxu0 0
        %4157 = vmatprep.subr.bf16.mxu0 0
        %4158 = vmatpush1.bf16.msra.mxu0 0
        %4159 = vmatprep.subr.bf16.mxu0 0
        %4160 = vmatpush1.bf16.msra.mxu0 0
        %4161 = vmatprep.subr.bf16.mxu0 0
        %4162 = vmatpush1.bf16.msra.mxu0 0
        %4163 = vmatprep.subr.bf16.mxu0 0
        %4164 = vmatpush1.bf16.msra.mxu0 0
        %4165 = vmatprep.subr.bf16.mxu0 0
        %4166 = vmatpush1.bf16.msra.mxu0 0
        %4167 = vmatprep.subr.bf16.mxu0 0
        %4168 = vmatpush1.bf16.msra.mxu0 0
        %4169 = vmatprep.subr.bf16.mxu0 0
        %4170 = vmatpush1.bf16.msra.mxu0 0
        %4171 = vmatprep.subr.bf16.mxu0 0
        %4172 = vmatpush1.bf16.msra.mxu0 0
        %4173 = vmatprep.subr.bf16.mxu0 0
        %4174 = vmatpush1.bf16.msra.mxu0 0
        %4175 = vmatprep.subr.bf16.mxu0 0
        %4176 = vmatpush1.bf16.msra.mxu0 0
        %4177 = vmatprep.subr.bf16.mxu0 0
        %4178 = vmatpush1.bf16.msra.mxu0 0
        %4179 = vmatprep.subr.bf16.mxu0 0
        %4180 = vmatpush1.bf16.msra.mxu0 0
        %4181 = vmatprep.subr.bf16.mxu0 0
        %4182 = vmatpush1.bf16.msra.mxu0 0
        %4183 = vmatprep.mubr.bf16.mxu0 0
        %4184 = vmatmul.mubr.bf16.gmra.mrb[0].mxu0 %v4104
        %v4185 = vpop.f32.mrb[0].mxu0
        %v4186 = vadd.f32 0.0, %v4185
        %v4187 = vpop.f32.mrb[0].mxu0
        %v4188 = vadd.f32 0.0, %v4187
        %v4189 = vpop.f32.mrb[0].mxu0
        %v4190 = vadd.f32 0.0, %v4189
        %v4191 = vpop.f32.mrb[0].mxu0
        %v4192 = vadd.f32 0.0, %v4191
        %4193 = vmatprep.mubr.bf16.mxu0 0
        %4194 = vmatmul.mubr.bf16.gmra.mrb[0].mxu0 %v4107
        %v4195 = vpop.f32.mrb[0].mxu0
        %v4196 = vadd.f32 0.0, %v4195
        %v4197 = vpop.f32.mrb[0].mxu0
        %v4198 = vadd.f32 0.0, %v4197
        %v4199 = vpop.f32.mrb[0].mxu0
        %v4200 = vadd.f32 0.0, %v4199
        %v4201 = vpop.f32.mrb[0].mxu0
        %v4202 = vadd.f32 0.0, %v4201
        %4203 = vmatprep.mubr.bf16.mxu0 0
        %4204 = vmatmul.mubr.bf16.gmra.mrb[0].mxu0 %v4110
        %v4205 = vpop.f32.mrb[0].mxu0
        %v4206 = vadd.f32 0.0, %v4205
        %v4207 = vpop.f32.mrb[0].mxu0
        %v4208 = vadd.f32 0.0, %v4207
        %v4209 = vpop.f32.mrb[0].mxu0
        %v4210 = vadd.f32 0.0, %v4209
        %v4211 = vpop.f32.mrb[0].mxu0
        %v4212 = vadd.f32 0.0, %v4211
        %4213 = vmatprep.mubr.bf16.mxu0 0
        %4214 = vmatmul.mubr.bf16.gmra.mrb[0].mxu0 %v4113
        %v4215 = vpop.f32.mrb[0].mxu0
        %v4216 = vadd.f32 0.0, %v4215
        %v4217 = vpop.f32.mrb[0].mxu0
        %v4218 = vadd.f32 0.0, %v4217
        %v4219 = vpop.f32.mrb[0].mxu0
        %v4220 = vadd.f32 0.0, %v4219
        %v4221 = vpop.f32.mrb[0].mxu0
        %v4222 = vadd.f32 0.0, %v4221
        %4223 = vmatprep.mubr.bf16.mxu0 0
        %4224 = vmatmul.mubr.bf16.gmra.mrb[0].mxu0 %v4116
        %v4225 = vpop.f32.mrb[0].mxu0
        %v4226 = vadd.f32 0.0, %v4225
        %v4227 = vpop.f32.mrb[0].mxu0
        %v4228 = vadd.f32 0.0, %v4227
        %v4229 = vpop.f32.mrb[0].mxu0
        %v4230 = vadd.f32 0.0, %v4229
        %v4231 = vpop.f32.mrb[0].mxu0
        %v4232 = vadd.f32 0.0, %v4231
        %4233 = vmatprep.mubr.bf16.mxu0 0
        %4234 = vmatmul.mubr.bf16.gmra.mrb[0].mxu0 %v4119
        %v4235 = vpop.f32.mrb[0].mxu0
        %v4236 = vadd.f32 0.0, %v4235
        %v4237 = vpop.f32.mrb[0].mxu0
        %v4238 = vadd.f32 0.0, %v4237
        %v4239 = vpop.f32.mrb[0].mxu0
        %v4240 = vadd.f32 0.0, %v4239
        %v4241 = vpop.f32.mrb[0].mxu0
        %v4242 = vadd.f32 0.0, %v4241
        %4243 = vmatprep.mubr.bf16.mxu0 0
        %4244 = vmatmul.mubr.bf16.gmra.mrb[0].mxu0 %v4122
        %v4245 = vpop.f32.mrb[0].mxu0
        %v4246 = vadd.f32 0.0, %v4245
        %v4247 = vpop.f32.mrb[0].mxu0
        %v4248 = vadd.f32 0.0, %v4247
        %v4249 = vpop.f32.mrb[0].mxu0
        %v4250 = vadd.f32 0.0, %v4249
        %v4251 = vpop.f32.mrb[0].mxu0
        %v4252 = vadd.f32 0.0, %v4251
        %4253 = vmatprep.mubr.bf16.mxu0 0
        %4254 = vmatmul.mubr.bf16.gmra.mrb[0].mxu0 %v4125
        %v4255 = vpop.f32.mrb[0].mxu0
        %v4256 = vadd.f32 0.0, %v4255
        %v4257 = vpop.f32.mrb[0].mxu0
        %v4258 = vadd.f32 0.0, %v4257
        %v4259 = vpop.f32.mrb[0].mxu0
        %v4260 = vadd.f32 0.0, %v4259
        %v4261 = vpop.f32.mrb[0].mxu0
        %v4262 = vadd.f32 0.0, %v4261
        %4263 = vmatprep.mubr.bf16.mxu0 0
        %4264 = vmatmul.mubr.bf16.gmra.mrb[0].mxu0 %v4128
        %v4265 = vpop.f32.mrb[0].mxu0
        %v4266 = vadd.f32 0.0, %v4265
        %v4267 = vpop.f32.mrb[0].mxu0
        %v4268 = vadd.f32 0.0, %v4267
        %v4269 = vpop.f32.mrb[0].mxu0
        %v4270 = vadd.f32 0.0, %v4269
        %v4271 = vpop.f32.mrb[0].mxu0
        %v4272 = vadd.f32 0.0, %v4271
        %4273 = vmatprep.mubr.bf16.mxu0 0
        %4274 = vmatmul.mubr.bf16.gmra.mrb[0].mxu0 %v4131
        %v4275 = vpop.f32.mrb[0].mxu0
        %v4276 = vadd.f32 0.0, %v4275
        %v4277 = vpop.f32.mrb[0].mxu0
        %v4278 = vadd.f32 0.0, %v4277
        %v4279 = vpop.f32.mrb[0].mxu0
        %v4280 = vadd.f32 0.0, %v4279
        %v4281 = vpop.f32.mrb[0].mxu0
        %v4282 = vadd.f32 0.0, %v4281
        %4283 = vmatprep.mubr.bf16.mxu0 0
        %4284 = vmatmul.mubr.bf16.gmra.mrb[0].mxu0 %v4134
        %v4285 = vpop.f32.mrb[0].mxu0
        %v4286 = vadd.f32 0.0, %v4285
        %v4287 = vpop.f32.mrb[0].mxu0
        %v4288 = vadd.f32 0.0, %v4287
        %v4289 = vpop.f32.mrb[0].mxu0
        %v4290 = vadd.f32 0.0, %v4289
        %v4291 = vpop.f32.mrb[0].mxu0
        %v4292 = vadd.f32 0.0, %v4291
        %4293 = vmatprep.mubr.bf16.mxu0 0
        %4294 = vmatmul.mubr.bf16.gmra.mrb[0].mxu0 %v4137
        %v4295 = vpop.f32.mrb[0].mxu0
        %v4296 = vadd.f32 0.0, %v4295
        %v4297 = vpop.f32.mrb[0].mxu0
        %v4298 = vadd.f32 0.0, %v4297
        %v4299 = vpop.f32.mrb[0].mxu0
        %v4300 = vadd.f32 0.0, %v4299
        %v4301 = vpop.f32.mrb[0].mxu0
        %v4302 = vadd.f32 0.0, %v4301
        %4303 = vmatprep.mubr.bf16.mxu0 0
        %4304 = vmatmul.mubr.bf16.gmra.mrb[0].mxu0 %v4140
        %v4305 = vpop.f32.mrb[0].mxu0
        %v4306 = vadd.f32 0.0, %v4305
        %v4307 = vpop.f32.mrb[0].mxu0
        %v4308 = vadd.f32 0.0, %v4307
        %v4309 = vpop.f32.mrb[0].mxu0
        %v4310 = vadd.f32 0.0, %v4309
        %v4311 = vpop.f32.mrb[0].mxu0
        %v4312 = vadd.f32 0.0, %v4311
        %4313 = vmatprep.mubr.bf16.mxu0 0
        %4314 = vmatmul.mubr.bf16.gmra.mrb[0].mxu0 %v4143
        %v4315 = vpop.f32.mrb[0].mxu0
        %v4316 = vadd.f32 0.0, %v4315
        %v4317 = vpop.f32.mrb[0].mxu0
        %v4318 = vadd.f32 0.0, %v4317
        %v4319 = vpop.f32.mrb[0].mxu0
        %v4320 = vadd.f32 0.0, %v4319
        %v4321 = vpop.f32.mrb[0].mxu0
        %v4322 = vadd.f32 0.0, %v4321
        %4323 = vmatprep.mubr.bf16.mxu0 0
        %4324 = vmatmul.mubr.bf16.gmra.mrb[0].mxu0 %v4146
        %v4325 = vpop.f32.mrb[0].mxu0
        %v4326 = vadd.f32 0.0, %v4325
        %v4327 = vpop.f32.mrb[0].mxu0
        %v4328 = vadd.f32 0.0, %v4327
        %v4329 = vpop.f32.mrb[0].mxu0
        %v4330 = vadd.f32 0.0, %v4329
        %v4331 = vpop.f32.mrb[0].mxu0
        %v4332 = vadd.f32 0.0, %v4331
        %4333 = vmatprep.mubr.bf16.mxu0 0
        %4334 = vmatmul.mubr.bf16.gmra.mrb[0].mxu0 %v4149
        %v4335 = vpop.f32.mrb[0].mxu0
        %v4336 = vadd.f32 0.0, %v4335
        %v4337 = vpop.f32.mrb[0].mxu0
        %v4338 = vadd.f32 0.0, %v4337
        %v4339 = vpop.f32.mrb[0].mxu0
        %v4340 = vadd.f32 0.0, %v4339
        %v4341 = vpop.f32.mrb[0].mxu0
        %v4342 = vadd.f32 0.0, %v4341
        %4343 = vdwg.mxu0
        %v4344 = vmax.f32 %v4186, %v4188
        %4345 = vmax.xlane.f32.xlu0 %v4344
        %v4346 = vpop.xlane.xlu0 %4345
        %v4347 = vmax.f32 %v4190, %v4192
        %4348 = vmax.xlane.f32.xlu0 %v4347
        %v4349 = vpop.xlane.xlu0 %4348
        %v4350 = vmax.f32 %v4196, %v4198
        %4351 = vmax.xlane.f32.xlu0 %v4350
        %v4352 = vpop.xlane.xlu0 %4351
        %v4353 = vmax.f32 %v4200, %v4202
        %4354 = vmax.xlane.f32.xlu0 %v4353
        %v4355 = vpop.xlane.xlu0 %4354
        %v4356 = vmax.f32 %v4206, %v4208
        %4357 = vmax.xlane.f32.xlu0 %v4356
        %v4358 = vpop.xlane.xlu0 %4357
        %v4359 = vmax.f32 %v4210, %v4212
        %4360 = vmax.xlane.f32.xlu0 %v4359
        %v4361 = vpop.xlane.xlu0 %4360
        %v4362 = vmax.f32 %v4216, %v4218
        %4363 = vmax.xlane.f32.xlu0 %v4362
        %v4364 = vpop.xlane.xlu0 %4363
        %v4365 = vmax.f32 %v4220, %v4222
        %4366 = vmax.xlane.f32.xlu0 %v4365
        %v4367 = vpop.xlane.xlu0 %4366
        %v4368 = vmax.f32 %v4226, %v4228
        %4369 = vmax.xlane.f32.xlu0 %v4368
        %v4370 = vpop.xlane.xlu0 %4369
        %v4371 = vmax.f32 %v4230, %v4232
        %4372 = vmax.xlane.f32.xlu0 %v4371
        %v4373 = vpop.xlane.xlu0 %4372
        %v4374 = vmax.f32 %v4236, %v4238
        %4375 = vmax.xlane.f32.xlu0 %v4374
        %v4376 = vpop.xlane.xlu0 %4375
        %v4377 = vmax.f32 %v4240, %v4242
        %4378 = vmax.xlane.f32.xlu0 %v4377
        %v4379 = vpop.xlane.xlu0 %4378
        %v4380 = vmax.f32 %v4246, %v4248
        %4381 = vmax.xlane.f32.xlu0 %v4380
        %v4382 = vpop.xlane.xlu0 %4381
        %v4383 = vmax.f32 %v4250, %v4252
        %4384 = vmax.xlane.f32.xlu0 %v4383
        %v4385 = vpop.xlane.xlu0 %4384
        %v4386 = vmax.f32 %v4256, %v4258
        %4387 = vmax.xlane.f32.xlu0 %v4386
        %v4388 = vpop.xlane.xlu0 %4387
        %v4389 = vmax.f32 %v4260, %v4262
        %4390 = vmax.xlane.f32.xlu0 %v4389
        %v4391 = vpop.xlane.xlu0 %4390
        %v4392 = vmax.f32 %v4266, %v4268
        %4393 = vmax.xlane.f32.xlu0 %v4392
        %v4394 = vpop.xlane.xlu0 %4393
        %v4395 = vmax.f32 %v4270, %v4272
        %4396 = vmax.xlane.f32.xlu0 %v4395
        %v4397 = vpop.xlane.xlu0 %4396
        %v4398 = vmax.f32 %v4276, %v4278
        %4399 = vmax.xlane.f32.xlu0 %v4398
        %v4400 = vpop.xlane.xlu0 %4399
        %v4401 = vmax.f32 %v4280, %v4282
        %4402 = vmax.xlane.f32.xlu0 %v4401
        %v4403 = vpop.xlane.xlu0 %4402
        %v4404 = vmax.f32 %v4286, %v4288
        %4405 = vmax.xlane.f32.xlu0 %v4404
        %v4406 = vpop.xlane.xlu0 %4405
        %v4407 = vmax.f32 %v4290, %v4292
        %4408 = vmax.xlane.f32.xlu0 %v4407
        %v4409 = vpop.xlane.xlu0 %4408
        %v4410 = vmax.f32 %v4296, %v4298
        %4411 = vmax.xlane.f32.xlu0 %v4410
        %v4412 = vpop.xlane.xlu0 %4411
        %v4413 = vmax.f32 %v4300, %v4302
        %4414 = vmax.xlane.f32.xlu0 %v4413
        %v4415 = vpop.xlane.xlu0 %4414
        %v4416 = vmax.f32 %v4306, %v4308
        %4417 = vmax.xlane.f32.xlu0 %v4416
        %v4418 = vpop.xlane.xlu0 %4417
        %v4419 = vmax.f32 %v4310, %v4312
        %4420 = vmax.xlane.f32.xlu0 %v4419
        %v4421 = vpop.xlane.xlu0 %4420
        %v4422 = vmax.f32 %v4316, %v4318
        %4423 = vmax.xlane.f32.xlu0 %v4422
        %v4424 = vpop.xlane.xlu0 %4423
        %v4425 = vmax.f32 %v4320, %v4322
        %4426 = vmax.xlane.f32.xlu0 %v4425
        %v4427 = vpop.xlane.xlu0 %4426
        %v4428 = vmax.f32 %v4326, %v4328
        %4429 = vmax.xlane.f32.xlu0 %v4428
        %v4430 = vpop.xlane.xlu0 %4429
        %v4431 = vmax.f32 %v4330, %v4332
        %4432 = vmax.xlane.f32.xlu0 %v4431
        %v4433 = vpop.xlane.xlu0 %4432
        %v4434 = vmax.f32 %v4336, %v4338
        %4435 = vmax.xlane.f32.xlu0 %v4434
        %v4436 = vpop.xlane.xlu0 %4435
        %v4437 = vmax.f32 %v4340, %v4342
        %4438 = vmax.xlane.f32.xlu0 %v4437
        %v4439 = vpop.xlane.xlu0 %4438
        %v4440 = vsub.f32 %v4186, %v4346
        %v4441 = vsub.f32 %v4188, %v4346
        %v4442 = vsub.f32 %v4190, %v4349
        %v4443 = vsub.f32 %v4192, %v4349
        %v4444 = vsub.f32 %v4196, %v4352
        %v4445 = vsub.f32 %v4198, %v4352
        %v4446 = vsub.f32 %v4200, %v4355
        %v4447 = vsub.f32 %v4202, %v4355
        %v4448 = vsub.f32 %v4206, %v4358
        %v4449 = vsub.f32 %v4208, %v4358
        %v4450 = vsub.f32 %v4210, %v4361
        %v4451 = vsub.f32 %v4212, %v4361
        %v4452 = vsub.f32 %v4216, %v4364
        %v4453 = vsub.f32 %v4218, %v4364
        %v4454 = vsub.f32 %v4220, %v4367
        %v4455 = vsub.f32 %v4222, %v4367
        %v4456 = vsub.f32 %v4226, %v4370
        %v4457 = vsub.f32 %v4228, %v4370
        %v4458 = vsub.f32 %v4230, %v4373
        %v4459 = vsub.f32 %v4232, %v4373
        %v4460 = vsub.f32 %v4236, %v4376
        %v4461 = vsub.f32 %v4238, %v4376
        %v4462 = vsub.f32 %v4240, %v4379
        %v4463 = vsub.f32 %v4242, %v4379
        %v4464 = vsub.f32 %v4246, %v4382
        %v4465 = vsub.f32 %v4248, %v4382
        %v4466 = vsub.f32 %v4250, %v4385
        %v4467 = vsub.f32 %v4252, %v4385
        %v4468 = vsub.f32 %v4256, %v4388
        %v4469 = vsub.f32 %v4258, %v4388
        %v4470 = vsub.f32 %v4260, %v4391
        %v4471 = vsub.f32 %v4262, %v4391
        %v4472 = vsub.f32 %v4266, %v4394
        %v4473 = vsub.f32 %v4268, %v4394
        %v4474 = vsub.f32 %v4270, %v4397
        %v4475 = vsub.f32 %v4272, %v4397
        %v4476 = vsub.f32 %v4276, %v4400
        %v4477 = vsub.f32 %v4278, %v4400
        %v4478 = vsub.f32 %v4280, %v4403
        %v4479 = vsub.f32 %v4282, %v4403
        %v4480 = vsub.f32 %v4286, %v4406
        %v4481 = vsub.f32 %v4288, %v4406
        %v4482 = vsub.f32 %v4290, %v4409
        %v4483 = vsub.f32 %v4292, %v4409
        %v4484 = vsub.f32 %v4296, %v4412
        %v4485 = vsub.f32 %v4298, %v4412
        %v4486 = vsub.f32 %v4300, %v4415
        %v4487 = vsub.f32 %v4302, %v4415
        %v4488 = vsub.f32 %v4306, %v4418
        %v4489 = vsub.f32 %v4308, %v4418
        %v4490 = vsub.f32 %v4310, %v4421
        %v4491 = vsub.f32 %v4312, %v4421
        %v4492 = vsub.f32 %v4316, %v4424
        %v4493 = vsub.f32 %v4318, %v4424
        %v4494 = vsub.f32 %v4320, %v4427
        %v4495 = vsub.f32 %v4322, %v4427
        %v4496 = vsub.f32 %v4326, %v4430
        %v4497 = vsub.f32 %v4328, %v4430
        %v4498 = vsub.f32 %v4330, %v4433
        %v4499 = vsub.f32 %v4332, %v4433
        %v4500 = vsub.f32 %v4336, %v4436
        %v4501 = vsub.f32 %v4338, %v4436
        %v4502 = vsub.f32 %v4340, %v4439
        %v4503 = vsub.f32 %v4342, %v4439
        %v4504 = vmul.f32 %v4440, 1.442695
        %v4505 = vpow.pop %v4504
        %v4506 = vmul.f32 %v4441, 1.442695
        %v4507 = vpow.pop %v4506
        %v4508 = vmul.f32 %v4442, 1.442695
        %v4509 = vpow.pop %v4508
        %v4510 = vmul.f32 %v4443, 1.442695
        %v4511 = vpow.pop %v4510
        %v4512 = vmul.f32 %v4444, 1.442695
        %v4513 = vpow.pop %v4512
        %v4514 = vmul.f32 %v4445, 1.442695
        %v4515 = vpow.pop %v4514
        %v4516 = vmul.f32 %v4446, 1.442695
        %v4517 = vpow.pop %v4516
        %v4518 = vmul.f32 %v4447, 1.442695
        %v4519 = vpow.pop %v4518
        %v4520 = vmul.f32 %v4448, 1.442695
        %v4521 = vpow.pop %v4520
        %v4522 = vmul.f32 %v4449, 1.442695
        %v4523 = vpow.pop %v4522
        %v4524 = vmul.f32 %v4450, 1.442695
        %v4525 = vpow.pop %v4524
        %v4526 = vmul.f32 %v4451, 1.442695
        %v4527 = vpow.pop %v4526
        %v4528 = vmul.f32 %v4452, 1.442695
        %v4529 = vpow.pop %v4528
        %v4530 = vmul.f32 %v4453, 1.442695
        %v4531 = vpow.pop %v4530
        %v4532 = vmul.f32 %v4454, 1.442695
        %v4533 = vpow.pop %v4532
        %v4534 = vmul.f32 %v4455, 1.442695
        %v4535 = vpow.pop %v4534
        %v4536 = vmul.f32 %v4456, 1.442695
        %v4537 = vpow.pop %v4536
        %v4538 = vmul.f32 %v4457, 1.442695
        %v4539 = vpow.pop %v4538
        %v4540 = vmul.f32 %v4458, 1.442695
        %v4541 = vpow.pop %v4540
        %v4542 = vmul.f32 %v4459, 1.442695
        %v4543 = vpow.pop %v4542
        %v4544 = vmul.f32 %v4460, 1.442695
        %v4545 = vpow.pop %v4544
        %v4546 = vmul.f32 %v4461, 1.442695
        %v4547 = vpow.pop %v4546
        %v4548 = vmul.f32 %v4462, 1.442695
        %v4549 = vpow.pop %v4548
        %v4550 = vmul.f32 %v4463, 1.442695
        %v4551 = vpow.pop %v4550
        %v4552 = vmul.f32 %v4464, 1.442695
        %v4553 = vpow.pop %v4552
        %v4554 = vmul.f32 %v4465, 1.442695
        %v4555 = vpow.pop %v4554
        %v4556 = vmul.f32 %v4466, 1.442695
        %v4557 = vpow.pop %v4556
        %v4558 = vmul.f32 %v4467, 1.442695
        %v4559 = vpow.pop %v4558
        %v4560 = vmul.f32 %v4468, 1.442695
        %v4561 = vpow.pop %v4560
        %v4562 = vmul.f32 %v4469, 1.442695
        %v4563 = vpow.pop %v4562
        %v4564 = vmul.f32 %v4470, 1.442695
        %v4565 = vpow.pop %v4564
        %v4566 = vmul.f32 %v4471, 1.442695
        %v4567 = vpow.pop %v4566
        %v4568 = vmul.f32 %v4472, 1.442695
        %v4569 = vpow.pop %v4568
        %v4570 = vmul.f32 %v4473, 1.442695
        %v4571 = vpow.pop %v4570
        %v4572 = vmul.f32 %v4474, 1.442695
        %v4573 = vpow.pop %v4572
        %v4574 = vmul.f32 %v4475, 1.442695
        %v4575 = vpow.pop %v4574
        %v4576 = vmul.f32 %v4476, 1.442695
        %v4577 = vpow.pop %v4576
        %v4578 = vmul.f32 %v4477, 1.442695
        %v4579 = vpow.pop %v4578
        %v4580 = vmul.f32 %v4478, 1.442695
        %v4581 = vpow.pop %v4580
        %v4582 = vmul.f32 %v4479, 1.442695
        %v4583 = vpow.pop %v4582
        %v4584 = vmul.f32 %v4480, 1.442695
        %v4585 = vpow.pop %v4584
        %v4586 = vmul.f32 %v4481, 1.442695
        %v4587 = vpow.pop %v4586
        %v4588 = vmul.f32 %v4482, 1.442695
        %v4589 = vpow.pop %v4588
        %v4590 = vmul.f32 %v4483, 1.442695
        %v4591 = vpow.pop %v4590
        %v4592 = vmul.f32 %v4484, 1.442695
        %v4593 = vpow.pop %v4592
        %v4594 = vmul.f32 %v4485, 1.442695
        %v4595 = vpow.pop %v4594
        %v4596 = vmul.f32 %v4486, 1.442695
        %v4597 = vpow.pop %v4596
        %v4598 = vmul.f32 %v4487, 1.442695
        %v4599 = vpow.pop %v4598
        %v4600 = vmul.f32 %v4488, 1.442695
        %v4601 = vpow.pop %v4600
        %v4602 = vmul.f32 %v4489, 1.442695
        %v4603 = vpow.pop %v4602
        %v4604 = vmul.f32 %v4490, 1.442695
        %v4605 = vpow.pop %v4604
        %v4606 = vmul.f32 %v4491, 1.442695
        %v4607 = vpow.pop %v4606
        %v4608 = vmul.f32 %v4492, 1.442695
        %v4609 = vpow.pop %v4608
        %v4610 = vmul.f32 %v4493, 1.442695
        %v4611 = vpow.pop %v4610
        %v4612 = vmul.f32 %v4494, 1.442695
        %v4613 = vpow.pop %v4612
        %v4614 = vmul.f32 %v4495, 1.442695
        %v4615 = vpow.pop %v4614
        %v4616 = vmul.f32 %v4496, 1.442695
        %v4617 = vpow.pop %v4616
        %v4618 = vmul.f32 %v4497, 1.442695
        %v4619 = vpow.pop %v4618
        %v4620 = vmul.f32 %v4498, 1.442695
        %v4621 = vpow.pop %v4620
        %v4622 = vmul.f32 %v4499, 1.442695
        %v4623 = vpow.pop %v4622
        %v4624 = vmul.f32 %v4500, 1.442695
        %v4625 = vpow.pop %v4624
        %v4626 = vmul.f32 %v4501, 1.442695
        %v4627 = vpow.pop %v4626
        %v4628 = vmul.f32 %v4502, 1.442695
        %v4629 = vpow.pop %v4628
        %v4630 = vmul.f32 %v4503, 1.442695
        %v4631 = vpow.pop %v4630
        %v4632 = vadd.f32 %v4505, %v4507
        %4633 = vadd.xlane.f32.xlu0 %v4632
        %v4634 = vpop.xlane.xlu0 %4633
        %v4635 = vadd.f32 %v4509, %v4511
        %4636 = vadd.xlane.f32.xlu0 %v4635
        %v4637 = vpop.xlane.xlu0 %4636
        %v4638 = vadd.f32 %v4513, %v4515
        %4639 = vadd.xlane.f32.xlu0 %v4638
        %v4640 = vpop.xlane.xlu0 %4639
        %v4641 = vadd.f32 %v4517, %v4519
        %4642 = vadd.xlane.f32.xlu0 %v4641
        %v4643 = vpop.xlane.xlu0 %4642
        %v4644 = vadd.f32 %v4521, %v4523
        %4645 = vadd.xlane.f32.xlu0 %v4644
        %v4646 = vpop.xlane.xlu0 %4645
        %v4647 = vadd.f32 %v4525, %v4527
        %4648 = vadd.xlane.f32.xlu0 %v4647
        %v4649 = vpop.xlane.xlu0 %4648
        %v4650 = vadd.f32 %v4529, %v4531
        %4651 = vadd.xlane.f32.xlu0 %v4650
        %v4652 = vpop.xlane.xlu0 %4651
        %v4653 = vadd.f32 %v4533, %v4535
        %4654 = vadd.xlane.f32.xlu0 %v4653
        %v4655 = vpop.xlane.xlu0 %4654
        %v4656 = vadd.f32 %v4537, %v4539
        %4657 = vadd.xlane.f32.xlu0 %v4656
        %v4658 = vpop.xlane.xlu0 %4657
        %v4659 = vadd.f32 %v4541, %v4543
        %4660 = vadd.xlane.f32.xlu0 %v4659
        %v4661 = vpop.xlane.xlu0 %4660
        %v4662 = vadd.f32 %v4545, %v4547
        %4663 = vadd.xlane.f32.xlu0 %v4662
        %v4664 = vpop.xlane.xlu0 %4663
        %v4665 = vadd.f32 %v4549, %v4551
        %4666 = vadd.xlane.f32.xlu0 %v4665
        %v4667 = vpop.xlane.xlu0 %4666
        %v4668 = vadd.f32 %v4553, %v4555
        %4669 = vadd.xlane.f32.xlu0 %v4668
        %v4670 = vpop.xlane.xlu0 %4669
        %v4671 = vadd.f32 %v4557, %v4559
        %4672 = vadd.xlane.f32.xlu0 %v4671
        %v4673 = vpop.xlane.xlu0 %4672
        %v4674 = vadd.f32 %v4561, %v4563
        %4675 = vadd.xlane.f32.xlu0 %v4674
        %v4676 = vpop.xlane.xlu0 %4675
        %v4677 = vadd.f32 %v4565, %v4567
        %4678 = vadd.xlane.f32.xlu0 %v4677
        %v4679 = vpop.xlane.xlu0 %4678
        %v4680 = vadd.f32 %v4569, %v4571
        %4681 = vadd.xlane.f32.xlu0 %v4680
        %v4682 = vpop.xlane.xlu0 %4681
        %v4683 = vadd.f32 %v4573, %v4575
        %4684 = vadd.xlane.f32.xlu0 %v4683
        %v4685 = vpop.xlane.xlu0 %4684
        %v4686 = vadd.f32 %v4577, %v4579
        %4687 = vadd.xlane.f32.xlu0 %v4686
        %v4688 = vpop.xlane.xlu0 %4687
        %v4689 = vadd.f32 %v4581, %v4583
        %4690 = vadd.xlane.f32.xlu0 %v4689
        %v4691 = vpop.xlane.xlu0 %4690
        %v4692 = vadd.f32 %v4585, %v4587
        %4693 = vadd.xlane.f32.xlu0 %v4692
        %v4694 = vpop.xlane.xlu0 %4693
        %v4695 = vadd.f32 %v4589, %v4591
        %4696 = vadd.xlane.f32.xlu0 %v4695
        %v4697 = vpop.xlane.xlu0 %4696
        %v4698 = vadd.f32 %v4593, %v4595
        %4699 = vadd.xlane.f32.xlu0 %v4698
        %v4700 = vpop.xlane.xlu0 %4699
        %v4701 = vadd.f32 %v4597, %v4599
        %4702 = vadd.xlane.f32.xlu0 %v4701
        %v4703 = vpop.xlane.xlu0 %4702
        %v4704 = vadd.f32 %v4601, %v4603
        %4705 = vadd.xlane.f32.xlu0 %v4704
        %v4706 = vpop.xlane.xlu0 %4705
        %v4707 = vadd.f32 %v4605, %v4607
        %4708 = vadd.xlane.f32.xlu0 %v4707
        %v4709 = vpop.xlane.xlu0 %4708
        %v4710 = vadd.f32 %v4609, %v4611
        %4711 = vadd.xlane.f32.xlu0 %v4710
        %v4712 = vpop.xlane.xlu0 %4711
        %v4713 = vadd.f32 %v4613, %v4615
        %4714 = vadd.xlane.f32.xlu0 %v4713
        %v4715 = vpop.xlane.xlu0 %4714
        %v4716 = vadd.f32 %v4617, %v4619
        %4717 = vadd.xlane.f32.xlu0 %v4716
        %v4718 = vpop.xlane.xlu0 %4717
        %v4719 = vadd.f32 %v4621, %v4623
        %4720 = vadd.xlane.f32.xlu0 %v4719
        %v4721 = vpop.xlane.xlu0 %4720
        %v4722 = vadd.f32 %v4625, %v4627
        %4723 = vadd.xlane.f32.xlu0 %v4722
        %v4724 = vpop.xlane.xlu0 %4723
        %v4725 = vadd.f32 %v4629, %v4631
        %4726 = vadd.xlane.f32.xlu0 %v4725
        %v4727 = vpop.xlane.xlu0 %4726
        %v4728 = vrcp.pop %v4634
        %v4729 = vrcp.pop %v4637
        %v4730 = vrcp.pop %v4640
        %v4731 = vrcp.pop %v4643
        %v4732 = vrcp.pop %v4646
        %v4733 = vrcp.pop %v4649
        %v4734 = vrcp.pop %v4652
        %v4735 = vrcp.pop %v4655
        %v4736 = vrcp.pop %v4658
        %v4737 = vrcp.pop %v4661
        %v4738 = vrcp.pop %v4664
        %v4739 = vrcp.pop %v4667
        %v4740 = vrcp.pop %v4670
        %v4741 = vrcp.pop %v4673
        %v4742 = vrcp.pop %v4676
        %v4743 = vrcp.pop %v4679
        %v4744 = vrcp.pop %v4682
        %v4745 = vrcp.pop %v4685
        %v4746 = vrcp.pop %v4688
        %v4747 = vrcp.pop %v4691
        %v4748 = vrcp.pop %v4694
        %v4749 = vrcp.pop %v4697
        %v4750 = vrcp.pop %v4700
        %v4751 = vrcp.pop %v4703
        %v4752 = vrcp.pop %v4706
        %v4753 = vrcp.pop %v4709
        %v4754 = vrcp.pop %v4712
        %v4755 = vrcp.pop %v4715
        %v4756 = vrcp.pop %v4718
        %v4757 = vrcp.pop %v4721
        %v4758 = vrcp.pop %v4724
        %v4759 = vrcp.pop %v4727
        %v4760 = vmul.f32 %v4505, %v4728
        %v4761 = vmul.f32 %v4507, %v4728
        %v4762 = vmul.f32 %v4509, %v4729
        %v4763 = vmul.f32 %v4511, %v4729
        %v4764 = vmul.f32 %v4513, %v4730
        %v4765 = vmul.f32 %v4515, %v4730
        %v4766 = vmul.f32 %v4517, %v4731
        %v4767 = vmul.f32 %v4519, %v4731
        %v4768 = vmul.f32 %v4521, %v4732
        %v4769 = vmul.f32 %v4523, %v4732
        %v4770 = vmul.f32 %v4525, %v4733
        %v4771 = vmul.f32 %v4527, %v4733
        %v4772 = vmul.f32 %v4529, %v4734
        %v4773 = vmul.f32 %v4531, %v4734
        %v4774 = vmul.f32 %v4533, %v4735
        %v4775 = vmul.f32 %v4535, %v4735
        %v4776 = vmul.f32 %v4537, %v4736
        %v4777 = vmul.f32 %v4539, %v4736
        %v4778 = vmul.f32 %v4541, %v4737
        %v4779 = vmul.f32 %v4543, %v4737
        %v4780 = vmul.f32 %v4545, %v4738
        %v4781 = vmul.f32 %v4547, %v4738
        %v4782 = vmul.f32 %v4549, %v4739
        %v4783 = vmul.f32 %v4551, %v4739
        %v4784 = vmul.f32 %v4553, %v4740
        %v4785 = vmul.f32 %v4555, %v4740
        %v4786 = vmul.f32 %v4557, %v4741
        %v4787 = vmul.f32 %v4559, %v4741
        %v4788 = vmul.f32 %v4561, %v4742
        %v4789 = vmul.f32 %v4563, %v4742
        %v4790 = vmul.f32 %v4565, %v4743
        %v4791 = vmul.f32 %v4567, %v4743
        %v4792 = vmul.f32 %v4569, %v4744
        %v4793 = vmul.f32 %v4571, %v4744
        %v4794 = vmul.f32 %v4573, %v4745
        %v4795 = vmul.f32 %v4575, %v4745
        %v4796 = vmul.f32 %v4577, %v4746
        %v4797 = vmul.f32 %v4579, %v4746
        %v4798 = vmul.f32 %v4581, %v4747
        %v4799 = vmul.f32 %v4583, %v4747
        %v4800 = vmul.f32 %v4585, %v4748
        %v4801 = vmul.f32 %v4587, %v4748
        %v4802 = vmul.f32 %v4589, %v4749
        %v4803 = vmul.f32 %v4591, %v4749
        %v4804 = vmul.f32 %v4593, %v4750
        %v4805 = vmul.f32 %v4595, %v4750
        %v4806 = vmul.f32 %v4597, %v4751
        %v4807 = vmul.f32 %v4599, %v4751
        %v4808 = vmul.f32 %v4601, %v4752
        %v4809 = vmul.f32 %v4603, %v4752
        %v4810 = vmul.f32 %v4605, %v4753
        %v4811 = vmul.f32 %v4607, %v4753
        %v4812 = vmul.f32 %v4609, %v4754
        %v4813 = vmul.f32 %v4611, %v4754
        %v4814 = vmul.f32 %v4613, %v4755
        %v4815 = vmul.f32 %v4615, %v4755
        %v4816 = vmul.f32 %v4617, %v4756
        %v4817 = vmul.f32 %v4619, %v4756
        %v4818 = vmul.f32 %v4621, %v4757
        %v4819 = vmul.f32 %v4623, %v4757
        %v4820 = vmul.f32 %v4625, %v4758
        %v4821 = vmul.f32 %v4627, %v4758
        %v4822 = vmul.f32 %v4629, %v4759
        %v4823 = vmul.f32 %v4631, %v4759
        %v4824 = vpack.c.bf16 %v4762, %v4760
        %v4825 = vpack.c.bf16 %v4763, %v4761
        %v4826 = vpack.c.bf16 %v4766, %v4764
        %v4827 = vpack.c.bf16 %v4767, %v4765
        %v4828 = vpack.c.bf16 %v4770, %v4768
        %v4829 = vpack.c.bf16 %v4771, %v4769
        %v4830 = vpack.c.bf16 %v4774, %v4772
        %v4831 = vpack.c.bf16 %v4775, %v4773
        %v4832 = vpack.c.bf16 %v4778, %v4776
        %v4833 = vpack.c.bf16 %v4779, %v4777
        %v4834 = vpack.c.bf16 %v4782, %v4780
        %v4835 = vpack.c.bf16 %v4783, %v4781
        %v4836 = vpack.c.bf16 %v4786, %v4784
        %v4837 = vpack.c.bf16 %v4787, %v4785
        %v4838 = vpack.c.bf16 %v4790, %v4788
        %v4839 = vpack.c.bf16 %v4791, %v4789
        %v4840 = vpack.c.bf16 %v4794, %v4792
        %v4841 = vpack.c.bf16 %v4795, %v4793
        %v4842 = vpack.c.bf16 %v4798, %v4796
        %v4843 = vpack.c.bf16 %v4799, %v4797
        %v4844 = vpack.c.bf16 %v4802, %v4800
        %v4845 = vpack.c.bf16 %v4803, %v4801
        %v4846 = vpack.c.bf16 %v4806, %v4804
        %v4847 = vpack.c.bf16 %v4807, %v4805
        %v4848 = vpack.c.bf16 %v4810, %v4808
        %v4849 = vpack.c.bf16 %v4811, %v4809
        %v4850 = vpack.c.bf16 %v4814, %v4812
        %v4851 = vpack.c.bf16 %v4815, %v4813
        %v4852 = vpack.c.bf16 %v4818, %v4816
        %v4853 = vpack.c.bf16 %v4819, %v4817
        %v4854 = vpack.c.bf16 %v4822, %v4820
        %v4855 = vpack.c.bf16 %v4823, %v4821
        %4856 = vmatprep.subr.bf16.mxu0 %v4825
        %4857 = vmatpush1.bf16.xpose.msra.mxu0 %v4824
        %4858 = vmatprep.subr.bf16.mxu0 %v4827
        %4859 = vmatpush1.bf16.xpose.msra.mxu0 %v4826
        %4860 = vmatprep.subr.bf16.mxu0 %v4829
        %4861 = vmatpush1.bf16.xpose.msra.mxu0 %v4828
        %4862 = vmatprep.subr.bf16.mxu0 %v4831
        %4863 = vmatpush1.bf16.xpose.msra.mxu0 %v4830
        %4864 = vmatprep.subr.bf16.mxu0 %v4833
        %4865 = vmatpush1.bf16.xpose.msra.mxu0 %v4832
        %4866 = vmatprep.subr.bf16.mxu0 %v4835
        %4867 = vmatpush1.bf16.xpose.msra.mxu0 %v4834
        %4868 = vmatprep.subr.bf16.mxu0 %v4837
        %4869 = vmatpush1.bf16.xpose.msra.mxu0 %v4836
        %4870 = vmatprep.subr.bf16.mxu0 %v4839
        %4871 = vmatpush1.bf16.xpose.msra.mxu0 %v4838
        %4872 = vmatprep.subr.bf16.mxu0 %v4841
        %4873 = vmatpush1.bf16.xpose.msra.mxu0 %v4840
        %4874 = vmatprep.subr.bf16.mxu0 %v4843
        %4875 = vmatpush1.bf16.xpose.msra.mxu0 %v4842
        %4876 = vmatprep.subr.bf16.mxu0 %v4845
        %4877 = vmatpush1.bf16.xpose.msra.mxu0 %v4844
        %4878 = vmatprep.subr.bf16.mxu0 %v4847
        %4879 = vmatpush1.bf16.xpose.msra.mxu0 %v4846
        %4880 = vmatprep.subr.bf16.mxu0 %v4849
        %4881 = vmatpush1.bf16.xpose.msra.mxu0 %v4848
        %4882 = vmatprep.subr.bf16.mxu0 %v4851
        %4883 = vmatpush1.bf16.xpose.msra.mxu0 %v4850
        %4884 = vmatprep.subr.bf16.mxu0 %v4853
        %4885 = vmatpush1.bf16.xpose.msra.mxu0 %v4852
        %4886 = vmatprep.subr.bf16.mxu0 %v4855
        %4887 = vmatpush1.bf16.xpose.msra.mxu0 %v4854
        %4888 = vmatprep.mubr.bf16.mxu0 %v4100
        %4889 = vmatmul.mubr.bf16.gmra.mrb[0].mxu0 %v4099
        %v4890 = vpop.f32.mrb[0].mxu0
        %v4891 = vadd.f32 0.0, %v4890
        %v4892 = vpop.f32.mrb[0].mxu0
        %v4893 = vadd.f32 0.0, %v4892
        %v4894 = vpop.f32.mrb[0].mxu0
        %v4895 = vadd.f32 0.0, %v4894
        %v4896 = vpop.f32.mrb[0].mxu0
        %v4897 = vadd.f32 0.0, %v4896
        %4898 = vmatprep.mubr.bf16.mxu0 %v4102
        %4899 = vmatmul.mubr.bf16.gmra.mrb[0].mxu0 %v4101
        %v4900 = vpop.f32.mrb[0].mxu0
        %v4901 = vadd.f32 0.0, %v4900
        %v4902 = vpop.f32.mrb[0].mxu0
        %v4903 = vadd.f32 0.0, %v4902
        %v4904 = vpop.f32.mrb[0].mxu0
        %v4905 = vadd.f32 0.0, %v4904
        %v4906 = vpop.f32.mrb[0].mxu0
        %v4907 = vadd.f32 0.0, %v4906
        %4908 = vdwg.mxu0
        %v4909 = vpack.c.bf16 %v4895, %v4891
        %v4910 = vpack.c.bf16 %v4897, %v4893
        %v4911 = vpack.c.bf16 %v4905, %v4901
        %v4912 = vpack.c.bf16 %v4907, %v4903
        %4913 = vst [vmem:[#allocation3 + $0x60] sm:$0xff] %v4909
        %4914 = vst [vmem:[#allocation3 + $0x68] sm:$0xff] %v4910
        %4915 = vst [vmem:[#allocation3 + $0x70] sm:$0xff] %v4911
        %4916 = vst [vmem:[#allocation3 + $0x78] sm:$0xff] %v4912
        %v4917 = vld [vmem:[%s6] sm:$0xf]
        %v4918 = vld [vmem:[%s6 + $0x4] sm:$0xf]
        %v4919 = vld [vmem:[%s6 + $0x8] sm:$0xf]
        %v4920 = vld [vmem:[%s6 + $0xc] sm:$0xf]
        %v4921 = vld [vmem:[%s6 + $0x10] sm:$0xf]
        %v4922 = vld [vmem:[%s6 + $0x14] sm:$0xf]
        %v4923 = vld [vmem:[%s6 + $0x18] sm:$0xf]
        %v4924 = vld [vmem:[%s6 + $0x1c] sm:$0xf]
        %v4925 = vld [vmem:[#allocation3] sm:$0xff]
        %v4926 = vld [vmem:[#allocation3 + $0x8] sm:$0xff]
        %v4927 = vld [vmem:[#allocation3 + $0x10] sm:$0xff]
        %v4928 = vld [vmem:[#allocation3 + $0x18] sm:$0xff]
        %v4929 = vld [vmem:[#allocation3 + $0x20] sm:$0xff]
        %v4930 = vld [vmem:[#allocation3 + $0x28] sm:$0xff]
        %v4931 = vld [vmem:[#allocation3 + $0x30] sm:$0xff]
        %v4932 = vld [vmem:[#allocation3 + $0x38] sm:$0xff]
        %v4933 = vld [vmem:[#allocation3 + $0x40] sm:$0xff]
        %v4934 = vld [vmem:[#allocation3 + $0x48] sm:$0xff]
        %v4935 = vld [vmem:[#allocation3 + $0x50] sm:$0xff]
        %v4936 = vld [vmem:[#allocation3 + $0x58] sm:$0xff]
        %v4937 = vld [vmem:[#allocation3 + $0x60] sm:$0xff]
        %v4938 = vld [vmem:[#allocation3 + $0x68] sm:$0xff]
        %v4939 = vld [vmem:[#allocation3 + $0x70] sm:$0xff]
        %v4940 = vld [vmem:[#allocation3 + $0x78] sm:$0xff]
        %v4941 = vld [vmem:[%s7] sm:$0xff]
        %v4942 = vld [vmem:[%s7 + $0x8] sm:$0xff]
        %v4943 = vld [vmem:[%s7 + $0x10] sm:$0xff]
        %v4944 = vld [vmem:[%s7 + $0x18] sm:$0xff]
        %v4945 = vld [vmem:[%s7 + $0x20] sm:$0xff]
        %v4946 = vld [vmem:[%s7 + $0x28] sm:$0xff]
        %v4947 = vld [vmem:[%s7 + $0x30] sm:$0xff]
        %v4948 = vld [vmem:[%s7 + $0x38] sm:$0xff]
        %4950 = vset.pattern.permute.xlu0 0
        %4951 = vperm.xlu0 %4950, %v4941
        %v4952 = vpop.permute.xlu0 %4951
        %4955 = vset.pattern.permute.xlu0 0
        %4956 = vperm.xlu0 %4955, %v4942
        %v4957 = vpop.permute.xlu0 %4956
        %4960 = vset.pattern.permute.xlu0 0
        %4961 = vperm.xlu0 %4960, %v4943
        %v4962 = vpop.permute.xlu0 %4961
        %4965 = vset.pattern.permute.xlu0 0
        %4966 = vperm.xlu0 %4965, %v4944
        %v4967 = vpop.permute.xlu0 %4966
        %4970 = vset.pattern.permute.xlu0 0
        %4971 = vperm.xlu0 %4970, %v4945
        %v4972 = vpop.permute.xlu0 %4971
        %4975 = vset.pattern.permute.xlu0 0
        %4976 = vperm.xlu0 %4975, %v4946
        %v4977 = vpop.permute.xlu0 %4976
        %4980 = vset.pattern.permute.xlu0 0
        %4981 = vperm.xlu0 %4980, %v4947
        %v4982 = vpop.permute.xlu0 %4981
        %4985 = vset.pattern.permute.xlu0 0
        %4986 = vperm.xlu0 %4985, %v4948
        %v4987 = vpop.permute.xlu0 %4986
        %v4997 = vunpack.c.l.b16 %v4917
        %v4998 = vunpack.c.l.b16 %v4918
        %v4999 = vunpack.c.l.b16 %v4919
        %v5000 = vunpack.c.l.b16 %v4920
        %v5001 = vunpack.c.l.b16 %v4921
        %v5002 = vunpack.c.l.b16 %v4922
        %v5003 = vunpack.c.l.b16 %v4923
        %v5004 = vunpack.c.l.b16 %v4924
        %v5005 = vpack.c.b16 %v4998, %v4997
        %v5006 = vpack.c.b16 %v5000, %v4999
        %v5007 = vpack.c.b16 %v5002, %v5001
        %v5008 = vpack.c.b16 %v5004, %v5003
        %5013 = vmatprep.subr.bf16.mxu0 %v4926
        %5014 = vmatpush1.bf16.msra.mxu0 %v4925
        %5015 = vmatprep.subr.bf16.mxu0 %v4928
        %5016 = vmatpush1.bf16.msra.mxu0 %v4927
        %5017 = vmatprep.subr.bf16.mxu0 %v4930
        %5018 = vmatpush1.bf16.msra.mxu0 %v4929
        %5019 = vmatprep.subr.bf16.mxu0 %v4932
        %5020 = vmatpush1.bf16.msra.mxu0 %v4931
        %5021 = vmatprep.subr.bf16.mxu0 %v4934
        %5022 = vmatpush1.bf16.msra.mxu0 %v4933
        %5023 = vmatprep.subr.bf16.mxu0 %v4936
        %5024 = vmatpush1.bf16.msra.mxu0 %v4935
        %5025 = vmatprep.subr.bf16.mxu0 %v4938
        %5026 = vmatpush1.bf16.msra.mxu0 %v4937
        %5027 = vmatprep.subr.bf16.mxu0 %v4940
        %5028 = vmatpush1.bf16.msra.mxu0 %v4939
        %5029 = vmatprep.subr.bf16.mxu0 0
        %5030 = vmatpush1.bf16.msra.mxu0 0
        %5031 = vmatprep.subr.bf16.mxu0 0
        %5032 = vmatpush1.bf16.msra.mxu0 0
        %5033 = vmatprep.subr.bf16.mxu0 0
        %5034 = vmatpush1.bf16.msra.mxu0 0
        %5035 = vmatprep.subr.bf16.mxu0 0
        %5036 = vmatpush1.bf16.msra.mxu0 0
        %5037 = vmatprep.subr.bf16.mxu0 0
        %5038 = vmatpush1.bf16.msra.mxu0 0
        %5039 = vmatprep.subr.bf16.mxu0 0
        %5040 = vmatpush1.bf16.msra.mxu0 0
        %5041 = vmatprep.subr.bf16.mxu0 0
        %5042 = vmatpush1.bf16.msra.mxu0 0
        %5043 = vmatprep.subr.bf16.mxu0 0
        %5044 = vmatpush1.bf16.msra.mxu0 0
        %5045 = vmatprep.mubr.bf16.mxu0 0
        %5046 = vmatmul.mubr.bf16.gmra.mrb[0].mxu0 %v5005
        %v5047 = vpop.f32.mrb[0].mxu0
        %v5048 = vadd.f32 %v4952, %v5047
        %v5049 = vpop.f32.mrb[0].mxu0
        %v5050 = vadd.f32 %v4952, %v5049
        %v5051 = vpop.f32.mrb[0].mxu0
        %v5052 = vadd.f32 %v4957, %v5051
        %v5053 = vpop.f32.mrb[0].mxu0
        %v5054 = vadd.f32 %v4957, %v5053
        %5055 = vmatprep.mubr.bf16.mxu0 0
        %5056 = vmatmul.mubr.bf16.gmra.mrb[0].mxu0 %v5006
        %v5057 = vpop.f32.mrb[0].mxu0
        %v5058 = vadd.f32 %v4962, %v5057
        %v5059 = vpop.f32.mrb[0].mxu0
        %v5060 = vadd.f32 %v4962, %v5059
        %v5061 = vpop.f32.mrb[0].mxu0
        %v5062 = vadd.f32 %v4967, %v5061
        %v5063 = vpop.f32.mrb[0].mxu0
        %v5064 = vadd.f32 %v4967, %v5063
        %5065 = vmatprep.mubr.bf16.mxu0 0
        %5066 = vmatmul.mubr.bf16.gmra.mrb[0].mxu0 %v5007
        %v5067 = vpop.f32.mrb[0].mxu0
        %v5068 = vadd.f32 %v4972, %v5067
        %v5069 = vpop.f32.mrb[0].mxu0
        %v5070 = vadd.f32 %v4972, %v5069
        %v5071 = vpop.f32.mrb[0].mxu0
        %v5072 = vadd.f32 %v4977, %v5071
        %v5073 = vpop.f32.mrb[0].mxu0
        %v5074 = vadd.f32 %v4977, %v5073
        %5075 = vmatprep.mubr.bf16.mxu0 0
        %5076 = vmatmul.mubr.bf16.gmra.mrb[0].mxu0 %v5008
        %v5077 = vpop.f32.mrb[0].mxu0
        %v5078 = vadd.f32 %v4982, %v5077
        %v5079 = vpop.f32.mrb[0].mxu0
        %v5080 = vadd.f32 %v4982, %v5079
        %v5081 = vpop.f32.mrb[0].mxu0
        %v5082 = vadd.f32 %v4987, %v5081
        %v5083 = vpop.f32.mrb[0].mxu0
        %v5084 = vadd.f32 %v4987, %v5083
        %5085 = vdwg.mxu0
        %5086 = vst [vmem:[%s338] sm:$0xff] %v5048
        %5087 = vst [vmem:[%s338 + $0x8] sm:$0xff] %v5050
        %5088 = vst [vmem:[%s338 + $0x10] sm:$0xff] %v5052
        %5089 = vst [vmem:[%s338 + $0x18] sm:$0xff] %v5054
        %5090 = vst [vmem:[%s338 + $0x20] sm:$0xff] %v5058
        %5091 = vst [vmem:[%s338 + $0x28] sm:$0xff] %v5060
        %5092 = vst [vmem:[%s338 + $0x30] sm:$0xff] %v5062
        %5093 = vst [vmem:[%s338 + $0x38] sm:$0xff] %v5064
        %5094 = vst [vmem:[%s338 + $0x40] sm:$0xff] %v5068
        %5095 = vst [vmem:[%s338 + $0x48] sm:$0xff] %v5070
        %5096 = vst [vmem:[%s338 + $0x50] sm:$0xff] %v5072
        %5097 = vst [vmem:[%s338 + $0x58] sm:$0xff] %v5074
        %5098 = vst [vmem:[%s338 + $0x60] sm:$0xff] %v5078
        %5099 = vst [vmem:[%s338 + $0x68] sm:$0xff] %v5080
        %5100 = vst [vmem:[%s338 + $0x70] sm:$0xff] %v5082
        %5101 = vst [vmem:[%s338 + $0x78] sm:$0xff] %v5084
        %s5102 = sand.u32 %s224, 1
        %s5103 = scalar_lea.sflag [#allocation5], %s5102
        %s5104 = sand.u32 %s224, 1
        %s5105 = smul.addr %s5104, 128
        %s5106 = scalar_lea.vmem [#allocation4], %s5105
        // Predicated region
        $region57: #{tpu_custom_call.1} parent=51 // pred_check
          %p5107 = pneg %p234
        $region58: #{tpu_custom_call.1} parent=51 // pred_check_branch
          %5109 = sbr.rel (%p5107) target = $region60
        $region59: #{tpu_custom_call.1} parent=51 // pred_region
          %s5110 = smul.u32 2, %s27
          %s5112 = ssub.s32 2048, 2048
          %5113 = vsyncadd %s5103, %s5112
          %s5114 = smul.addr %s26, 16
          %s5115 = sadd.s32 %s5110, %s5114
          %s5116 = smul.addr %s5115, 128
          %s5117 = scalar_lea.hbm %s8, %s5116
          %s5118 = sshll.u32 %s5106, 4
          %s5119 = int_to_ptr.vmem [resolvable:$true] %s5118
          %5124 = dma.vmem_to_hbm [thread:$0]  %s5119, 2048, %s5117, %s5103, 256, 256, 16
        $region60: #{tpu_custom_call.1} parent=51 // pred_fallthru
          _
      $region52: #{tpu_custom_call.1} parent=5 // pred_fallthru
        _
      %p5125 = scmp.le.s32.totalorder 2, %s17
      // Predicated region
      $region61: #{tpu_custom_call.1} parent=5 // pred_check
        %p5126 = pneg %p5125
      $region62: #{tpu_custom_call.1} parent=5 // pred_check_branch
        %5128 = sbr.rel (%p5126) target = $region64
      $region63: #{tpu_custom_call.1} parent=5 // pred_region
        %s5129 = ssub.s32 %s17, 2
        // Predicated region
        $region65: #{tpu_custom_call.1} parent=63 // pred_check
          %p5130 = pneg %p240
        $region66: #{tpu_custom_call.1} parent=63 // pred_check_branch
          %5132 = sbr.rel (%p5130) target = $region68
        $region67: #{tpu_custom_call.1} parent=63 // pred_region
          %s5133 = sand.u32 %s225, 1
          %s5134 = scalar_lea.sflag [#allocation5], %s5133
          %s5135 = sand.u32 %s225, 1
          %s5136 = smul.addr %s5135, 128
          %s5137 = scalar_lea.vmem [#allocation4], %s5136
          %5138 = dma.done %s5134, 2048
        $region68: #{tpu_custom_call.1} parent=63 // pred_fallthru
          _
      $region64: #{tpu_custom_call.1} parent=5 // pred_fallthru
        _
    $region6: #{tpu_custom_call.1} parent=1 // loop_footer
      %s21 = sadd.s32 1, %s17
    $region7: #{tpu_custom_call.1} parent=1 // loop_footer_branch
      %16 = sbr.rel target = $region3
    $region8: #{tpu_custom_call.1} parent=1 // loop_exit
      _
    %5139 = vsyncpa [#allocation5], 1
    %s5140 = scalar_lea.sflag [#allocation5], 1
    %5141 = vsyncpa %s5140, 1

</llo_original>
